<compile_context>
chip_gen: v5e
topology: v5e:2x2
jax: 0.10.0
libtpu: 0.0.40
codegen_flags: <defaults>
</compile_context>

<pallas_src>
import functools

import jax
import jax.numpy as jnp
from jax import lax
from jax.experimental import pallas as pl
from jax.experimental.pallas import tpu as pltpu


def crp_kernel(x_ref, w_ref, out_ref, *, H, W):
    """x_ref: (C, L) with L = nb*H*W (nb images packed along lanes)
       w_ref: (3, 9, Cout, Cin)  tap-major, channel-minor, matmul-ready
       out_ref: (C, L)."""
    C, L = x_ref.shape
    HW = H * W
    NEG_INF = jnp.float32(-jnp.inf)
    mm_dtype = w_ref.dtype  # bf16 or f32 operands for the MXU dots

    # ---- per-pixel positions & boundary masks, built ONCE, pre-broadcast to
    # the block's full (C, L) extent so jnp.where needs no re-broadcast. ----
    idx = lax.broadcasted_iota(jnp.int32, (C, L), 1)
    pos = jnp.bitwise_and(idx, HW - 1) if (HW & (HW - 1)) == 0 else idx % HW
    wp = jnp.bitwise_and(pos, W - 1) if (W & (W - 1)) == 0 else pos % W

    masks = {}
    for d in (1, 2):
        masks[(0, d)] = wp < (W - d)        # w+d stays in the row
        masks[(0, -d)] = wp >= d            # w-d stays in the row
        masks[(d, 0)] = pos < (H - d) * W   # h+d stays in the image
        masks[(-d, 0)] = pos >= d * W       # h-d stays in the image
    for dy in (-1, 1):                      # conv corner taps
        for dx in (-1, 1):
            masks[(dy, dx)] = jnp.logical_and(masks[(dy, 0)], masks[(0, dx)])

    def shift2d(arr, dy, dx, fill):
        """Per image viewed as (H, W): result[h, w] = arr[h+dy, w+dx] else fill."""
        if dy == 0 and dx == 0:
            return arr
        d = dy * W + dx
        shifted = pltpu.roll(arr, (-d) % L, axis=1)
        return jnp.where(masks[(dy, dx)], shifted, fill)

    x = x_ref[...]
    out = jnp.maximum(x, 0.0)               # nn.ReLU
    branch = out

    conv_taps = [(ky - 1, kx - 1) for ky in range(3) for kx in range(3)]

    for b in range(3):                       # branch1..branch3 (unrolled)
        # ---- MaxPool2d(5, stride=1, pad=2): separable row pass then column
        # pass; out-of-image neighbours masked to -inf (f32 throughout). ----
        hmax = branch
        for dx in (-2, -1, 1, 2):
            hmax = jnp.maximum(hmax, shift2d(branch, 0, dx, NEG_INF))
        pooled = hmax
        for dy in (-2, -1, 1, 2):
            pooled = jnp.maximum(pooled, shift2d(hmax, dy, 0, NEG_INF))

        # ---- Conv2d(C, C, 3, 1, 1, bias=False): stream the 9 taps through
        # the MXU one at a time (no materialised im2col, no 9 live taps),
        # f32 accumulation, operands in mm_dtype (bf16 for 2x MXU throughput
        # on v6e/v7x when enabled by the wrapper). ----
        acc = None
        for k, (dy, dx) in enumerate(conv_taps):
            tap = shift2d(pooled, dy, dx, 0.0).astype(mm_dtype)
            part = jnp.dot(w_ref[b, k], tap, preferred_element_type=jnp.float32)
            acc = part if acc is None else acc + part
        branch = acc
        out = out + branch                   # out += branch

    out_ref[...] = out.astype(out_ref.dtype)


def _round_up(v, m):
    return -(-v // m) * m


def _default_batch_blocks(N):
    """v7x has 2 TensorCores/chip -> keep >=2 parallel grid units when N allows.
    v5e/v6e are single-TC -> one fat block (no per-step overhead, fat matmul N)."""
    try:
        kind = jax.devices()[0].device_kind.lower()
    except Exception:
        kind = ""
    n_tc = 2 if ("v7" in kind or "7x" in kind) else 1
    blocks = max(min(N, n_tc), 1)
    while N % blocks:
        blocks -= 1
    return blocks


def _vmem_limit_bytes(C, hwb, w_mm):
    """Derive the scoped-VMEM limit from actual block bytes (not hardcoded)."""
    act = _round_up(C, 8) * _round_up(hwb, 128) * 4          # one f32 activation block
    wpad = (w_mm.shape[0] * w_mm.shape[1] *
            _round_up(w_mm.shape[2], 8) * _round_up(w_mm.shape[3], 128) *
            w_mm.dtype.itemsize)                              # padded weight block
    # x + out double-buffered, weights double-buffered (constant index_map --
    # single-buffering via pipeline_mode would save one copy at production C),
    # plus live body intermediates (out/branch/pooled/acc/12 masks/one tap).
    need = 2 * (act + act + wpad) + 18 * act
    need = int(1.25 * need) + (1 << 20)                       # compiler headroom
    return int(min(max(need, 16 << 20), 64 << 20))


def chained_residual_pool(x, weights, *, use_bf16_matmul=None, batch_blocks=None):
    """x: (N, C, H, W) f32; weights: (3, C, C, 3, 3) f32 (OIHW per branch)."""
    N, C, H, W = x.shape
    HW = H * W

    if use_bf16_matmul is None:
        # bf16 operands only pay off once the matmul is non-trivial (large C);
        # at tiny C the kernel is overhead/VPU bound and f32 keeps max accuracy.
        use_bf16_matmul = C >= 64
    mm_dtype = jnp.bfloat16 if use_bf16_matmul else x.dtype

    if batch_blocks is None:
        batch_blocks = _default_batch_blocks(N)
    assert N % batch_blocks == 0
    nb = N // batch_blocks
    hwb = nb * HW

    # Tap-major, channel-minor, matmul-ready weights:
    # (3, Cout, Cin, 3, 3) -> (3, 3, 3, Cout, Cin) -> (3, 9, Cout, Cin); cast
    # once here so the kernel's per-tap dots see bf16 (or f32) directly.
    w_mm = jnp.transpose(weights, (0, 3, 4, 1, 2)).reshape(3, 9, C, C).astype(mm_dtype)

    # Pack nb images into the lane axis: (B, C, nb*H*W) -- lane-dense minor dim.
    x_packed = (x.reshape(batch_blocks, nb, C, HW)
                 .transpose(0, 2, 1, 3)
                 .reshape(batch_blocks, C, hwb))

    out_packed = pl.pallas_call(
        functools.partial(crp_kernel, H=H, W=W),
        out_shape=jax.ShapeDtypeStruct((batch_blocks, C, hwb), x.dtype),
        grid=(batch_blocks,),
        in_specs=[
            pl.BlockSpec((None, C, hwb), lambda i: (i, 0, 0)),
            pl.BlockSpec((3, 9, C, C), lambda i: (0, 0, 0, 0)),
        ],
        out_specs=pl.BlockSpec((None, C, hwb), lambda i: (i, 0, 0)),
        compiler_params=pltpu.CompilerParams(
            dimension_semantics=("parallel",),
            vmem_limit_bytes=_vmem_limit_bytes(C, hwb, w_mm),
        ),
    )(x_packed, w_mm)

    return (out_packed.reshape(batch_blocks, C, nb, HW)
            .transpose(0, 2, 1, 3)
            .reshape(N, C, H, W))


def crp_reference(x, weights):
    """Pure-JAX reference matching the PyTorch forward."""
    out = jnp.maximum(x, 0.0)
    branch = out
    for b in range(3):
        pooled = lax.reduce_window(
            branch, -jnp.inf, lax.max,
            window_dimensions=(1, 1, 5, 5),
            window_strides=(1, 1, 1, 1),
            padding=[(0, 0), (0, 0), (2, 2), (2, 2)])
        branch = lax.conv_general_dilated(
            pooled, weights[b],
            window_strides=(1, 1),
            padding=[(1, 1), (1, 1)],
            dimension_numbers=('NCHW', 'OIHW', 'NCHW'),
            precision=lax.Precision.HIGHEST)
        out = out + branch
    return out


if __name__ == "__main__":
    key = jax.random.PRNGKey(0)
    kx_, kw_ = jax.random.split(key)

    N, C, H, W = 2, 8, 16, 16
    x = jax.random.normal(kx_, (N, C, H, W), dtype=jnp.float32)
    weights = 0.1 * jax.random.normal(kw_, (3, C, C, 3, 3), dtype=jnp.float32)

    y_ref = crp_reference(x, weights)

    # f32 MXU operands: tight tolerance (the previous 2e-2 was too loose for an
    # all-f32 path and would have hidden real regressions).
    y_f32 = chained_residual_pool(x, weights, use_bf16_matmul=False)
    jax.block_until_ready(y_f32)
    assert y_f32.shape == x.shape and y_f32.dtype == x.dtype
    if not jnp.allclose(y_f32, y_ref, rtol=1e-3, atol=1e-3):
        err = float(jnp.max(jnp.abs(y_f32 - y_ref)))
        raise AssertionError(f"f32 Pallas CRP kernel mismatch (max abs err {err})")

    # bf16 MXU operands (f32 accumulation): looser tolerance covers operand
    # rounding accumulated through three chained convolutions.
    y_bf16 = chained_residual_pool(x, weights, use_bf16_matmul=True)
    jax.block_until_ready(y_bf16)
    assert y_bf16.shape == x.shape and y_bf16.dtype == x.dtype
    if not jnp.allclose(y_bf16, y_ref, rtol=2e-2, atol=5e-2):
        err = float(jnp.max(jnp.abs(y_bf16 - y_ref)))
        raise AssertionError(f"bf16 Pallas CRP kernel mismatch (max abs err {err})")

    print("KERNEL_OK")
</pallas_src>

<mosaic_0001>
module attributes {stable_mosaic.version = 11 : i64} {
  func.func @crp_kernel(%arg0: i32, %arg1: memref<1x8x512xf32, #tpu.memory_space<vmem>>, %arg2: memref<3x9x8x8xf32, #tpu.memory_space<vmem>>, %arg3: memref<1x8x512xf32, #tpu.memory_space<vmem>>) attributes {dimension_semantics = [#tpu.dimension_semantics<parallel>], iteration_bounds = array<i64: 1>, scalar_prefetch = 0 : i64, scratch_operands = 0 : i64, tpu.core_type = #tpu.core_type<tc>, window_params = [{transform_indices = @transform_0, window_bounds = array<i64: 1, 8, 512>}, {pipeline_mode = #tpu.pipeline_mode<synchronous>, transform_indices = @transform_1, window_bounds = array<i64: 3, 9, 8, 8>}, {transform_indices = @transform_2, window_bounds = array<i64: 1, 8, 512>}]} {
    %0 = tpu.iota {dimensions = array<i32: 1>} : vector<8x512xi32>
    %c255_i32 = arith.constant 255 : i32
    %1 = vector.broadcast %c255_i32 : i32 to vector<8x512xi32>
    %2 = arith.andi %0, %1 : vector<8x512xi32>
    %c15_i32 = arith.constant 15 : i32
    %3 = vector.broadcast %c15_i32 : i32 to vector<8x512xi32>
    %4 = arith.andi %2, %3 : vector<8x512xi32>
    %c15_i32_0 = arith.constant 15 : i32
    %5 = vector.broadcast %c15_i32_0 : i32 to vector<8x512xi32>
    %6 = arith.cmpi slt, %4, %5 : vector<8x512xi32>
    %c1_i32 = arith.constant 1 : i32
    %7 = vector.broadcast %c1_i32 : i32 to vector<8x512xi32>
    %8 = arith.cmpi sge, %4, %7 : vector<8x512xi32>
    %c240_i32 = arith.constant 240 : i32
    %9 = vector.broadcast %c240_i32 : i32 to vector<8x512xi32>
    %10 = arith.cmpi slt, %2, %9 : vector<8x512xi32>
    %c16_i32 = arith.constant 16 : i32
    %11 = vector.broadcast %c16_i32 : i32 to vector<8x512xi32>
    %12 = arith.cmpi sge, %2, %11 : vector<8x512xi32>
    %c14_i32 = arith.constant 14 : i32
    %13 = vector.broadcast %c14_i32 : i32 to vector<8x512xi32>
    %14 = arith.cmpi slt, %4, %13 : vector<8x512xi32>
    %c2_i32 = arith.constant 2 : i32
    %15 = vector.broadcast %c2_i32 : i32 to vector<8x512xi32>
    %16 = arith.cmpi sge, %4, %15 : vector<8x512xi32>
    %c224_i32 = arith.constant 224 : i32
    %17 = vector.broadcast %c224_i32 : i32 to vector<8x512xi32>
    %18 = arith.cmpi slt, %2, %17 : vector<8x512xi32>
    %c32_i32 = arith.constant 32 : i32
    %19 = vector.broadcast %c32_i32 : i32 to vector<8x512xi32>
    %20 = arith.cmpi sge, %2, %19 : vector<8x512xi32>
    %21 = arith.andi %12, %8 : vector<8x512xi1>
    %22 = arith.andi %12, %6 : vector<8x512xi1>
    %23 = arith.andi %10, %8 : vector<8x512xi1>
    %24 = arith.andi %10, %6 : vector<8x512xi1>
    %c0 = arith.constant 0 : index
    %c0_1 = arith.constant 0 : index
    %c0_2 = arith.constant 0 : index
    %25 = vector.load %arg1[%c0, %c0_1, %c0_2] : memref<1x8x512xf32, #tpu.memory_space<vmem>>, vector<1x8x512xf32>
    %26 = vector.shape_cast %25 : vector<1x8x512xf32> to vector<8x512xf32>
    %cst = arith.constant 0.000000e+00 : f32
    %27 = vector.broadcast %cst : f32 to vector<8x512xf32>
    %28 = arith.maximumf %26, %27 : vector<8x512xf32>
    %c2_i32_3 = arith.constant 2 : i32
    %29 = tpu.dynamic_rotate %28 by %c2_i32_3 dim 1 : vector<8x512xf32>, i32 -> vector<8x512xf32>
    %cst_4 = arith.constant 0xFF800000 : f32
    %30 = vector.broadcast %cst_4 : f32 to vector<8x512xf32>
    %31 = arith.select %16, %29, %30 : vector<8x512xi1>, vector<8x512xf32>
    %32 = arith.maximumf %28, %31 : vector<8x512xf32>
    %c1_i32_5 = arith.constant 1 : i32
    %33 = tpu.dynamic_rotate %28 by %c1_i32_5 dim 1 : vector<8x512xf32>, i32 -> vector<8x512xf32>
    %cst_6 = arith.constant 0xFF800000 : f32
    %34 = vector.broadcast %cst_6 : f32 to vector<8x512xf32>
    %35 = arith.select %8, %33, %34 : vector<8x512xi1>, vector<8x512xf32>
    %36 = arith.maximumf %32, %35 : vector<8x512xf32>
    %c511_i32 = arith.constant 511 : i32
    %37 = tpu.dynamic_rotate %28 by %c511_i32 dim 1 : vector<8x512xf32>, i32 -> vector<8x512xf32>
    %cst_7 = arith.constant 0xFF800000 : f32
    %38 = vector.broadcast %cst_7 : f32 to vector<8x512xf32>
    %39 = arith.select %6, %37, %38 : vector<8x512xi1>, vector<8x512xf32>
    %40 = arith.maximumf %36, %39 : vector<8x512xf32>
    %c510_i32 = arith.constant 510 : i32
    %41 = tpu.dynamic_rotate %28 by %c510_i32 dim 1 : vector<8x512xf32>, i32 -> vector<8x512xf32>
    %cst_8 = arith.constant 0xFF800000 : f32
    %42 = vector.broadcast %cst_8 : f32 to vector<8x512xf32>
    %43 = arith.select %14, %41, %42 : vector<8x512xi1>, vector<8x512xf32>
    %44 = arith.maximumf %40, %43 : vector<8x512xf32>
    %c32_i32_9 = arith.constant 32 : i32
    %45 = tpu.dynamic_rotate %44 by %c32_i32_9 dim 1 : vector<8x512xf32>, i32 -> vector<8x512xf32>
    %cst_10 = arith.constant 0xFF800000 : f32
    %46 = vector.broadcast %cst_10 : f32 to vector<8x512xf32>
    %47 = arith.select %20, %45, %46 : vector<8x512xi1>, vector<8x512xf32>
    %48 = arith.maximumf %44, %47 : vector<8x512xf32>
    %c16_i32_11 = arith.constant 16 : i32
    %49 = tpu.dynamic_rotate %44 by %c16_i32_11 dim 1 : vector<8x512xf32>, i32 -> vector<8x512xf32>
    %cst_12 = arith.constant 0xFF800000 : f32
    %50 = vector.broadcast %cst_12 : f32 to vector<8x512xf32>
    %51 = arith.select %12, %49, %50 : vector<8x512xi1>, vector<8x512xf32>
    %52 = arith.maximumf %48, %51 : vector<8x512xf32>
    %c496_i32 = arith.constant 496 : i32
    %53 = tpu.dynamic_rotate %44 by %c496_i32 dim 1 : vector<8x512xf32>, i32 -> vector<8x512xf32>
    %cst_13 = arith.constant 0xFF800000 : f32
    %54 = vector.broadcast %cst_13 : f32 to vector<8x512xf32>
    %55 = arith.select %10, %53, %54 : vector<8x512xi1>, vector<8x512xf32>
    %56 = arith.maximumf %52, %55 : vector<8x512xf32>
    %c480_i32 = arith.constant 480 : i32
    %57 = tpu.dynamic_rotate %44 by %c480_i32 dim 1 : vector<8x512xf32>, i32 -> vector<8x512xf32>
    %cst_14 = arith.constant 0xFF800000 : f32
    %58 = vector.broadcast %cst_14 : f32 to vector<8x512xf32>
    %59 = arith.select %18, %57, %58 : vector<8x512xi1>, vector<8x512xf32>
    %60 = arith.maximumf %56, %59 : vector<8x512xf32>
    %c17_i32 = arith.constant 17 : i32
    %61 = tpu.dynamic_rotate %60 by %c17_i32 dim 1 : vector<8x512xf32>, i32 -> vector<8x512xf32>
    %cst_15 = arith.constant 0.000000e+00 : f32
    %62 = vector.broadcast %cst_15 : f32 to vector<8x512xf32>
    %63 = arith.select %21, %61, %62 : vector<8x512xi1>, vector<8x512xf32>
    %c0_16 = arith.constant 0 : index
    %c0_17 = arith.constant 0 : index
    %c0_18 = arith.constant 0 : index
    %c0_19 = arith.constant 0 : index
    %64 = vector.load %arg2[%c0_16, %c0_17, %c0_18, %c0_19] : memref<3x9x8x8xf32, #tpu.memory_space<vmem>>, vector<1x1x8x8xf32>
    %65 = vector.shape_cast %64 : vector<1x1x8x8xf32> to vector<8x8xf32>
    %cst_20 = arith.constant dense<0.000000e+00> : vector<8x512xf32>
    %66 = tpu.matmul %65, %63, %cst_20 {dimension_numbers = #tpu.dot_dimension_numbers<[1], [0], [0], [1], [0, 0, 1, 1], [], []>} : vector<8x8xf32>, vector<8x512xf32>, vector<8x512xf32> -> vector<8x512xf32>
    %c16_i32_21 = arith.constant 16 : i32
    %67 = tpu.dynamic_rotate %60 by %c16_i32_21 dim 1 : vector<8x512xf32>, i32 -> vector<8x512xf32>
    %cst_22 = arith.constant 0.000000e+00 : f32
    %68 = vector.broadcast %cst_22 : f32 to vector<8x512xf32>
    %69 = arith.select %12, %67, %68 : vector<8x512xi1>, vector<8x512xf32>
    %c0_23 = arith.constant 0 : index
    %c1 = arith.constant 1 : index
    %c0_24 = arith.constant 0 : index
    %c0_25 = arith.constant 0 : index
    %70 = vector.load %arg2[%c0_23, %c1, %c0_24, %c0_25] : memref<3x9x8x8xf32, #tpu.memory_space<vmem>>, vector<1x1x8x8xf32>
    %71 = vector.shape_cast %70 : vector<1x1x8x8xf32> to vector<8x8xf32>
    %cst_26 = arith.constant dense<0.000000e+00> : vector<8x512xf32>
    %72 = tpu.matmul %71, %69, %cst_26 {dimension_numbers = #tpu.dot_dimension_numbers<[1], [0], [0], [1], [0, 0, 1, 1], [], []>} : vector<8x8xf32>, vector<8x512xf32>, vector<8x512xf32> -> vector<8x512xf32>
    %73 = arith.addf %66, %72 : vector<8x512xf32>
    %c15_i32_27 = arith.constant 15 : i32
    %74 = tpu.dynamic_rotate %60 by %c15_i32_27 dim 1 : vector<8x512xf32>, i32 -> vector<8x512xf32>
    %cst_28 = arith.constant 0.000000e+00 : f32
    %75 = vector.broadcast %cst_28 : f32 to vector<8x512xf32>
    %76 = arith.select %22, %74, %75 : vector<8x512xi1>, vector<8x512xf32>
    %c0_29 = arith.constant 0 : index
    %c2 = arith.constant 2 : index
    %c0_30 = arith.constant 0 : index
    %c0_31 = arith.constant 0 : index
    %77 = vector.load %arg2[%c0_29, %c2, %c0_30, %c0_31] : memref<3x9x8x8xf32, #tpu.memory_space<vmem>>, vector<1x1x8x8xf32>
    %78 = vector.shape_cast %77 : vector<1x1x8x8xf32> to vector<8x8xf32>
    %cst_32 = arith.constant dense<0.000000e+00> : vector<8x512xf32>
    %79 = tpu.matmul %78, %76, %cst_32 {dimension_numbers = #tpu.dot_dimension_numbers<[1], [0], [0], [1], [0, 0, 1, 1], [], []>} : vector<8x8xf32>, vector<8x512xf32>, vector<8x512xf32> -> vector<8x512xf32>
    %80 = arith.addf %73, %79 : vector<8x512xf32>
    %c1_i32_33 = arith.constant 1 : i32
    %81 = tpu.dynamic_rotate %60 by %c1_i32_33 dim 1 : vector<8x512xf32>, i32 -> vector<8x512xf32>
    %cst_34 = arith.constant 0.000000e+00 : f32
    %82 = vector.broadcast %cst_34 : f32 to vector<8x512xf32>
    %83 = arith.select %8, %81, %82 : vector<8x512xi1>, vector<8x512xf32>
    %c0_35 = arith.constant 0 : index
    %c3 = arith.constant 3 : index
    %c0_36 = arith.constant 0 : index
    %c0_37 = arith.constant 0 : index
    %84 = vector.load %arg2[%c0_35, %c3, %c0_36, %c0_37] : memref<3x9x8x8xf32, #tpu.memory_space<vmem>>, vector<1x1x8x8xf32>
    %85 = vector.shape_cast %84 : vector<1x1x8x8xf32> to vector<8x8xf32>
    %cst_38 = arith.constant dense<0.000000e+00> : vector<8x512xf32>
    %86 = tpu.matmul %85, %83, %cst_38 {dimension_numbers = #tpu.dot_dimension_numbers<[1], [0], [0], [1], [0, 0, 1, 1], [], []>} : vector<8x8xf32>, vector<8x512xf32>, vector<8x512xf32> -> vector<8x512xf32>
    %87 = arith.addf %80, %86 : vector<8x512xf32>
    %c0_39 = arith.constant 0 : index
    %c4 = arith.constant 4 : index
    %c0_40 = arith.constant 0 : index
    %c0_41 = arith.constant 0 : index
    %88 = vector.load %arg2[%c0_39, %c4, %c0_40, %c0_41] : memref<3x9x8x8xf32, #tpu.memory_space<vmem>>, vector<1x1x8x8xf32>
    %89 = vector.shape_cast %88 : vector<1x1x8x8xf32> to vector<8x8xf32>
    %cst_42 = arith.constant dense<0.000000e+00> : vector<8x512xf32>
    %90 = tpu.matmul %89, %60, %cst_42 {dimension_numbers = #tpu.dot_dimension_numbers<[1], [0], [0], [1], [0, 0, 1, 1], [], []>} : vector<8x8xf32>, vector<8x512xf32>, vector<8x512xf32> -> vector<8x512xf32>
    %91 = arith.addf %87, %90 : vector<8x512xf32>
    %c511_i32_43 = arith.constant 511 : i32
    %92 = tpu.dynamic_rotate %60 by %c511_i32_43 dim 1 : vector<8x512xf32>, i32 -> vector<8x512xf32>
    %cst_44 = arith.constant 0.000000e+00 : f32
    %93 = vector.broadcast %cst_44 : f32 to vector<8x512xf32>
    %94 = arith.select %6, %92, %93 : vector<8x512xi1>, vector<8x512xf32>
    %c0_45 = arith.constant 0 : index
    %c5 = arith.constant 5 : index
    %c0_46 = arith.constant 0 : index
    %c0_47 = arith.constant 0 : index
    %95 = vector.load %arg2[%c0_45, %c5, %c0_46, %c0_47] : memref<3x9x8x8xf32, #tpu.memory_space<vmem>>, vector<1x1x8x8xf32>
    %96 = vector.shape_cast %95 : vector<1x1x8x8xf32> to vector<8x8xf32>
    %cst_48 = arith.constant dense<0.000000e+00> : vector<8x512xf32>
    %97 = tpu.matmul %96, %94, %cst_48 {dimension_numbers = #tpu.dot_dimension_numbers<[1], [0], [0], [1], [0, 0, 1, 1], [], []>} : vector<8x8xf32>, vector<8x512xf32>, vector<8x512xf32> -> vector<8x512xf32>
    %98 = arith.addf %91, %97 : vector<8x512xf32>
    %c497_i32 = arith.constant 497 : i32
    %99 = tpu.dynamic_rotate %60 by %c497_i32 dim 1 : vector<8x512xf32>, i32 -> vector<8x512xf32>
    %cst_49 = arith.constant 0.000000e+00 : f32
    %100 = vector.broadcast %cst_49 : f32 to vector<8x512xf32>
    %101 = arith.select %23, %99, %100 : vector<8x512xi1>, vector<8x512xf32>
    %c0_50 = arith.constant 0 : index
    %c6 = arith.constant 6 : index
    %c0_51 = arith.constant 0 : index
    %c0_52 = arith.constant 0 : index
    %102 = vector.load %arg2[%c0_50, %c6, %c0_51, %c0_52] : memref<3x9x8x8xf32, #tpu.memory_space<vmem>>, vector<1x1x8x8xf32>
    %103 = vector.shape_cast %102 : vector<1x1x8x8xf32> to vector<8x8xf32>
    %cst_53 = arith.constant dense<0.000000e+00> : vector<8x512xf32>
    %104 = tpu.matmul %103, %101, %cst_53 {dimension_numbers = #tpu.dot_dimension_numbers<[1], [0], [0], [1], [0, 0, 1, 1], [], []>} : vector<8x8xf32>, vector<8x512xf32>, vector<8x512xf32> -> vector<8x512xf32>
    %105 = arith.addf %98, %104 : vector<8x512xf32>
    %c496_i32_54 = arith.constant 496 : i32
    %106 = tpu.dynamic_rotate %60 by %c496_i32_54 dim 1 : vector<8x512xf32>, i32 -> vector<8x512xf32>
    %cst_55 = arith.constant 0.000000e+00 : f32
    %107 = vector.broadcast %cst_55 : f32 to vector<8x512xf32>
    %108 = arith.select %10, %106, %107 : vector<8x512xi1>, vector<8x512xf32>
    %c0_56 = arith.constant 0 : index
    %c7 = arith.constant 7 : index
    %c0_57 = arith.constant 0 : index
    %c0_58 = arith.constant 0 : index
    %109 = vector.load %arg2[%c0_56, %c7, %c0_57, %c0_58] : memref<3x9x8x8xf32, #tpu.memory_space<vmem>>, vector<1x1x8x8xf32>
    %110 = vector.shape_cast %109 : vector<1x1x8x8xf32> to vector<8x8xf32>
    %cst_59 = arith.constant dense<0.000000e+00> : vector<8x512xf32>
    %111 = tpu.matmul %110, %108, %cst_59 {dimension_numbers = #tpu.dot_dimension_numbers<[1], [0], [0], [1], [0, 0, 1, 1], [], []>} : vector<8x8xf32>, vector<8x512xf32>, vector<8x512xf32> -> vector<8x512xf32>
    %112 = arith.addf %105, %111 : vector<8x512xf32>
    %c495_i32 = arith.constant 495 : i32
    %113 = tpu.dynamic_rotate %60 by %c495_i32 dim 1 : vector<8x512xf32>, i32 -> vector<8x512xf32>
    %cst_60 = arith.constant 0.000000e+00 : f32
    %114 = vector.broadcast %cst_60 : f32 to vector<8x512xf32>
    %115 = arith.select %24, %113, %114 : vector<8x512xi1>, vector<8x512xf32>
    %c0_61 = arith.constant 0 : index
    %c8 = arith.constant 8 : index
    %c0_62 = arith.constant 0 : index
    %c0_63 = arith.constant 0 : index
    %116 = vector.load %arg2[%c0_61, %c8, %c0_62, %c0_63] : memref<3x9x8x8xf32, #tpu.memory_space<vmem>>, vector<1x1x8x8xf32>
    %117 = vector.shape_cast %116 : vector<1x1x8x8xf32> to vector<8x8xf32>
    %cst_64 = arith.constant dense<0.000000e+00> : vector<8x512xf32>
    %118 = tpu.matmul %117, %115, %cst_64 {dimension_numbers = #tpu.dot_dimension_numbers<[1], [0], [0], [1], [0, 0, 1, 1], [], []>} : vector<8x8xf32>, vector<8x512xf32>, vector<8x512xf32> -> vector<8x512xf32>
    %119 = arith.addf %112, %118 : vector<8x512xf32>
    %120 = arith.addf %28, %119 : vector<8x512xf32>
    %c2_i32_65 = arith.constant 2 : i32
    %121 = tpu.dynamic_rotate %119 by %c2_i32_65 dim 1 : vector<8x512xf32>, i32 -> vector<8x512xf32>
    %cst_66 = arith.constant 0xFF800000 : f32
    %122 = vector.broadcast %cst_66 : f32 to vector<8x512xf32>
    %123 = arith.select %16, %121, %122 : vector<8x512xi1>, vector<8x512xf32>
    %124 = arith.maximumf %119, %123 : vector<8x512xf32>
    %c1_i32_67 = arith.constant 1 : i32
    %125 = tpu.dynamic_rotate %119 by %c1_i32_67 dim 1 : vector<8x512xf32>, i32 -> vector<8x512xf32>
    %cst_68 = arith.constant 0xFF800000 : f32
    %126 = vector.broadcast %cst_68 : f32 to vector<8x512xf32>
    %127 = arith.select %8, %125, %126 : vector<8x512xi1>, vector<8x512xf32>
    %128 = arith.maximumf %124, %127 : vector<8x512xf32>
    %c511_i32_69 = arith.constant 511 : i32
    %129 = tpu.dynamic_rotate %119 by %c511_i32_69 dim 1 : vector<8x512xf32>, i32 -> vector<8x512xf32>
    %cst_70 = arith.constant 0xFF800000 : f32
    %130 = vector.broadcast %cst_70 : f32 to vector<8x512xf32>
    %131 = arith.select %6, %129, %130 : vector<8x512xi1>, vector<8x512xf32>
    %132 = arith.maximumf %128, %131 : vector<8x512xf32>
    %c510_i32_71 = arith.constant 510 : i32
    %133 = tpu.dynamic_rotate %119 by %c510_i32_71 dim 1 : vector<8x512xf32>, i32 -> vector<8x512xf32>
    %cst_72 = arith.constant 0xFF800000 : f32
    %134 = vector.broadcast %cst_72 : f32 to vector<8x512xf32>
    %135 = arith.select %14, %133, %134 : vector<8x512xi1>, vector<8x512xf32>
    %136 = arith.maximumf %132, %135 : vector<8x512xf32>
    %c32_i32_73 = arith.constant 32 : i32
    %137 = tpu.dynamic_rotate %136 by %c32_i32_73 dim 1 : vector<8x512xf32>, i32 -> vector<8x512xf32>
    %cst_74 = arith.constant 0xFF800000 : f32
    %138 = vector.broadcast %cst_74 : f32 to vector<8x512xf32>
    %139 = arith.select %20, %137, %138 : vector<8x512xi1>, vector<8x512xf32>
    %140 = arith.maximumf %136, %139 : vector<8x512xf32>
    %c16_i32_75 = arith.constant 16 : i32
    %141 = tpu.dynamic_rotate %136 by %c16_i32_75 dim 1 : vector<8x512xf32>, i32 -> vector<8x512xf32>
    %cst_76 = arith.constant 0xFF800000 : f32
    %142 = vector.broadcast %cst_76 : f32 to vector<8x512xf32>
    %143 = arith.select %12, %141, %142 : vector<8x512xi1>, vector<8x512xf32>
    %144 = arith.maximumf %140, %143 : vector<8x512xf32>
    %c496_i32_77 = arith.constant 496 : i32
    %145 = tpu.dynamic_rotate %136 by %c496_i32_77 dim 1 : vector<8x512xf32>, i32 -> vector<8x512xf32>
    %cst_78 = arith.constant 0xFF800000 : f32
    %146 = vector.broadcast %cst_78 : f32 to vector<8x512xf32>
    %147 = arith.select %10, %145, %146 : vector<8x512xi1>, vector<8x512xf32>
    %148 = arith.maximumf %144, %147 : vector<8x512xf32>
    %c480_i32_79 = arith.constant 480 : i32
    %149 = tpu.dynamic_rotate %136 by %c480_i32_79 dim 1 : vector<8x512xf32>, i32 -> vector<8x512xf32>
    %cst_80 = arith.constant 0xFF800000 : f32
    %150 = vector.broadcast %cst_80 : f32 to vector<8x512xf32>
    %151 = arith.select %18, %149, %150 : vector<8x512xi1>, vector<8x512xf32>
    %152 = arith.maximumf %148, %151 : vector<8x512xf32>
    %c17_i32_81 = arith.constant 17 : i32
    %153 = tpu.dynamic_rotate %152 by %c17_i32_81 dim 1 : vector<8x512xf32>, i32 -> vector<8x512xf32>
    %cst_82 = arith.constant 0.000000e+00 : f32
    %154 = vector.broadcast %cst_82 : f32 to vector<8x512xf32>
    %155 = arith.select %21, %153, %154 : vector<8x512xi1>, vector<8x512xf32>
    %c1_83 = arith.constant 1 : index
    %c0_84 = arith.constant 0 : index
    %c0_85 = arith.constant 0 : index
    %c0_86 = arith.constant 0 : index
    %156 = vector.load %arg2[%c1_83, %c0_84, %c0_85, %c0_86] : memref<3x9x8x8xf32, #tpu.memory_space<vmem>>, vector<1x1x8x8xf32>
    %157 = vector.shape_cast %156 : vector<1x1x8x8xf32> to vector<8x8xf32>
    %cst_87 = arith.constant dense<0.000000e+00> : vector<8x512xf32>
    %158 = tpu.matmul %157, %155, %cst_87 {dimension_numbers = #tpu.dot_dimension_numbers<[1], [0], [0], [1], [0, 0, 1, 1], [], []>} : vector<8x8xf32>, vector<8x512xf32>, vector<8x512xf32> -> vector<8x512xf32>
    %c16_i32_88 = arith.constant 16 : i32
    %159 = tpu.dynamic_rotate %152 by %c16_i32_88 dim 1 : vector<8x512xf32>, i32 -> vector<8x512xf32>
    %cst_89 = arith.constant 0.000000e+00 : f32
    %160 = vector.broadcast %cst_89 : f32 to vector<8x512xf32>
    %161 = arith.select %12, %159, %160 : vector<8x512xi1>, vector<8x512xf32>
    %c1_90 = arith.constant 1 : index
    %c1_91 = arith.constant 1 : index
    %c0_92 = arith.constant 0 : index
    %c0_93 = arith.constant 0 : index
    %162 = vector.load %arg2[%c1_90, %c1_91, %c0_92, %c0_93] : memref<3x9x8x8xf32, #tpu.memory_space<vmem>>, vector<1x1x8x8xf32>
    %163 = vector.shape_cast %162 : vector<1x1x8x8xf32> to vector<8x8xf32>
    %cst_94 = arith.constant dense<0.000000e+00> : vector<8x512xf32>
    %164 = tpu.matmul %163, %161, %cst_94 {dimension_numbers = #tpu.dot_dimension_numbers<[1], [0], [0], [1], [0, 0, 1, 1], [], []>} : vector<8x8xf32>, vector<8x512xf32>, vector<8x512xf32> -> vector<8x512xf32>
    %165 = arith.addf %158, %164 : vector<8x512xf32>
    %c15_i32_95 = arith.constant 15 : i32
    %166 = tpu.dynamic_rotate %152 by %c15_i32_95 dim 1 : vector<8x512xf32>, i32 -> vector<8x512xf32>
    %cst_96 = arith.constant 0.000000e+00 : f32
    %167 = vector.broadcast %cst_96 : f32 to vector<8x512xf32>
    %168 = arith.select %22, %166, %167 : vector<8x512xi1>, vector<8x512xf32>
    %c1_97 = arith.constant 1 : index
    %c2_98 = arith.constant 2 : index
    %c0_99 = arith.constant 0 : index
    %c0_100 = arith.constant 0 : index
    %169 = vector.load %arg2[%c1_97, %c2_98, %c0_99, %c0_100] : memref<3x9x8x8xf32, #tpu.memory_space<vmem>>, vector<1x1x8x8xf32>
    %170 = vector.shape_cast %169 : vector<1x1x8x8xf32> to vector<8x8xf32>
    %cst_101 = arith.constant dense<0.000000e+00> : vector<8x512xf32>
    %171 = tpu.matmul %170, %168, %cst_101 {dimension_numbers = #tpu.dot_dimension_numbers<[1], [0], [0], [1], [0, 0, 1, 1], [], []>} : vector<8x8xf32>, vector<8x512xf32>, vector<8x512xf32> -> vector<8x512xf32>
    %172 = arith.addf %165, %171 : vector<8x512xf32>
    %c1_i32_102 = arith.constant 1 : i32
    %173 = tpu.dynamic_rotate %152 by %c1_i32_102 dim 1 : vector<8x512xf32>, i32 -> vector<8x512xf32>
    %cst_103 = arith.constant 0.000000e+00 : f32
    %174 = vector.broadcast %cst_103 : f32 to vector<8x512xf32>
    %175 = arith.select %8, %173, %174 : vector<8x512xi1>, vector<8x512xf32>
    %c1_104 = arith.constant 1 : index
    %c3_105 = arith.constant 3 : index
    %c0_106 = arith.constant 0 : index
    %c0_107 = arith.constant 0 : index
    %176 = vector.load %arg2[%c1_104, %c3_105, %c0_106, %c0_107] : memref<3x9x8x8xf32, #tpu.memory_space<vmem>>, vector<1x1x8x8xf32>
    %177 = vector.shape_cast %176 : vector<1x1x8x8xf32> to vector<8x8xf32>
    %cst_108 = arith.constant dense<0.000000e+00> : vector<8x512xf32>
    %178 = tpu.matmul %177, %175, %cst_108 {dimension_numbers = #tpu.dot_dimension_numbers<[1], [0], [0], [1], [0, 0, 1, 1], [], []>} : vector<8x8xf32>, vector<8x512xf32>, vector<8x512xf32> -> vector<8x512xf32>
    %179 = arith.addf %172, %178 : vector<8x512xf32>
    %c1_109 = arith.constant 1 : index
    %c4_110 = arith.constant 4 : index
    %c0_111 = arith.constant 0 : index
    %c0_112 = arith.constant 0 : index
    %180 = vector.load %arg2[%c1_109, %c4_110, %c0_111, %c0_112] : memref<3x9x8x8xf32, #tpu.memory_space<vmem>>, vector<1x1x8x8xf32>
    %181 = vector.shape_cast %180 : vector<1x1x8x8xf32> to vector<8x8xf32>
    %cst_113 = arith.constant dense<0.000000e+00> : vector<8x512xf32>
    %182 = tpu.matmul %181, %152, %cst_113 {dimension_numbers = #tpu.dot_dimension_numbers<[1], [0], [0], [1], [0, 0, 1, 1], [], []>} : vector<8x8xf32>, vector<8x512xf32>, vector<8x512xf32> -> vector<8x512xf32>
    %183 = arith.addf %179, %182 : vector<8x512xf32>
    %c511_i32_114 = arith.constant 511 : i32
    %184 = tpu.dynamic_rotate %152 by %c511_i32_114 dim 1 : vector<8x512xf32>, i32 -> vector<8x512xf32>
    %cst_115 = arith.constant 0.000000e+00 : f32
    %185 = vector.broadcast %cst_115 : f32 to vector<8x512xf32>
    %186 = arith.select %6, %184, %185 : vector<8x512xi1>, vector<8x512xf32>
    %c1_116 = arith.constant 1 : index
    %c5_117 = arith.constant 5 : index
    %c0_118 = arith.constant 0 : index
    %c0_119 = arith.constant 0 : index
    %187 = vector.load %arg2[%c1_116, %c5_117, %c0_118, %c0_119] : memref<3x9x8x8xf32, #tpu.memory_space<vmem>>, vector<1x1x8x8xf32>
    %188 = vector.shape_cast %187 : vector<1x1x8x8xf32> to vector<8x8xf32>
    %cst_120 = arith.constant dense<0.000000e+00> : vector<8x512xf32>
    %189 = tpu.matmul %188, %186, %cst_120 {dimension_numbers = #tpu.dot_dimension_numbers<[1], [0], [0], [1], [0, 0, 1, 1], [], []>} : vector<8x8xf32>, vector<8x512xf32>, vector<8x512xf32> -> vector<8x512xf32>
    %190 = arith.addf %183, %189 : vector<8x512xf32>
    %c497_i32_121 = arith.constant 497 : i32
    %191 = tpu.dynamic_rotate %152 by %c497_i32_121 dim 1 : vector<8x512xf32>, i32 -> vector<8x512xf32>
    %cst_122 = arith.constant 0.000000e+00 : f32
    %192 = vector.broadcast %cst_122 : f32 to vector<8x512xf32>
    %193 = arith.select %23, %191, %192 : vector<8x512xi1>, vector<8x512xf32>
    %c1_123 = arith.constant 1 : index
    %c6_124 = arith.constant 6 : index
    %c0_125 = arith.constant 0 : index
    %c0_126 = arith.constant 0 : index
    %194 = vector.load %arg2[%c1_123, %c6_124, %c0_125, %c0_126] : memref<3x9x8x8xf32, #tpu.memory_space<vmem>>, vector<1x1x8x8xf32>
    %195 = vector.shape_cast %194 : vector<1x1x8x8xf32> to vector<8x8xf32>
    %cst_127 = arith.constant dense<0.000000e+00> : vector<8x512xf32>
    %196 = tpu.matmul %195, %193, %cst_127 {dimension_numbers = #tpu.dot_dimension_numbers<[1], [0], [0], [1], [0, 0, 1, 1], [], []>} : vector<8x8xf32>, vector<8x512xf32>, vector<8x512xf32> -> vector<8x512xf32>
    %197 = arith.addf %190, %196 : vector<8x512xf32>
    %c496_i32_128 = arith.constant 496 : i32
    %198 = tpu.dynamic_rotate %152 by %c496_i32_128 dim 1 : vector<8x512xf32>, i32 -> vector<8x512xf32>
    %cst_129 = arith.constant 0.000000e+00 : f32
    %199 = vector.broadcast %cst_129 : f32 to vector<8x512xf32>
    %200 = arith.select %10, %198, %199 : vector<8x512xi1>, vector<8x512xf32>
    %c1_130 = arith.constant 1 : index
    %c7_131 = arith.constant 7 : index
    %c0_132 = arith.constant 0 : index
    %c0_133 = arith.constant 0 : index
    %201 = vector.load %arg2[%c1_130, %c7_131, %c0_132, %c0_133] : memref<3x9x8x8xf32, #tpu.memory_space<vmem>>, vector<1x1x8x8xf32>
    %202 = vector.shape_cast %201 : vector<1x1x8x8xf32> to vector<8x8xf32>
    %cst_134 = arith.constant dense<0.000000e+00> : vector<8x512xf32>
    %203 = tpu.matmul %202, %200, %cst_134 {dimension_numbers = #tpu.dot_dimension_numbers<[1], [0], [0], [1], [0, 0, 1, 1], [], []>} : vector<8x8xf32>, vector<8x512xf32>, vector<8x512xf32> -> vector<8x512xf32>
    %204 = arith.addf %197, %203 : vector<8x512xf32>
    %c495_i32_135 = arith.constant 495 : i32
    %205 = tpu.dynamic_rotate %152 by %c495_i32_135 dim 1 : vector<8x512xf32>, i32 -> vector<8x512xf32>
    %cst_136 = arith.constant 0.000000e+00 : f32
    %206 = vector.broadcast %cst_136 : f32 to vector<8x512xf32>
    %207 = arith.select %24, %205, %206 : vector<8x512xi1>, vector<8x512xf32>
    %c1_137 = arith.constant 1 : index
    %c8_138 = arith.constant 8 : index
    %c0_139 = arith.constant 0 : index
    %c0_140 = arith.constant 0 : index
    %208 = vector.load %arg2[%c1_137, %c8_138, %c0_139, %c0_140] : memref<3x9x8x8xf32, #tpu.memory_space<vmem>>, vector<1x1x8x8xf32>
    %209 = vector.shape_cast %208 : vector<1x1x8x8xf32> to vector<8x8xf32>
    %cst_141 = arith.constant dense<0.000000e+00> : vector<8x512xf32>
    %210 = tpu.matmul %209, %207, %cst_141 {dimension_numbers = #tpu.dot_dimension_numbers<[1], [0], [0], [1], [0, 0, 1, 1], [], []>} : vector<8x8xf32>, vector<8x512xf32>, vector<8x512xf32> -> vector<8x512xf32>
    %211 = arith.addf %204, %210 : vector<8x512xf32>
    %212 = arith.addf %120, %211 : vector<8x512xf32>
    %c2_i32_142 = arith.constant 2 : i32
    %213 = tpu.dynamic_rotate %211 by %c2_i32_142 dim 1 : vector<8x512xf32>, i32 -> vector<8x512xf32>
    %cst_143 = arith.constant 0xFF800000 : f32
    %214 = vector.broadcast %cst_143 : f32 to vector<8x512xf32>
    %215 = arith.select %16, %213, %214 : vector<8x512xi1>, vector<8x512xf32>
    %216 = arith.maximumf %211, %215 : vector<8x512xf32>
    %c1_i32_144 = arith.constant 1 : i32
    %217 = tpu.dynamic_rotate %211 by %c1_i32_144 dim 1 : vector<8x512xf32>, i32 -> vector<8x512xf32>
    %cst_145 = arith.constant 0xFF800000 : f32
    %218 = vector.broadcast %cst_145 : f32 to vector<8x512xf32>
    %219 = arith.select %8, %217, %218 : vector<8x512xi1>, vector<8x512xf32>
    %220 = arith.maximumf %216, %219 : vector<8x512xf32>
    %c511_i32_146 = arith.constant 511 : i32
    %221 = tpu.dynamic_rotate %211 by %c511_i32_146 dim 1 : vector<8x512xf32>, i32 -> vector<8x512xf32>
    %cst_147 = arith.constant 0xFF800000 : f32
    %222 = vector.broadcast %cst_147 : f32 to vector<8x512xf32>
    %223 = arith.select %6, %221, %222 : vector<8x512xi1>, vector<8x512xf32>
    %224 = arith.maximumf %220, %223 : vector<8x512xf32>
    %c510_i32_148 = arith.constant 510 : i32
    %225 = tpu.dynamic_rotate %211 by %c510_i32_148 dim 1 : vector<8x512xf32>, i32 -> vector<8x512xf32>
    %cst_149 = arith.constant 0xFF800000 : f32
    %226 = vector.broadcast %cst_149 : f32 to vector<8x512xf32>
    %227 = arith.select %14, %225, %226 : vector<8x512xi1>, vector<8x512xf32>
    %228 = arith.maximumf %224, %227 : vector<8x512xf32>
    %c32_i32_150 = arith.constant 32 : i32
    %229 = tpu.dynamic_rotate %228 by %c32_i32_150 dim 1 : vector<8x512xf32>, i32 -> vector<8x512xf32>
    %cst_151 = arith.constant 0xFF800000 : f32
    %230 = vector.broadcast %cst_151 : f32 to vector<8x512xf32>
    %231 = arith.select %20, %229, %230 : vector<8x512xi1>, vector<8x512xf32>
    %232 = arith.maximumf %228, %231 : vector<8x512xf32>
    %c16_i32_152 = arith.constant 16 : i32
    %233 = tpu.dynamic_rotate %228 by %c16_i32_152 dim 1 : vector<8x512xf32>, i32 -> vector<8x512xf32>
    %cst_153 = arith.constant 0xFF800000 : f32
    %234 = vector.broadcast %cst_153 : f32 to vector<8x512xf32>
    %235 = arith.select %12, %233, %234 : vector<8x512xi1>, vector<8x512xf32>
    %236 = arith.maximumf %232, %235 : vector<8x512xf32>
    %c496_i32_154 = arith.constant 496 : i32
    %237 = tpu.dynamic_rotate %228 by %c496_i32_154 dim 1 : vector<8x512xf32>, i32 -> vector<8x512xf32>
    %cst_155 = arith.constant 0xFF800000 : f32
    %238 = vector.broadcast %cst_155 : f32 to vector<8x512xf32>
    %239 = arith.select %10, %237, %238 : vector<8x512xi1>, vector<8x512xf32>
    %240 = arith.maximumf %236, %239 : vector<8x512xf32>
    %c480_i32_156 = arith.constant 480 : i32
    %241 = tpu.dynamic_rotate %228 by %c480_i32_156 dim 1 : vector<8x512xf32>, i32 -> vector<8x512xf32>
    %cst_157 = arith.constant 0xFF800000 : f32
    %242 = vector.broadcast %cst_157 : f32 to vector<8x512xf32>
    %243 = arith.select %18, %241, %242 : vector<8x512xi1>, vector<8x512xf32>
    %244 = arith.maximumf %240, %243 : vector<8x512xf32>
    %c17_i32_158 = arith.constant 17 : i32
    %245 = tpu.dynamic_rotate %244 by %c17_i32_158 dim 1 : vector<8x512xf32>, i32 -> vector<8x512xf32>
    %cst_159 = arith.constant 0.000000e+00 : f32
    %246 = vector.broadcast %cst_159 : f32 to vector<8x512xf32>
    %247 = arith.select %21, %245, %246 : vector<8x512xi1>, vector<8x512xf32>
    %c2_160 = arith.constant 2 : index
    %c0_161 = arith.constant 0 : index
    %c0_162 = arith.constant 0 : index
    %c0_163 = arith.constant 0 : index
    %248 = vector.load %arg2[%c2_160, %c0_161, %c0_162, %c0_163] : memref<3x9x8x8xf32, #tpu.memory_space<vmem>>, vector<1x1x8x8xf32>
    %249 = vector.shape_cast %248 : vector<1x1x8x8xf32> to vector<8x8xf32>
    %cst_164 = arith.constant dense<0.000000e+00> : vector<8x512xf32>
    %250 = tpu.matmul %249, %247, %cst_164 {dimension_numbers = #tpu.dot_dimension_numbers<[1], [0], [0], [1], [0, 0, 1, 1], [], []>} : vector<8x8xf32>, vector<8x512xf32>, vector<8x512xf32> -> vector<8x512xf32>
    %c16_i32_165 = arith.constant 16 : i32
    %251 = tpu.dynamic_rotate %244 by %c16_i32_165 dim 1 : vector<8x512xf32>, i32 -> vector<8x512xf32>
    %cst_166 = arith.constant 0.000000e+00 : f32
    %252 = vector.broadcast %cst_166 : f32 to vector<8x512xf32>
    %253 = arith.select %12, %251, %252 : vector<8x512xi1>, vector<8x512xf32>
    %c2_167 = arith.constant 2 : index
    %c1_168 = arith.constant 1 : index
    %c0_169 = arith.constant 0 : index
    %c0_170 = arith.constant 0 : index
    %254 = vector.load %arg2[%c2_167, %c1_168, %c0_169, %c0_170] : memref<3x9x8x8xf32, #tpu.memory_space<vmem>>, vector<1x1x8x8xf32>
    %255 = vector.shape_cast %254 : vector<1x1x8x8xf32> to vector<8x8xf32>
    %cst_171 = arith.constant dense<0.000000e+00> : vector<8x512xf32>
    %256 = tpu.matmul %255, %253, %cst_171 {dimension_numbers = #tpu.dot_dimension_numbers<[1], [0], [0], [1], [0, 0, 1, 1], [], []>} : vector<8x8xf32>, vector<8x512xf32>, vector<8x512xf32> -> vector<8x512xf32>
    %257 = arith.addf %250, %256 : vector<8x512xf32>
    %c15_i32_172 = arith.constant 15 : i32
    %258 = tpu.dynamic_rotate %244 by %c15_i32_172 dim 1 : vector<8x512xf32>, i32 -> vector<8x512xf32>
    %cst_173 = arith.constant 0.000000e+00 : f32
    %259 = vector.broadcast %cst_173 : f32 to vector<8x512xf32>
    %260 = arith.select %22, %258, %259 : vector<8x512xi1>, vector<8x512xf32>
    %c2_174 = arith.constant 2 : index
    %c2_175 = arith.constant 2 : index
    %c0_176 = arith.constant 0 : index
    %c0_177 = arith.constant 0 : index
    %261 = vector.load %arg2[%c2_174, %c2_175, %c0_176, %c0_177] : memref<3x9x8x8xf32, #tpu.memory_space<vmem>>, vector<1x1x8x8xf32>
    %262 = vector.shape_cast %261 : vector<1x1x8x8xf32> to vector<8x8xf32>
    %cst_178 = arith.constant dense<0.000000e+00> : vector<8x512xf32>
    %263 = tpu.matmul %262, %260, %cst_178 {dimension_numbers = #tpu.dot_dimension_numbers<[1], [0], [0], [1], [0, 0, 1, 1], [], []>} : vector<8x8xf32>, vector<8x512xf32>, vector<8x512xf32> -> vector<8x512xf32>
    %264 = arith.addf %257, %263 : vector<8x512xf32>
    %c1_i32_179 = arith.constant 1 : i32
    %265 = tpu.dynamic_rotate %244 by %c1_i32_179 dim 1 : vector<8x512xf32>, i32 -> vector<8x512xf32>
    %cst_180 = arith.constant 0.000000e+00 : f32
    %266 = vector.broadcast %cst_180 : f32 to vector<8x512xf32>
    %267 = arith.select %8, %265, %266 : vector<8x512xi1>, vector<8x512xf32>
    %c2_181 = arith.constant 2 : index
    %c3_182 = arith.constant 3 : index
    %c0_183 = arith.constant 0 : index
    %c0_184 = arith.constant 0 : index
    %268 = vector.load %arg2[%c2_181, %c3_182, %c0_183, %c0_184] : memref<3x9x8x8xf32, #tpu.memory_space<vmem>>, vector<1x1x8x8xf32>
    %269 = vector.shape_cast %268 : vector<1x1x8x8xf32> to vector<8x8xf32>
    %cst_185 = arith.constant dense<0.000000e+00> : vector<8x512xf32>
    %270 = tpu.matmul %269, %267, %cst_185 {dimension_numbers = #tpu.dot_dimension_numbers<[1], [0], [0], [1], [0, 0, 1, 1], [], []>} : vector<8x8xf32>, vector<8x512xf32>, vector<8x512xf32> -> vector<8x512xf32>
    %271 = arith.addf %264, %270 : vector<8x512xf32>
    %c2_186 = arith.constant 2 : index
    %c4_187 = arith.constant 4 : index
    %c0_188 = arith.constant 0 : index
    %c0_189 = arith.constant 0 : index
    %272 = vector.load %arg2[%c2_186, %c4_187, %c0_188, %c0_189] : memref<3x9x8x8xf32, #tpu.memory_space<vmem>>, vector<1x1x8x8xf32>
    %273 = vector.shape_cast %272 : vector<1x1x8x8xf32> to vector<8x8xf32>
    %cst_190 = arith.constant dense<0.000000e+00> : vector<8x512xf32>
    %274 = tpu.matmul %273, %244, %cst_190 {dimension_numbers = #tpu.dot_dimension_numbers<[1], [0], [0], [1], [0, 0, 1, 1], [], []>} : vector<8x8xf32>, vector<8x512xf32>, vector<8x512xf32> -> vector<8x512xf32>
    %275 = arith.addf %271, %274 : vector<8x512xf32>
    %c511_i32_191 = arith.constant 511 : i32
    %276 = tpu.dynamic_rotate %244 by %c511_i32_191 dim 1 : vector<8x512xf32>, i32 -> vector<8x512xf32>
    %cst_192 = arith.constant 0.000000e+00 : f32
    %277 = vector.broadcast %cst_192 : f32 to vector<8x512xf32>
    %278 = arith.select %6, %276, %277 : vector<8x512xi1>, vector<8x512xf32>
    %c2_193 = arith.constant 2 : index
    %c5_194 = arith.constant 5 : index
    %c0_195 = arith.constant 0 : index
    %c0_196 = arith.constant 0 : index
    %279 = vector.load %arg2[%c2_193, %c5_194, %c0_195, %c0_196] : memref<3x9x8x8xf32, #tpu.memory_space<vmem>>, vector<1x1x8x8xf32>
    %280 = vector.shape_cast %279 : vector<1x1x8x8xf32> to vector<8x8xf32>
    %cst_197 = arith.constant dense<0.000000e+00> : vector<8x512xf32>
    %281 = tpu.matmul %280, %278, %cst_197 {dimension_numbers = #tpu.dot_dimension_numbers<[1], [0], [0], [1], [0, 0, 1, 1], [], []>} : vector<8x8xf32>, vector<8x512xf32>, vector<8x512xf32> -> vector<8x512xf32>
    %282 = arith.addf %275, %281 : vector<8x512xf32>
    %c497_i32_198 = arith.constant 497 : i32
    %283 = tpu.dynamic_rotate %244 by %c497_i32_198 dim 1 : vector<8x512xf32>, i32 -> vector<8x512xf32>
    %cst_199 = arith.constant 0.000000e+00 : f32
    %284 = vector.broadcast %cst_199 : f32 to vector<8x512xf32>
    %285 = arith.select %23, %283, %284 : vector<8x512xi1>, vector<8x512xf32>
    %c2_200 = arith.constant 2 : index
    %c6_201 = arith.constant 6 : index
    %c0_202 = arith.constant 0 : index
    %c0_203 = arith.constant 0 : index
    %286 = vector.load %arg2[%c2_200, %c6_201, %c0_202, %c0_203] : memref<3x9x8x8xf32, #tpu.memory_space<vmem>>, vector<1x1x8x8xf32>
    %287 = vector.shape_cast %286 : vector<1x1x8x8xf32> to vector<8x8xf32>
    %cst_204 = arith.constant dense<0.000000e+00> : vector<8x512xf32>
    %288 = tpu.matmul %287, %285, %cst_204 {dimension_numbers = #tpu.dot_dimension_numbers<[1], [0], [0], [1], [0, 0, 1, 1], [], []>} : vector<8x8xf32>, vector<8x512xf32>, vector<8x512xf32> -> vector<8x512xf32>
    %289 = arith.addf %282, %288 : vector<8x512xf32>
    %c496_i32_205 = arith.constant 496 : i32
    %290 = tpu.dynamic_rotate %244 by %c496_i32_205 dim 1 : vector<8x512xf32>, i32 -> vector<8x512xf32>
    %cst_206 = arith.constant 0.000000e+00 : f32
    %291 = vector.broadcast %cst_206 : f32 to vector<8x512xf32>
    %292 = arith.select %10, %290, %291 : vector<8x512xi1>, vector<8x512xf32>
    %c2_207 = arith.constant 2 : index
    %c7_208 = arith.constant 7 : index
    %c0_209 = arith.constant 0 : index
    %c0_210 = arith.constant 0 : index
    %293 = vector.load %arg2[%c2_207, %c7_208, %c0_209, %c0_210] : memref<3x9x8x8xf32, #tpu.memory_space<vmem>>, vector<1x1x8x8xf32>
    %294 = vector.shape_cast %293 : vector<1x1x8x8xf32> to vector<8x8xf32>
    %cst_211 = arith.constant dense<0.000000e+00> : vector<8x512xf32>
    %295 = tpu.matmul %294, %292, %cst_211 {dimension_numbers = #tpu.dot_dimension_numbers<[1], [0], [0], [1], [0, 0, 1, 1], [], []>} : vector<8x8xf32>, vector<8x512xf32>, vector<8x512xf32> -> vector<8x512xf32>
    %296 = arith.addf %289, %295 : vector<8x512xf32>
    %c495_i32_212 = arith.constant 495 : i32
    %297 = tpu.dynamic_rotate %244 by %c495_i32_212 dim 1 : vector<8x512xf32>, i32 -> vector<8x512xf32>
    %cst_213 = arith.constant 0.000000e+00 : f32
    %298 = vector.broadcast %cst_213 : f32 to vector<8x512xf32>
    %299 = arith.select %24, %297, %298 : vector<8x512xi1>, vector<8x512xf32>
    %c2_214 = arith.constant 2 : index
    %c8_215 = arith.constant 8 : index
    %c0_216 = arith.constant 0 : index
    %c0_217 = arith.constant 0 : index
    %300 = vector.load %arg2[%c2_214, %c8_215, %c0_216, %c0_217] : memref<3x9x8x8xf32, #tpu.memory_space<vmem>>, vector<1x1x8x8xf32>
    %301 = vector.shape_cast %300 : vector<1x1x8x8xf32> to vector<8x8xf32>
    %cst_218 = arith.constant dense<0.000000e+00> : vector<8x512xf32>
    %302 = tpu.matmul %301, %299, %cst_218 {dimension_numbers = #tpu.dot_dimension_numbers<[1], [0], [0], [1], [0, 0, 1, 1], [], []>} : vector<8x8xf32>, vector<8x512xf32>, vector<8x512xf32> -> vector<8x512xf32>
    %303 = arith.addf %296, %302 : vector<8x512xf32>
    %304 = arith.addf %212, %303 : vector<8x512xf32>
    %c0_219 = arith.constant 0 : index
    %c0_220 = arith.constant 0 : index
    %c0_221 = arith.constant 0 : index
    %305 = vector.load %arg3[%c0_219, %c0_220, %c0_221] : memref<1x8x512xf32, #tpu.memory_space<vmem>>, vector<1x8x512xf32>
    %306 = vector.shape_cast %305 : vector<1x8x512xf32> to vector<8x512xf32>
    %307 = vector.shape_cast %304 : vector<8x512xf32> to vector<1x8x512xf32>
    tpu.vector_store %arg3[%c0_219, %c0_220, %c0_221], %307 {strides = array<i32>} : memref<1x8x512xf32, #tpu.memory_space<vmem>>, vector<1x8x512xf32>,
    return
  }
  func.func @transform_0(%arg0: i32) -> (i32, i32, i32) {
    %c0_i32 = arith.constant 0 : i32
    %c0_i32_0 = arith.constant 0 : i32
    %c0_i32_1 = arith.constant 0 : i32
    return %arg0, %c0_i32, %c0_i32_0 : i32, i32, i32
  }
  func.func @transform_1(%arg0: i32) -> (i32, i32, i32, i32) {
    %c0_i32 = arith.constant 0 : i32
    %c0_i32_0 = arith.constant 0 : i32
    %c0_i32_1 = arith.constant 0 : i32
    %c0_i32_2 = arith.constant 0 : i32
    %c0_i32_3 = arith.constant 0 : i32
    return %c0_i32, %c0_i32_0, %c0_i32_1, %c0_i32_2 : i32, i32, i32, i32
  }
  func.func @transform_2(%arg0: i32) -> (i32, i32, i32) {
    %c0_i32 = arith.constant 0 : i32
    %c0_i32_0 = arith.constant 0 : i32
    %c0_i32_1 = arith.constant 0 : i32
    return %arg0, %c0_i32, %c0_i32_0 : i32, i32, i32
  }
}

</mosaic_0001>

<llo_original>
// kernel: tpu_custom_call.1
$region0: #{tpu_custom_call.1}
  #allocation0 [shape = 'u32[]', space=smem, size = 0x4, offset = 0x4, fixed_abs, tag = 'smem constant byte address 0x4 - core index']
  #allocation1 [shape = 'u32[72,128]{1,0:T(1,128)}', space=vmem, size = 0x9000, scoped, tag = 'internal scratch']
  %s0 = inlined_call_operand.vmem [shape: f32[1,8,512], index: 0, kind: input, shape index: {}]
  %s1 = inlined_call_operand.vmem [shape: f32[3,9,8,8], index: 1, kind: input, shape index: {}]
  %s2 = inlined_call_operand.hbm [shape: f32[1,8,512], index: 2, kind: output, shape index: {}]
  %s3 = sld [smem:[#allocation0]]
  $region18: #{tpu_custom_call.1} parent=0
    _
  %s5 = ssub.s32 1, %s3
  %s6 = scalar_select 0, %s5, %s3
  $region1: #{tpu_custom_call.1} parent=0
    #allocation2 [shape = 'u8[16384]{0}', space=vmem, size = 0x4000, scoped, tag = 'output window, operand 0, single buffered']
    #allocation3 [shape = 's32[1]{0}', space=sflag, size = 0x4, scoped, tag = 'scoped memory for tpu_custom_call.1']
    %7 = vsyncpa [#allocation3], 0
    // Predicated region
    $region2: #{tpu_custom_call.1} parent=1 // pred_check
      _
    $region3: #{tpu_custom_call.1} parent=1 // pred_check_branch
      %9 = sbr.rel (0) target = $region5
    $region4: #{tpu_custom_call.1} parent=1 // pred_region
      _
    $region5: #{tpu_custom_call.1} parent=1 // pred_fallthru
      _
    // Predicated region
    $region6: #{tpu_custom_call.1} parent=1 // pred_check
      _
    $region7: #{tpu_custom_call.1} parent=1 // pred_check_branch
      %11 = sbr.rel (0) target = $region9
    $region8: #{tpu_custom_call.1} parent=1 // pred_region
      _
    $region9: #{tpu_custom_call.1} parent=1 // pred_fallthru
      _
    %v12 = vlaneseq
    %v13 = vand.u32 %v12, 127
    %v14 = vadd.s32 %v13, 128
    %v15 = vadd.s32 %v13, 256
    %v16 = vadd.s32 %v13, 384
    %v17 = vand.u32 %v13, 255
    %v18 = vand.u32 %v14, 255
    %v19 = vand.u32 %v15, 255
    %v20 = vand.u32 %v16, 255
    %v21 = vand.u32 %v17, 15
    %v22 = vand.u32 %v18, 15
    %v23 = vand.u32 %v19, 15
    %v24 = vand.u32 %v20, 15
    %vm25 = vcmp.lt.s32.totalorder %v21, 15
    %vm26 = vcmp.lt.s32.totalorder %v22, 15
    %vm27 = vcmp.lt.s32.totalorder %v23, 15
    %vm28 = vcmp.lt.s32.totalorder %v24, 15
    %vm29 = vcmp.ge.s32.totalorder %v21, 1
    %vm30 = vcmp.ge.s32.totalorder %v22, 1
    %vm31 = vcmp.ge.s32.totalorder %v23, 1
    %vm32 = vcmp.ge.s32.totalorder %v24, 1
    %vm33 = vcmp.lt.s32.totalorder %v17, 240
    %vm34 = vcmp.lt.s32.totalorder %v18, 240
    %vm35 = vcmp.lt.s32.totalorder %v19, 240
    %vm36 = vcmp.lt.s32.totalorder %v20, 240
    %vm37 = vcmp.ge.s32.totalorder %v17, 16
    %vm38 = vcmp.ge.s32.totalorder %v18, 16
    %vm39 = vcmp.ge.s32.totalorder %v19, 16
    %vm40 = vcmp.ge.s32.totalorder %v20, 16
    %vm41 = vcmp.lt.s32.totalorder %v21, 14
    %vm42 = vcmp.lt.s32.totalorder %v22, 14
    %vm43 = vcmp.lt.s32.totalorder %v23, 14
    %vm44 = vcmp.lt.s32.totalorder %v24, 14
    %vm45 = vcmp.ge.s32.totalorder %v21, 2
    %vm46 = vcmp.ge.s32.totalorder %v22, 2
    %vm47 = vcmp.ge.s32.totalorder %v23, 2
    %vm48 = vcmp.ge.s32.totalorder %v24, 2
    %vm49 = vcmp.lt.s32.totalorder %v17, 224
    %vm50 = vcmp.lt.s32.totalorder %v18, 224
    %vm51 = vcmp.lt.s32.totalorder %v19, 224
    %vm52 = vcmp.lt.s32.totalorder %v20, 224
    %vm53 = vcmp.ge.s32.totalorder %v17, 32
    %vm54 = vcmp.ge.s32.totalorder %v18, 32
    %vm55 = vcmp.ge.s32.totalorder %v19, 32
    %vm56 = vcmp.ge.s32.totalorder %v20, 32
    %vm57 = vmand %vm37, %vm29
    %vm58 = vmand %vm38, %vm30
    %vm59 = vmand %vm39, %vm31
    %vm60 = vmand %vm40, %vm32
    %vm61 = vmand %vm37, %vm25
    %vm62 = vmand %vm38, %vm26
    %vm63 = vmand %vm39, %vm27
    %vm64 = vmand %vm40, %vm28
    %vm65 = vmand %vm33, %vm29
    %vm66 = vmand %vm34, %vm30
    %vm67 = vmand %vm35, %vm31
    %vm68 = vmand %vm36, %vm32
    %vm69 = vmand %vm33, %vm25
    %vm70 = vmand %vm34, %vm26
    %vm71 = vmand %vm35, %vm27
    %vm72 = vmand %vm36, %vm28
    %v73 = vld [vmem:[%s0] sm:$0xff]
    %v74 = vld [vmem:[%s0 + $0x8] sm:$0xff]
    %v75 = vld [vmem:[%s0 + $0x10] sm:$0xff]
    %v76 = vld [vmem:[%s0 + $0x18] sm:$0xff]
    %v77 = vmax.f32 %v73, 0.0
    %v78 = vmax.f32 %v74, 0.0
    %v79 = vmax.f32 %v75, 0.0
    %v80 = vmax.f32 %v76, 0.0
    %81 = vrot.lane.b32.xlu0 %v77, 2
    %v82 = vpop.permute.xlu0 %81
    %83 = vrot.lane.b32.xlu0 %v78, 2
    %v84 = vpop.permute.xlu0 %83
    %85 = vrot.lane.b32.xlu0 %v79, 2
    %v86 = vpop.permute.xlu0 %85
    %87 = vrot.lane.b32.xlu0 %v80, 2
    %v88 = vpop.permute.xlu0 %87
    %vm89 = vcmp.lt.s32.totalorder %v13, 2
    %v90 = vsel %vm89, %v86, %v88
    %v91 = vsel %vm89, %v84, %v86
    %v92 = vsel %vm89, %v82, %v84
    %v93 = vsel %vm89, %v88, %v82
    %v94 = vsel %vm45, %v93, -inf
    %v95 = vsel %vm46, %v92, -inf
    %v96 = vsel %vm47, %v91, -inf
    %v97 = vsel %vm48, %v90, -inf
    %v98 = vmax.f32 %v77, %v94
    %v99 = vmax.f32 %v78, %v95
    %v100 = vmax.f32 %v79, %v96
    %v101 = vmax.f32 %v80, %v97
    %102 = vrot.lane.b32.xlu0 %v77, 1
    %v103 = vpop.permute.xlu0 %102
    %104 = vrot.lane.b32.xlu0 %v78, 1
    %v105 = vpop.permute.xlu0 %104
    %106 = vrot.lane.b32.xlu0 %v79, 1
    %v107 = vpop.permute.xlu0 %106
    %108 = vrot.lane.b32.xlu0 %v80, 1
    %v109 = vpop.permute.xlu0 %108
    %vm110 = vcmp.lt.s32.totalorder %v13, 1
    %v111 = vsel %vm110, %v107, %v109
    %v112 = vsel %vm110, %v105, %v107
    %v113 = vsel %vm110, %v103, %v105
    %v114 = vsel %vm110, %v109, %v103
    %v115 = vsel %vm29, %v114, -inf
    %v116 = vsel %vm30, %v113, -inf
    %v117 = vsel %vm31, %v112, -inf
    %v118 = vsel %vm32, %v111, -inf
    %v119 = vmax.f32 %v98, %v115
    %v120 = vmax.f32 %v99, %v116
    %v121 = vmax.f32 %v100, %v117
    %v122 = vmax.f32 %v101, %v118
    %123 = vrot.lane.b32.xlu0 %v77, 127
    %v124 = vpop.permute.xlu0 %123
    %125 = vrot.lane.b32.xlu0 %v78, 127
    %v126 = vpop.permute.xlu0 %125
    %127 = vrot.lane.b32.xlu0 %v79, 127
    %v128 = vpop.permute.xlu0 %127
    %129 = vrot.lane.b32.xlu0 %v80, 127
    %v130 = vpop.permute.xlu0 %129
    %vm131 = vcmp.lt.s32.totalorder %v13, 127
    %v132 = vsel %vm131, %v128, %v130
    %v133 = vsel %vm131, %v126, %v128
    %v134 = vsel %vm131, %v124, %v126
    %v135 = vsel %vm131, %v130, %v124
    %v136 = vsel %vm25, %v134, -inf
    %v137 = vsel %vm26, %v133, -inf
    %v138 = vsel %vm27, %v132, -inf
    %v139 = vsel %vm28, %v135, -inf
    %v140 = vmax.f32 %v119, %v136
    %v141 = vmax.f32 %v120, %v137
    %v142 = vmax.f32 %v121, %v138
    %v143 = vmax.f32 %v122, %v139
    %144 = vrot.lane.b32.xlu0 %v77, 126
    %v145 = vpop.permute.xlu0 %144
    %146 = vrot.lane.b32.xlu0 %v78, 126
    %v147 = vpop.permute.xlu0 %146
    %148 = vrot.lane.b32.xlu0 %v79, 126
    %v149 = vpop.permute.xlu0 %148
    %150 = vrot.lane.b32.xlu0 %v80, 126
    %v151 = vpop.permute.xlu0 %150
    %vm152 = vcmp.lt.s32.totalorder %v13, 126
    %v153 = vsel %vm152, %v149, %v151
    %v154 = vsel %vm152, %v147, %v149
    %v155 = vsel %vm152, %v145, %v147
    %v156 = vsel %vm152, %v151, %v145
    %v157 = vsel %vm41, %v155, -inf
    %v158 = vsel %vm42, %v154, -inf
    %v159 = vsel %vm43, %v153, -inf
    %v160 = vsel %vm44, %v156, -inf
    %v161 = vmax.f32 %v140, %v157
    %v162 = vmax.f32 %v141, %v158
    %v163 = vmax.f32 %v142, %v159
    %v164 = vmax.f32 %v143, %v160
    %165 = vrot.lane.b32.xlu0 %v161, 32
    %v166 = vpop.permute.xlu0 %165
    %167 = vrot.lane.b32.xlu0 %v162, 32
    %v168 = vpop.permute.xlu0 %167
    %169 = vrot.lane.b32.xlu0 %v163, 32
    %v170 = vpop.permute.xlu0 %169
    %171 = vrot.lane.b32.xlu0 %v164, 32
    %v172 = vpop.permute.xlu0 %171
    %vm173 = vcmp.lt.s32.totalorder %v13, 32
    %v174 = vsel %vm173, %v170, %v172
    %v175 = vsel %vm173, %v168, %v170
    %v176 = vsel %vm173, %v166, %v168
    %v177 = vsel %vm173, %v172, %v166
    %v178 = vsel %vm53, %v177, -inf
    %v179 = vsel %vm54, %v176, -inf
    %v180 = vsel %vm55, %v175, -inf
    %v181 = vsel %vm56, %v174, -inf
    %v182 = vmax.f32 %v161, %v178
    %v183 = vmax.f32 %v162, %v179
    %v184 = vmax.f32 %v163, %v180
    %v185 = vmax.f32 %v164, %v181
    %186 = vrot.lane.b32.xlu0 %v161, 16
    %v187 = vpop.permute.xlu0 %186
    %188 = vrot.lane.b32.xlu0 %v162, 16
    %v189 = vpop.permute.xlu0 %188
    %190 = vrot.lane.b32.xlu0 %v163, 16
    %v191 = vpop.permute.xlu0 %190
    %192 = vrot.lane.b32.xlu0 %v164, 16
    %v193 = vpop.permute.xlu0 %192
    %vm194 = vcmp.lt.s32.totalorder %v13, 16
    %v195 = vsel %vm194, %v191, %v193
    %v196 = vsel %vm194, %v189, %v191
    %v197 = vsel %vm194, %v187, %v189
    %v198 = vsel %vm194, %v193, %v187
    %v199 = vsel %vm37, %v198, -inf
    %v200 = vsel %vm38, %v197, -inf
    %v201 = vsel %vm39, %v196, -inf
    %v202 = vsel %vm40, %v195, -inf
    %v203 = vmax.f32 %v182, %v199
    %v204 = vmax.f32 %v183, %v200
    %v205 = vmax.f32 %v184, %v201
    %v206 = vmax.f32 %v185, %v202
    %207 = vrot.lane.b32.xlu0 %v161, 112
    %v208 = vpop.permute.xlu0 %207
    %209 = vrot.lane.b32.xlu0 %v162, 112
    %v210 = vpop.permute.xlu0 %209
    %211 = vrot.lane.b32.xlu0 %v163, 112
    %v212 = vpop.permute.xlu0 %211
    %213 = vrot.lane.b32.xlu0 %v164, 112
    %v214 = vpop.permute.xlu0 %213
    %vm215 = vcmp.lt.s32.totalorder %v13, 112
    %v216 = vsel %vm215, %v212, %v214
    %v217 = vsel %vm215, %v210, %v212
    %v218 = vsel %vm215, %v208, %v210
    %v219 = vsel %vm215, %v214, %v208
    %v220 = vsel %vm33, %v218, -inf
    %v221 = vsel %vm34, %v217, -inf
    %v222 = vsel %vm35, %v216, -inf
    %v223 = vsel %vm36, %v219, -inf
    %v224 = vmax.f32 %v203, %v220
    %v225 = vmax.f32 %v204, %v221
    %v226 = vmax.f32 %v205, %v222
    %v227 = vmax.f32 %v206, %v223
    %228 = vrot.lane.b32.xlu0 %v161, 96
    %v229 = vpop.permute.xlu0 %228
    %230 = vrot.lane.b32.xlu0 %v162, 96
    %v231 = vpop.permute.xlu0 %230
    %232 = vrot.lane.b32.xlu0 %v163, 96
    %v233 = vpop.permute.xlu0 %232
    %234 = vrot.lane.b32.xlu0 %v164, 96
    %v235 = vpop.permute.xlu0 %234
    %vm236 = vcmp.lt.s32.totalorder %v13, 96
    %v237 = vsel %vm236, %v233, %v235
    %v238 = vsel %vm236, %v231, %v233
    %v239 = vsel %vm236, %v229, %v231
    %v240 = vsel %vm236, %v235, %v229
    %v241 = vsel %vm49, %v239, -inf
    %v242 = vsel %vm50, %v238, -inf
    %v243 = vsel %vm51, %v237, -inf
    %v244 = vsel %vm52, %v240, -inf
    %v245 = vmax.f32 %v224, %v241
    %v246 = vmax.f32 %v225, %v242
    %v247 = vmax.f32 %v226, %v243
    %v248 = vmax.f32 %v227, %v244
    %249 = vrot.lane.b32.xlu0 %v245, 17
    %v250 = vpop.permute.xlu0 %249
    %251 = vrot.lane.b32.xlu0 %v246, 17
    %v252 = vpop.permute.xlu0 %251
    %253 = vrot.lane.b32.xlu0 %v247, 17
    %v254 = vpop.permute.xlu0 %253
    %255 = vrot.lane.b32.xlu0 %v248, 17
    %v256 = vpop.permute.xlu0 %255
    %vm257 = vcmp.lt.s32.totalorder %v13, 17
    %v258 = vsel %vm257, %v254, %v256
    %v259 = vsel %vm257, %v252, %v254
    %v260 = vsel %vm257, %v250, %v252
    %v261 = vsel %vm257, %v256, %v250
    %v262 = vsel %vm57, %v261, 0.0
    %v263 = vsel %vm58, %v260, 0.0
    %v264 = vsel %vm59, %v259, 0.0
    %v265 = vsel %vm60, %v258, 0.0
    %v266 = vld [vmem:[%s1] sm:$0xff]
    %267 = vrot.lane.b32.xlu0 %v245, 16
    %v268 = vpop.permute.xlu0 %267
    %269 = vrot.lane.b32.xlu0 %v246, 16
    %v270 = vpop.permute.xlu0 %269
    %271 = vrot.lane.b32.xlu0 %v247, 16
    %v272 = vpop.permute.xlu0 %271
    %273 = vrot.lane.b32.xlu0 %v248, 16
    %v274 = vpop.permute.xlu0 %273
    %v275 = vsel %vm194, %v272, %v274
    %v276 = vsel %vm194, %v270, %v272
    %v277 = vsel %vm194, %v268, %v270
    %v278 = vsel %vm194, %v274, %v268
    %v279 = vsel %vm37, %v278, 0.0
    %v280 = vsel %vm38, %v277, 0.0
    %v281 = vsel %vm39, %v276, 0.0
    %v282 = vsel %vm40, %v275, 0.0
    %s283 = scalar_lea.vmem %s1, 8
    %v284 = vld [vmem:[%s283] sm:$0xff]
    %vm285 = vcmask 64512
    %v287 = vsel %vm285, %v284, 0
    %289 = vmatpush.msra.mxu0 0.0
    %290 = vmatpush.msra.mxu0 0.0
    %291 = vmatpush.msra.mxu0 0.0
    %292 = vmatpush.msra.mxu0 0.0
    %293 = vmatpush.msra.mxu0 0.0
    %294 = vmatpush.msra.mxu0 0.0
    %295 = vmatpush.msra.mxu0 0.0
    %296 = vmatpush.msra.mxu0 0.0
    %297 = vmatpush.msra.mxu0 0.0
    %298 = vmatpush.msra.mxu0 0.0
    %299 = vmatpush.msra.mxu0 0.0
    %300 = vmatpush.msra.mxu0 0.0
    %301 = vmatpush.msra.mxu0 0.0
    %302 = vmatpush.msra.mxu0 0.0
    %303 = vmatpush.msra.mxu0 0.0
    %304 = vmatpush.msra.mxu0 %v279
    %305 = vmatmul.f32.gmra.mxu0 %v287
    %v306 = vpop.f32.mrf.mxu0
    %v307 = vadd.f32 0.0, %v306
    %308 = vdwg.mxu0
    %309 = vmatpush.msra.mxu0 0.0
    %310 = vmatpush.msra.mxu0 0.0
    %311 = vmatpush.msra.mxu0 0.0
    %312 = vmatpush.msra.mxu0 0.0
    %313 = vmatpush.msra.mxu0 0.0
    %314 = vmatpush.msra.mxu0 0.0
    %315 = vmatpush.msra.mxu0 0.0
    %316 = vmatpush.msra.mxu0 0.0
    %317 = vmatpush.msra.mxu0 0.0
    %318 = vmatpush.msra.mxu0 0.0
    %319 = vmatpush.msra.mxu0 0.0
    %320 = vmatpush.msra.mxu0 0.0
    %321 = vmatpush.msra.mxu0 0.0
    %322 = vmatpush.msra.mxu0 0.0
    %323 = vmatpush.msra.mxu0 0.0
    %324 = vmatpush.msra.mxu0 %v280
    %325 = vmatmul.f32.gmra.mxu0 %v287
    %v326 = vpop.f32.mrf.mxu0
    %v327 = vadd.f32 0.0, %v326
    %328 = vdwg.mxu0
    %329 = vmatpush.msra.mxu0 0.0
    %330 = vmatpush.msra.mxu0 0.0
    %331 = vmatpush.msra.mxu0 0.0
    %332 = vmatpush.msra.mxu0 0.0
    %333 = vmatpush.msra.mxu0 0.0
    %334 = vmatpush.msra.mxu0 0.0
    %335 = vmatpush.msra.mxu0 0.0
    %336 = vmatpush.msra.mxu0 0.0
    %337 = vmatpush.msra.mxu0 0.0
    %338 = vmatpush.msra.mxu0 0.0
    %339 = vmatpush.msra.mxu0 0.0
    %340 = vmatpush.msra.mxu0 0.0
    %341 = vmatpush.msra.mxu0 0.0
    %342 = vmatpush.msra.mxu0 0.0
    %343 = vmatpush.msra.mxu0 0.0
    %344 = vmatpush.msra.mxu0 %v281
    %345 = vmatmul.f32.gmra.mxu0 %v287
    %v346 = vpop.f32.mrf.mxu0
    %v347 = vadd.f32 0.0, %v346
    %348 = vdwg.mxu0
    %349 = vmatpush.msra.mxu0 0.0
    %350 = vmatpush.msra.mxu0 0.0
    %351 = vmatpush.msra.mxu0 0.0
    %352 = vmatpush.msra.mxu0 0.0
    %353 = vmatpush.msra.mxu0 0.0
    %354 = vmatpush.msra.mxu0 0.0
    %355 = vmatpush.msra.mxu0 0.0
    %356 = vmatpush.msra.mxu0 0.0
    %357 = vmatpush.msra.mxu0 0.0
    %358 = vmatpush.msra.mxu0 0.0
    %359 = vmatpush.msra.mxu0 0.0
    %360 = vmatpush.msra.mxu0 0.0
    %361 = vmatpush.msra.mxu0 0.0
    %362 = vmatpush.msra.mxu0 0.0
    %363 = vmatpush.msra.mxu0 0.0
    %364 = vmatpush.msra.mxu0 %v282
    %365 = vmatmul.f32.gmra.mxu0 %v287
    %v366 = vpop.f32.mrf.mxu0
    %v367 = vadd.f32 0.0, %v366
    %368 = vdwg.mxu0
    %v370 = vsel %vm285, %v266, 0
    %372 = vmatpush.msra.mxu0 0.0
    %373 = vmatpush.msra.mxu0 0.0
    %374 = vmatpush.msra.mxu0 0.0
    %375 = vmatpush.msra.mxu0 0.0
    %376 = vmatpush.msra.mxu0 0.0
    %377 = vmatpush.msra.mxu0 0.0
    %378 = vmatpush.msra.mxu0 0.0
    %379 = vmatpush.msra.mxu0 0.0
    %380 = vmatpush.msra.mxu0 0.0
    %381 = vmatpush.msra.mxu0 0.0
    %382 = vmatpush.msra.mxu0 0.0
    %383 = vmatpush.msra.mxu0 0.0
    %384 = vmatpush.msra.mxu0 0.0
    %385 = vmatpush.msra.mxu0 0.0
    %386 = vmatpush.msra.mxu0 0.0
    %387 = vmatpush.msra.mxu0 %v262
    %388 = vmatmul.f32.gmra.mxu0 %v370
    %v389 = vpop.f32.mrf.mxu0
    %v390 = vadd.f32 %v307, %v389
    %391 = vdwg.mxu0
    %392 = vmatpush.msra.mxu0 0.0
    %393 = vmatpush.msra.mxu0 0.0
    %394 = vmatpush.msra.mxu0 0.0
    %395 = vmatpush.msra.mxu0 0.0
    %396 = vmatpush.msra.mxu0 0.0
    %397 = vmatpush.msra.mxu0 0.0
    %398 = vmatpush.msra.mxu0 0.0
    %399 = vmatpush.msra.mxu0 0.0
    %400 = vmatpush.msra.mxu0 0.0
    %401 = vmatpush.msra.mxu0 0.0
    %402 = vmatpush.msra.mxu0 0.0
    %403 = vmatpush.msra.mxu0 0.0
    %404 = vmatpush.msra.mxu0 0.0
    %405 = vmatpush.msra.mxu0 0.0
    %406 = vmatpush.msra.mxu0 0.0
    %407 = vmatpush.msra.mxu0 %v263
    %408 = vmatmul.f32.gmra.mxu0 %v370
    %v409 = vpop.f32.mrf.mxu0
    %v410 = vadd.f32 %v327, %v409
    %411 = vdwg.mxu0
    %412 = vmatpush.msra.mxu0 0.0
    %413 = vmatpush.msra.mxu0 0.0
    %414 = vmatpush.msra.mxu0 0.0
    %415 = vmatpush.msra.mxu0 0.0
    %416 = vmatpush.msra.mxu0 0.0
    %417 = vmatpush.msra.mxu0 0.0
    %418 = vmatpush.msra.mxu0 0.0
    %419 = vmatpush.msra.mxu0 0.0
    %420 = vmatpush.msra.mxu0 0.0
    %421 = vmatpush.msra.mxu0 0.0
    %422 = vmatpush.msra.mxu0 0.0
    %423 = vmatpush.msra.mxu0 0.0
    %424 = vmatpush.msra.mxu0 0.0
    %425 = vmatpush.msra.mxu0 0.0
    %426 = vmatpush.msra.mxu0 0.0
    %427 = vmatpush.msra.mxu0 %v264
    %428 = vmatmul.f32.gmra.mxu0 %v370
    %v429 = vpop.f32.mrf.mxu0
    %v430 = vadd.f32 %v347, %v429
    %431 = vdwg.mxu0
    %432 = vmatpush.msra.mxu0 0.0
    %433 = vmatpush.msra.mxu0 0.0
    %434 = vmatpush.msra.mxu0 0.0
    %435 = vmatpush.msra.mxu0 0.0
    %436 = vmatpush.msra.mxu0 0.0
    %437 = vmatpush.msra.mxu0 0.0
    %438 = vmatpush.msra.mxu0 0.0
    %439 = vmatpush.msra.mxu0 0.0
    %440 = vmatpush.msra.mxu0 0.0
    %441 = vmatpush.msra.mxu0 0.0
    %442 = vmatpush.msra.mxu0 0.0
    %443 = vmatpush.msra.mxu0 0.0
    %444 = vmatpush.msra.mxu0 0.0
    %445 = vmatpush.msra.mxu0 0.0
    %446 = vmatpush.msra.mxu0 0.0
    %447 = vmatpush.msra.mxu0 %v265
    %448 = vmatmul.f32.gmra.mxu0 %v370
    %v449 = vpop.f32.mrf.mxu0
    %v450 = vadd.f32 %v367, %v449
    %451 = vdwg.mxu0
    %452 = vrot.lane.b32.xlu0 %v245, 15
    %v453 = vpop.permute.xlu0 %452
    %454 = vrot.lane.b32.xlu0 %v246, 15
    %v455 = vpop.permute.xlu0 %454
    %456 = vrot.lane.b32.xlu0 %v247, 15
    %v457 = vpop.permute.xlu0 %456
    %458 = vrot.lane.b32.xlu0 %v248, 15
    %v459 = vpop.permute.xlu0 %458
    %vm460 = vcmp.lt.s32.totalorder %v13, 15
    %v461 = vsel %vm460, %v457, %v459
    %v462 = vsel %vm460, %v455, %v457
    %v463 = vsel %vm460, %v453, %v455
    %v464 = vsel %vm460, %v459, %v453
    %v465 = vsel %vm61, %v464, 0.0
    %v466 = vsel %vm62, %v463, 0.0
    %v467 = vsel %vm63, %v462, 0.0
    %v468 = vsel %vm64, %v461, 0.0
    %s469 = scalar_lea.vmem %s1, 16
    %v470 = vld [vmem:[%s469] sm:$0xff]
    %v472 = vsel %vm285, %v470, 0
    %474 = vmatpush.msra.mxu0 0.0
    %475 = vmatpush.msra.mxu0 0.0
    %476 = vmatpush.msra.mxu0 0.0
    %477 = vmatpush.msra.mxu0 0.0
    %478 = vmatpush.msra.mxu0 0.0
    %479 = vmatpush.msra.mxu0 0.0
    %480 = vmatpush.msra.mxu0 0.0
    %481 = vmatpush.msra.mxu0 0.0
    %482 = vmatpush.msra.mxu0 0.0
    %483 = vmatpush.msra.mxu0 0.0
    %484 = vmatpush.msra.mxu0 0.0
    %485 = vmatpush.msra.mxu0 0.0
    %486 = vmatpush.msra.mxu0 0.0
    %487 = vmatpush.msra.mxu0 0.0
    %488 = vmatpush.msra.mxu0 0.0
    %489 = vmatpush.msra.mxu0 %v465
    %490 = vmatmul.f32.gmra.mxu0 %v472
    %v491 = vpop.f32.mrf.mxu0
    %v492 = vadd.f32 0.0, %v491
    %493 = vdwg.mxu0
    %494 = vmatpush.msra.mxu0 0.0
    %495 = vmatpush.msra.mxu0 0.0
    %496 = vmatpush.msra.mxu0 0.0
    %497 = vmatpush.msra.mxu0 0.0
    %498 = vmatpush.msra.mxu0 0.0
    %499 = vmatpush.msra.mxu0 0.0
    %500 = vmatpush.msra.mxu0 0.0
    %501 = vmatpush.msra.mxu0 0.0
    %502 = vmatpush.msra.mxu0 0.0
    %503 = vmatpush.msra.mxu0 0.0
    %504 = vmatpush.msra.mxu0 0.0
    %505 = vmatpush.msra.mxu0 0.0
    %506 = vmatpush.msra.mxu0 0.0
    %507 = vmatpush.msra.mxu0 0.0
    %508 = vmatpush.msra.mxu0 0.0
    %509 = vmatpush.msra.mxu0 %v466
    %510 = vmatmul.f32.gmra.mxu0 %v472
    %v511 = vpop.f32.mrf.mxu0
    %v512 = vadd.f32 0.0, %v511
    %513 = vdwg.mxu0
    %514 = vmatpush.msra.mxu0 0.0
    %515 = vmatpush.msra.mxu0 0.0
    %516 = vmatpush.msra.mxu0 0.0
    %517 = vmatpush.msra.mxu0 0.0
    %518 = vmatpush.msra.mxu0 0.0
    %519 = vmatpush.msra.mxu0 0.0
    %520 = vmatpush.msra.mxu0 0.0
    %521 = vmatpush.msra.mxu0 0.0
    %522 = vmatpush.msra.mxu0 0.0
    %523 = vmatpush.msra.mxu0 0.0
    %524 = vmatpush.msra.mxu0 0.0
    %525 = vmatpush.msra.mxu0 0.0
    %526 = vmatpush.msra.mxu0 0.0
    %527 = vmatpush.msra.mxu0 0.0
    %528 = vmatpush.msra.mxu0 0.0
    %529 = vmatpush.msra.mxu0 %v467
    %530 = vmatmul.f32.gmra.mxu0 %v472
    %v531 = vpop.f32.mrf.mxu0
    %v532 = vadd.f32 0.0, %v531
    %533 = vdwg.mxu0
    %534 = vmatpush.msra.mxu0 0.0
    %535 = vmatpush.msra.mxu0 0.0
    %536 = vmatpush.msra.mxu0 0.0
    %537 = vmatpush.msra.mxu0 0.0
    %538 = vmatpush.msra.mxu0 0.0
    %539 = vmatpush.msra.mxu0 0.0
    %540 = vmatpush.msra.mxu0 0.0
    %541 = vmatpush.msra.mxu0 0.0
    %542 = vmatpush.msra.mxu0 0.0
    %543 = vmatpush.msra.mxu0 0.0
    %544 = vmatpush.msra.mxu0 0.0
    %545 = vmatpush.msra.mxu0 0.0
    %546 = vmatpush.msra.mxu0 0.0
    %547 = vmatpush.msra.mxu0 0.0
    %548 = vmatpush.msra.mxu0 0.0
    %549 = vmatpush.msra.mxu0 %v468
    %550 = vmatmul.f32.gmra.mxu0 %v472
    %v551 = vpop.f32.mrf.mxu0
    %v552 = vadd.f32 0.0, %v551
    %553 = vdwg.mxu0
    %v554 = vadd.f32 %v390, %v492
    %v555 = vadd.f32 %v410, %v512
    %v556 = vadd.f32 %v430, %v532
    %v557 = vadd.f32 %v450, %v552
    %558 = vrot.lane.b32.xlu0 %v245, 1
    %v559 = vpop.permute.xlu0 %558
    %560 = vrot.lane.b32.xlu0 %v246, 1
    %v561 = vpop.permute.xlu0 %560
    %562 = vrot.lane.b32.xlu0 %v247, 1
    %v563 = vpop.permute.xlu0 %562
    %564 = vrot.lane.b32.xlu0 %v248, 1
    %v565 = vpop.permute.xlu0 %564
    %v566 = vsel %vm110, %v563, %v565
    %v567 = vsel %vm110, %v561, %v563
    %v568 = vsel %vm110, %v559, %v561
    %v569 = vsel %vm110, %v565, %v559
    %v570 = vsel %vm29, %v569, 0.0
    %v571 = vsel %vm30, %v568, 0.0
    %v572 = vsel %vm31, %v567, 0.0
    %v573 = vsel %vm32, %v566, 0.0
    %s574 = scalar_lea.vmem %s1, 24
    %v575 = vld [vmem:[%s574] sm:$0xff]
    %v577 = vsel %vm285, %v575, 0
    %579 = vmatpush.msra.mxu0 0.0
    %580 = vmatpush.msra.mxu0 0.0
    %581 = vmatpush.msra.mxu0 0.0
    %582 = vmatpush.msra.mxu0 0.0
    %583 = vmatpush.msra.mxu0 0.0
    %584 = vmatpush.msra.mxu0 0.0
    %585 = vmatpush.msra.mxu0 0.0
    %586 = vmatpush.msra.mxu0 0.0
    %587 = vmatpush.msra.mxu0 0.0
    %588 = vmatpush.msra.mxu0 0.0
    %589 = vmatpush.msra.mxu0 0.0
    %590 = vmatpush.msra.mxu0 0.0
    %591 = vmatpush.msra.mxu0 0.0
    %592 = vmatpush.msra.mxu0 0.0
    %593 = vmatpush.msra.mxu0 0.0
    %594 = vmatpush.msra.mxu0 %v570
    %595 = vmatmul.f32.gmra.mxu0 %v577
    %v596 = vpop.f32.mrf.mxu0
    %v597 = vadd.f32 0.0, %v596
    %598 = vdwg.mxu0
    %599 = vmatpush.msra.mxu0 0.0
    %600 = vmatpush.msra.mxu0 0.0
    %601 = vmatpush.msra.mxu0 0.0
    %602 = vmatpush.msra.mxu0 0.0
    %603 = vmatpush.msra.mxu0 0.0
    %604 = vmatpush.msra.mxu0 0.0
    %605 = vmatpush.msra.mxu0 0.0
    %606 = vmatpush.msra.mxu0 0.0
    %607 = vmatpush.msra.mxu0 0.0
    %608 = vmatpush.msra.mxu0 0.0
    %609 = vmatpush.msra.mxu0 0.0
    %610 = vmatpush.msra.mxu0 0.0
    %611 = vmatpush.msra.mxu0 0.0
    %612 = vmatpush.msra.mxu0 0.0
    %613 = vmatpush.msra.mxu0 0.0
    %614 = vmatpush.msra.mxu0 %v571
    %615 = vmatmul.f32.gmra.mxu0 %v577
    %v616 = vpop.f32.mrf.mxu0
    %v617 = vadd.f32 0.0, %v616
    %618 = vdwg.mxu0
    %619 = vmatpush.msra.mxu0 0.0
    %620 = vmatpush.msra.mxu0 0.0
    %621 = vmatpush.msra.mxu0 0.0
    %622 = vmatpush.msra.mxu0 0.0
    %623 = vmatpush.msra.mxu0 0.0
    %624 = vmatpush.msra.mxu0 0.0
    %625 = vmatpush.msra.mxu0 0.0
    %626 = vmatpush.msra.mxu0 0.0
    %627 = vmatpush.msra.mxu0 0.0
    %628 = vmatpush.msra.mxu0 0.0
    %629 = vmatpush.msra.mxu0 0.0
    %630 = vmatpush.msra.mxu0 0.0
    %631 = vmatpush.msra.mxu0 0.0
    %632 = vmatpush.msra.mxu0 0.0
    %633 = vmatpush.msra.mxu0 0.0
    %634 = vmatpush.msra.mxu0 %v572
    %635 = vmatmul.f32.gmra.mxu0 %v577
    %v636 = vpop.f32.mrf.mxu0
    %v637 = vadd.f32 0.0, %v636
    %638 = vdwg.mxu0
    %639 = vmatpush.msra.mxu0 0.0
    %640 = vmatpush.msra.mxu0 0.0
    %641 = vmatpush.msra.mxu0 0.0
    %642 = vmatpush.msra.mxu0 0.0
    %643 = vmatpush.msra.mxu0 0.0
    %644 = vmatpush.msra.mxu0 0.0
    %645 = vmatpush.msra.mxu0 0.0
    %646 = vmatpush.msra.mxu0 0.0
    %647 = vmatpush.msra.mxu0 0.0
    %648 = vmatpush.msra.mxu0 0.0
    %649 = vmatpush.msra.mxu0 0.0
    %650 = vmatpush.msra.mxu0 0.0
    %651 = vmatpush.msra.mxu0 0.0
    %652 = vmatpush.msra.mxu0 0.0
    %653 = vmatpush.msra.mxu0 0.0
    %654 = vmatpush.msra.mxu0 %v573
    %655 = vmatmul.f32.gmra.mxu0 %v577
    %v656 = vpop.f32.mrf.mxu0
    %v657 = vadd.f32 0.0, %v656
    %658 = vdwg.mxu0
    %v659 = vadd.f32 %v554, %v597
    %v660 = vadd.f32 %v555, %v617
    %v661 = vadd.f32 %v556, %v637
    %v662 = vadd.f32 %v557, %v657
    %s663 = scalar_lea.vmem %s1, 32
    %v664 = vld [vmem:[%s663] sm:$0xff]
    %v666 = vsel %vm285, %v664, 0
    %668 = vmatpush.msra.mxu0 0.0
    %669 = vmatpush.msra.mxu0 0.0
    %670 = vmatpush.msra.mxu0 0.0
    %671 = vmatpush.msra.mxu0 0.0
    %672 = vmatpush.msra.mxu0 0.0
    %673 = vmatpush.msra.mxu0 0.0
    %674 = vmatpush.msra.mxu0 0.0
    %675 = vmatpush.msra.mxu0 0.0
    %676 = vmatpush.msra.mxu0 0.0
    %677 = vmatpush.msra.mxu0 0.0
    %678 = vmatpush.msra.mxu0 0.0
    %679 = vmatpush.msra.mxu0 0.0
    %680 = vmatpush.msra.mxu0 0.0
    %681 = vmatpush.msra.mxu0 0.0
    %682 = vmatpush.msra.mxu0 0.0
    %683 = vmatpush.msra.mxu0 %v245
    %684 = vmatmul.f32.gmra.mxu0 %v666
    %v685 = vpop.f32.mrf.mxu0
    %v686 = vadd.f32 0.0, %v685
    %687 = vdwg.mxu0
    %688 = vmatpush.msra.mxu0 0.0
    %689 = vmatpush.msra.mxu0 0.0
    %690 = vmatpush.msra.mxu0 0.0
    %691 = vmatpush.msra.mxu0 0.0
    %692 = vmatpush.msra.mxu0 0.0
    %693 = vmatpush.msra.mxu0 0.0
    %694 = vmatpush.msra.mxu0 0.0
    %695 = vmatpush.msra.mxu0 0.0
    %696 = vmatpush.msra.mxu0 0.0
    %697 = vmatpush.msra.mxu0 0.0
    %698 = vmatpush.msra.mxu0 0.0
    %699 = vmatpush.msra.mxu0 0.0
    %700 = vmatpush.msra.mxu0 0.0
    %701 = vmatpush.msra.mxu0 0.0
    %702 = vmatpush.msra.mxu0 0.0
    %703 = vmatpush.msra.mxu0 %v246
    %704 = vmatmul.f32.gmra.mxu0 %v666
    %v705 = vpop.f32.mrf.mxu0
    %v706 = vadd.f32 0.0, %v705
    %707 = vdwg.mxu0
    %708 = vmatpush.msra.mxu0 0.0
    %709 = vmatpush.msra.mxu0 0.0
    %710 = vmatpush.msra.mxu0 0.0
    %711 = vmatpush.msra.mxu0 0.0
    %712 = vmatpush.msra.mxu0 0.0
    %713 = vmatpush.msra.mxu0 0.0
    %714 = vmatpush.msra.mxu0 0.0
    %715 = vmatpush.msra.mxu0 0.0
    %716 = vmatpush.msra.mxu0 0.0
    %717 = vmatpush.msra.mxu0 0.0
    %718 = vmatpush.msra.mxu0 0.0
    %719 = vmatpush.msra.mxu0 0.0
    %720 = vmatpush.msra.mxu0 0.0
    %721 = vmatpush.msra.mxu0 0.0
    %722 = vmatpush.msra.mxu0 0.0
    %723 = vmatpush.msra.mxu0 %v247
    %724 = vmatmul.f32.gmra.mxu0 %v666
    %v725 = vpop.f32.mrf.mxu0
    %v726 = vadd.f32 0.0, %v725
    %727 = vdwg.mxu0
    %728 = vmatpush.msra.mxu0 0.0
    %729 = vmatpush.msra.mxu0 0.0
    %730 = vmatpush.msra.mxu0 0.0
    %731 = vmatpush.msra.mxu0 0.0
    %732 = vmatpush.msra.mxu0 0.0
    %733 = vmatpush.msra.mxu0 0.0
    %734 = vmatpush.msra.mxu0 0.0
    %735 = vmatpush.msra.mxu0 0.0
    %736 = vmatpush.msra.mxu0 0.0
    %737 = vmatpush.msra.mxu0 0.0
    %738 = vmatpush.msra.mxu0 0.0
    %739 = vmatpush.msra.mxu0 0.0
    %740 = vmatpush.msra.mxu0 0.0
    %741 = vmatpush.msra.mxu0 0.0
    %742 = vmatpush.msra.mxu0 0.0
    %743 = vmatpush.msra.mxu0 %v248
    %744 = vmatmul.f32.gmra.mxu0 %v666
    %v745 = vpop.f32.mrf.mxu0
    %v746 = vadd.f32 0.0, %v745
    %747 = vdwg.mxu0
    %v748 = vadd.f32 %v659, %v686
    %v749 = vadd.f32 %v660, %v706
    %v750 = vadd.f32 %v661, %v726
    %v751 = vadd.f32 %v662, %v746
    %752 = vrot.lane.b32.xlu0 %v245, 127
    %v753 = vpop.permute.xlu0 %752
    %754 = vrot.lane.b32.xlu0 %v246, 127
    %v755 = vpop.permute.xlu0 %754
    %756 = vrot.lane.b32.xlu0 %v247, 127
    %v757 = vpop.permute.xlu0 %756
    %758 = vrot.lane.b32.xlu0 %v248, 127
    %v759 = vpop.permute.xlu0 %758
    %v760 = vsel %vm131, %v757, %v759
    %v761 = vsel %vm131, %v755, %v757
    %v762 = vsel %vm131, %v753, %v755
    %v763 = vsel %vm131, %v759, %v753
    %v764 = vsel %vm25, %v762, 0.0
    %v765 = vsel %vm26, %v761, 0.0
    %v766 = vsel %vm27, %v760, 0.0
    %v767 = vsel %vm28, %v763, 0.0
    %s768 = scalar_lea.vmem %s1, 40
    %v769 = vld [vmem:[%s768] sm:$0xff]
    %v771 = vsel %vm285, %v769, 0
    %773 = vmatpush.msra.mxu0 0.0
    %774 = vmatpush.msra.mxu0 0.0
    %775 = vmatpush.msra.mxu0 0.0
    %776 = vmatpush.msra.mxu0 0.0
    %777 = vmatpush.msra.mxu0 0.0
    %778 = vmatpush.msra.mxu0 0.0
    %779 = vmatpush.msra.mxu0 0.0
    %780 = vmatpush.msra.mxu0 0.0
    %781 = vmatpush.msra.mxu0 0.0
    %782 = vmatpush.msra.mxu0 0.0
    %783 = vmatpush.msra.mxu0 0.0
    %784 = vmatpush.msra.mxu0 0.0
    %785 = vmatpush.msra.mxu0 0.0
    %786 = vmatpush.msra.mxu0 0.0
    %787 = vmatpush.msra.mxu0 0.0
    %788 = vmatpush.msra.mxu0 %v764
    %789 = vmatmul.f32.gmra.mxu0 %v771
    %v790 = vpop.f32.mrf.mxu0
    %v791 = vadd.f32 0.0, %v790
    %792 = vdwg.mxu0
    %793 = vmatpush.msra.mxu0 0.0
    %794 = vmatpush.msra.mxu0 0.0
    %795 = vmatpush.msra.mxu0 0.0
    %796 = vmatpush.msra.mxu0 0.0
    %797 = vmatpush.msra.mxu0 0.0
    %798 = vmatpush.msra.mxu0 0.0
    %799 = vmatpush.msra.mxu0 0.0
    %800 = vmatpush.msra.mxu0 0.0
    %801 = vmatpush.msra.mxu0 0.0
    %802 = vmatpush.msra.mxu0 0.0
    %803 = vmatpush.msra.mxu0 0.0
    %804 = vmatpush.msra.mxu0 0.0
    %805 = vmatpush.msra.mxu0 0.0
    %806 = vmatpush.msra.mxu0 0.0
    %807 = vmatpush.msra.mxu0 0.0
    %808 = vmatpush.msra.mxu0 %v765
    %809 = vmatmul.f32.gmra.mxu0 %v771
    %v810 = vpop.f32.mrf.mxu0
    %v811 = vadd.f32 0.0, %v810
    %812 = vdwg.mxu0
    %813 = vmatpush.msra.mxu0 0.0
    %814 = vmatpush.msra.mxu0 0.0
    %815 = vmatpush.msra.mxu0 0.0
    %816 = vmatpush.msra.mxu0 0.0
    %817 = vmatpush.msra.mxu0 0.0
    %818 = vmatpush.msra.mxu0 0.0
    %819 = vmatpush.msra.mxu0 0.0
    %820 = vmatpush.msra.mxu0 0.0
    %821 = vmatpush.msra.mxu0 0.0
    %822 = vmatpush.msra.mxu0 0.0
    %823 = vmatpush.msra.mxu0 0.0
    %824 = vmatpush.msra.mxu0 0.0
    %825 = vmatpush.msra.mxu0 0.0
    %826 = vmatpush.msra.mxu0 0.0
    %827 = vmatpush.msra.mxu0 0.0
    %828 = vmatpush.msra.mxu0 %v766
    %829 = vmatmul.f32.gmra.mxu0 %v771
    %v830 = vpop.f32.mrf.mxu0
    %v831 = vadd.f32 0.0, %v830
    %832 = vdwg.mxu0
    %833 = vmatpush.msra.mxu0 0.0
    %834 = vmatpush.msra.mxu0 0.0
    %835 = vmatpush.msra.mxu0 0.0
    %836 = vmatpush.msra.mxu0 0.0
    %837 = vmatpush.msra.mxu0 0.0
    %838 = vmatpush.msra.mxu0 0.0
    %839 = vmatpush.msra.mxu0 0.0
    %840 = vmatpush.msra.mxu0 0.0
    %841 = vmatpush.msra.mxu0 0.0
    %842 = vmatpush.msra.mxu0 0.0
    %843 = vmatpush.msra.mxu0 0.0
    %844 = vmatpush.msra.mxu0 0.0
    %845 = vmatpush.msra.mxu0 0.0
    %846 = vmatpush.msra.mxu0 0.0
    %847 = vmatpush.msra.mxu0 0.0
    %848 = vmatpush.msra.mxu0 %v767
    %849 = vmatmul.f32.gmra.mxu0 %v771
    %v850 = vpop.f32.mrf.mxu0
    %v851 = vadd.f32 0.0, %v850
    %852 = vdwg.mxu0
    %v853 = vadd.f32 %v748, %v791
    %v854 = vadd.f32 %v749, %v811
    %v855 = vadd.f32 %v750, %v831
    %v856 = vadd.f32 %v751, %v851
    %857 = vrot.lane.b32.xlu0 %v245, 113
    %v858 = vpop.permute.xlu0 %857
    %859 = vrot.lane.b32.xlu0 %v246, 113
    %v860 = vpop.permute.xlu0 %859
    %861 = vrot.lane.b32.xlu0 %v247, 113
    %v862 = vpop.permute.xlu0 %861
    %863 = vrot.lane.b32.xlu0 %v248, 113
    %v864 = vpop.permute.xlu0 %863
    %vm865 = vcmp.lt.s32.totalorder %v13, 113
    %v866 = vsel %vm865, %v862, %v864
    %v867 = vsel %vm865, %v860, %v862
    %v868 = vsel %vm865, %v858, %v860
    %v869 = vsel %vm865, %v864, %v858
    %v870 = vsel %vm65, %v868, 0.0
    %v871 = vsel %vm66, %v867, 0.0
    %v872 = vsel %vm67, %v866, 0.0
    %v873 = vsel %vm68, %v869, 0.0
    %s874 = scalar_lea.vmem %s1, 48
    %v875 = vld [vmem:[%s874] sm:$0xff]
    %v877 = vsel %vm285, %v875, 0
    %879 = vmatpush.msra.mxu0 0.0
    %880 = vmatpush.msra.mxu0 0.0
    %881 = vmatpush.msra.mxu0 0.0
    %882 = vmatpush.msra.mxu0 0.0
    %883 = vmatpush.msra.mxu0 0.0
    %884 = vmatpush.msra.mxu0 0.0
    %885 = vmatpush.msra.mxu0 0.0
    %886 = vmatpush.msra.mxu0 0.0
    %887 = vmatpush.msra.mxu0 0.0
    %888 = vmatpush.msra.mxu0 0.0
    %889 = vmatpush.msra.mxu0 0.0
    %890 = vmatpush.msra.mxu0 0.0
    %891 = vmatpush.msra.mxu0 0.0
    %892 = vmatpush.msra.mxu0 0.0
    %893 = vmatpush.msra.mxu0 0.0
    %894 = vmatpush.msra.mxu0 %v870
    %895 = vmatmul.f32.gmra.mxu0 %v877
    %v896 = vpop.f32.mrf.mxu0
    %v897 = vadd.f32 0.0, %v896
    %898 = vdwg.mxu0
    %899 = vmatpush.msra.mxu0 0.0
    %900 = vmatpush.msra.mxu0 0.0
    %901 = vmatpush.msra.mxu0 0.0
    %902 = vmatpush.msra.mxu0 0.0
    %903 = vmatpush.msra.mxu0 0.0
    %904 = vmatpush.msra.mxu0 0.0
    %905 = vmatpush.msra.mxu0 0.0
    %906 = vmatpush.msra.mxu0 0.0
    %907 = vmatpush.msra.mxu0 0.0
    %908 = vmatpush.msra.mxu0 0.0
    %909 = vmatpush.msra.mxu0 0.0
    %910 = vmatpush.msra.mxu0 0.0
    %911 = vmatpush.msra.mxu0 0.0
    %912 = vmatpush.msra.mxu0 0.0
    %913 = vmatpush.msra.mxu0 0.0
    %914 = vmatpush.msra.mxu0 %v871
    %915 = vmatmul.f32.gmra.mxu0 %v877
    %v916 = vpop.f32.mrf.mxu0
    %v917 = vadd.f32 0.0, %v916
    %918 = vdwg.mxu0
    %919 = vmatpush.msra.mxu0 0.0
    %920 = vmatpush.msra.mxu0 0.0
    %921 = vmatpush.msra.mxu0 0.0
    %922 = vmatpush.msra.mxu0 0.0
    %923 = vmatpush.msra.mxu0 0.0
    %924 = vmatpush.msra.mxu0 0.0
    %925 = vmatpush.msra.mxu0 0.0
    %926 = vmatpush.msra.mxu0 0.0
    %927 = vmatpush.msra.mxu0 0.0
    %928 = vmatpush.msra.mxu0 0.0
    %929 = vmatpush.msra.mxu0 0.0
    %930 = vmatpush.msra.mxu0 0.0
    %931 = vmatpush.msra.mxu0 0.0
    %932 = vmatpush.msra.mxu0 0.0
    %933 = vmatpush.msra.mxu0 0.0
    %934 = vmatpush.msra.mxu0 %v872
    %935 = vmatmul.f32.gmra.mxu0 %v877
    %v936 = vpop.f32.mrf.mxu0
    %v937 = vadd.f32 0.0, %v936
    %938 = vdwg.mxu0
    %939 = vmatpush.msra.mxu0 0.0
    %940 = vmatpush.msra.mxu0 0.0
    %941 = vmatpush.msra.mxu0 0.0
    %942 = vmatpush.msra.mxu0 0.0
    %943 = vmatpush.msra.mxu0 0.0
    %944 = vmatpush.msra.mxu0 0.0
    %945 = vmatpush.msra.mxu0 0.0
    %946 = vmatpush.msra.mxu0 0.0
    %947 = vmatpush.msra.mxu0 0.0
    %948 = vmatpush.msra.mxu0 0.0
    %949 = vmatpush.msra.mxu0 0.0
    %950 = vmatpush.msra.mxu0 0.0
    %951 = vmatpush.msra.mxu0 0.0
    %952 = vmatpush.msra.mxu0 0.0
    %953 = vmatpush.msra.mxu0 0.0
    %954 = vmatpush.msra.mxu0 %v873
    %955 = vmatmul.f32.gmra.mxu0 %v877
    %v956 = vpop.f32.mrf.mxu0
    %v957 = vadd.f32 0.0, %v956
    %958 = vdwg.mxu0
    %v959 = vadd.f32 %v853, %v897
    %v960 = vadd.f32 %v854, %v917
    %v961 = vadd.f32 %v855, %v937
    %v962 = vadd.f32 %v856, %v957
    %963 = vrot.lane.b32.xlu0 %v245, 112
    %v964 = vpop.permute.xlu0 %963
    %965 = vrot.lane.b32.xlu0 %v246, 112
    %v966 = vpop.permute.xlu0 %965
    %967 = vrot.lane.b32.xlu0 %v247, 112
    %v968 = vpop.permute.xlu0 %967
    %969 = vrot.lane.b32.xlu0 %v248, 112
    %v970 = vpop.permute.xlu0 %969
    %v971 = vsel %vm215, %v968, %v970
    %v972 = vsel %vm215, %v966, %v968
    %v973 = vsel %vm215, %v964, %v966
    %v974 = vsel %vm215, %v970, %v964
    %v975 = vsel %vm33, %v973, 0.0
    %v976 = vsel %vm34, %v972, 0.0
    %v977 = vsel %vm35, %v971, 0.0
    %v978 = vsel %vm36, %v974, 0.0
    %s979 = scalar_lea.vmem %s1, 56
    %v980 = vld [vmem:[%s979] sm:$0xff]
    %v982 = vsel %vm285, %v980, 0
    %984 = vmatpush.msra.mxu0 0.0
    %985 = vmatpush.msra.mxu0 0.0
    %986 = vmatpush.msra.mxu0 0.0
    %987 = vmatpush.msra.mxu0 0.0
    %988 = vmatpush.msra.mxu0 0.0
    %989 = vmatpush.msra.mxu0 0.0
    %990 = vmatpush.msra.mxu0 0.0
    %991 = vmatpush.msra.mxu0 0.0
    %992 = vmatpush.msra.mxu0 0.0
    %993 = vmatpush.msra.mxu0 0.0
    %994 = vmatpush.msra.mxu0 0.0
    %995 = vmatpush.msra.mxu0 0.0
    %996 = vmatpush.msra.mxu0 0.0
    %997 = vmatpush.msra.mxu0 0.0
    %998 = vmatpush.msra.mxu0 0.0
    %999 = vmatpush.msra.mxu0 %v975
    %1000 = vmatmul.f32.gmra.mxu0 %v982
    %v1001 = vpop.f32.mrf.mxu0
    %v1002 = vadd.f32 0.0, %v1001
    %1003 = vdwg.mxu0
    %1004 = vmatpush.msra.mxu0 0.0
    %1005 = vmatpush.msra.mxu0 0.0
    %1006 = vmatpush.msra.mxu0 0.0
    %1007 = vmatpush.msra.mxu0 0.0
    %1008 = vmatpush.msra.mxu0 0.0
    %1009 = vmatpush.msra.mxu0 0.0
    %1010 = vmatpush.msra.mxu0 0.0
    %1011 = vmatpush.msra.mxu0 0.0
    %1012 = vmatpush.msra.mxu0 0.0
    %1013 = vmatpush.msra.mxu0 0.0
    %1014 = vmatpush.msra.mxu0 0.0
    %1015 = vmatpush.msra.mxu0 0.0
    %1016 = vmatpush.msra.mxu0 0.0
    %1017 = vmatpush.msra.mxu0 0.0
    %1018 = vmatpush.msra.mxu0 0.0
    %1019 = vmatpush.msra.mxu0 %v976
    %1020 = vmatmul.f32.gmra.mxu0 %v982
    %v1021 = vpop.f32.mrf.mxu0
    %v1022 = vadd.f32 0.0, %v1021
    %1023 = vdwg.mxu0
    %1024 = vmatpush.msra.mxu0 0.0
    %1025 = vmatpush.msra.mxu0 0.0
    %1026 = vmatpush.msra.mxu0 0.0
    %1027 = vmatpush.msra.mxu0 0.0
    %1028 = vmatpush.msra.mxu0 0.0
    %1029 = vmatpush.msra.mxu0 0.0
    %1030 = vmatpush.msra.mxu0 0.0
    %1031 = vmatpush.msra.mxu0 0.0
    %1032 = vmatpush.msra.mxu0 0.0
    %1033 = vmatpush.msra.mxu0 0.0
    %1034 = vmatpush.msra.mxu0 0.0
    %1035 = vmatpush.msra.mxu0 0.0
    %1036 = vmatpush.msra.mxu0 0.0
    %1037 = vmatpush.msra.mxu0 0.0
    %1038 = vmatpush.msra.mxu0 0.0
    %1039 = vmatpush.msra.mxu0 %v977
    %1040 = vmatmul.f32.gmra.mxu0 %v982
    %v1041 = vpop.f32.mrf.mxu0
    %v1042 = vadd.f32 0.0, %v1041
    %1043 = vdwg.mxu0
    %1044 = vmatpush.msra.mxu0 0.0
    %1045 = vmatpush.msra.mxu0 0.0
    %1046 = vmatpush.msra.mxu0 0.0
    %1047 = vmatpush.msra.mxu0 0.0
    %1048 = vmatpush.msra.mxu0 0.0
    %1049 = vmatpush.msra.mxu0 0.0
    %1050 = vmatpush.msra.mxu0 0.0
    %1051 = vmatpush.msra.mxu0 0.0
    %1052 = vmatpush.msra.mxu0 0.0
    %1053 = vmatpush.msra.mxu0 0.0
    %1054 = vmatpush.msra.mxu0 0.0
    %1055 = vmatpush.msra.mxu0 0.0
    %1056 = vmatpush.msra.mxu0 0.0
    %1057 = vmatpush.msra.mxu0 0.0
    %1058 = vmatpush.msra.mxu0 0.0
    %1059 = vmatpush.msra.mxu0 %v978
    %1060 = vmatmul.f32.gmra.mxu0 %v982
    %v1061 = vpop.f32.mrf.mxu0
    %v1062 = vadd.f32 0.0, %v1061
    %1063 = vdwg.mxu0
    %v1064 = vadd.f32 %v959, %v1002
    %v1065 = vadd.f32 %v960, %v1022
    %v1066 = vadd.f32 %v961, %v1042
    %v1067 = vadd.f32 %v962, %v1062
    %1068 = vrot.lane.b32.xlu0 %v245, 111
    %v1069 = vpop.permute.xlu0 %1068
    %1070 = vrot.lane.b32.xlu0 %v246, 111
    %v1071 = vpop.permute.xlu0 %1070
    %1072 = vrot.lane.b32.xlu0 %v247, 111
    %v1073 = vpop.permute.xlu0 %1072
    %1074 = vrot.lane.b32.xlu0 %v248, 111
    %v1075 = vpop.permute.xlu0 %1074
    %vm1076 = vcmp.lt.s32.totalorder %v13, 111
    %v1077 = vsel %vm1076, %v1073, %v1075
    %v1078 = vsel %vm1076, %v1071, %v1073
    %v1079 = vsel %vm1076, %v1069, %v1071
    %v1080 = vsel %vm1076, %v1075, %v1069
    %v1081 = vsel %vm69, %v1079, 0.0
    %v1082 = vsel %vm70, %v1078, 0.0
    %v1083 = vsel %vm71, %v1077, 0.0
    %v1084 = vsel %vm72, %v1080, 0.0
    %s1085 = scalar_lea.vmem %s1, 64
    %v1086 = vld [vmem:[%s1085] sm:$0xff]
    %v1088 = vsel %vm285, %v1086, 0
    %1090 = vmatpush.msra.mxu0 0.0
    %1091 = vmatpush.msra.mxu0 0.0
    %1092 = vmatpush.msra.mxu0 0.0
    %1093 = vmatpush.msra.mxu0 0.0
    %1094 = vmatpush.msra.mxu0 0.0
    %1095 = vmatpush.msra.mxu0 0.0
    %1096 = vmatpush.msra.mxu0 0.0
    %1097 = vmatpush.msra.mxu0 0.0
    %1098 = vmatpush.msra.mxu0 0.0
    %1099 = vmatpush.msra.mxu0 0.0
    %1100 = vmatpush.msra.mxu0 0.0
    %1101 = vmatpush.msra.mxu0 0.0
    %1102 = vmatpush.msra.mxu0 0.0
    %1103 = vmatpush.msra.mxu0 0.0
    %1104 = vmatpush.msra.mxu0 0.0
    %1105 = vmatpush.msra.mxu0 %v1081
    %1106 = vmatmul.f32.gmra.mxu0 %v1088
    %v1107 = vpop.f32.mrf.mxu0
    %v1108 = vadd.f32 0.0, %v1107
    %1109 = vdwg.mxu0
    %1110 = vmatpush.msra.mxu0 0.0
    %1111 = vmatpush.msra.mxu0 0.0
    %1112 = vmatpush.msra.mxu0 0.0
    %1113 = vmatpush.msra.mxu0 0.0
    %1114 = vmatpush.msra.mxu0 0.0
    %1115 = vmatpush.msra.mxu0 0.0
    %1116 = vmatpush.msra.mxu0 0.0
    %1117 = vmatpush.msra.mxu0 0.0
    %1118 = vmatpush.msra.mxu0 0.0
    %1119 = vmatpush.msra.mxu0 0.0
    %1120 = vmatpush.msra.mxu0 0.0
    %1121 = vmatpush.msra.mxu0 0.0
    %1122 = vmatpush.msra.mxu0 0.0
    %1123 = vmatpush.msra.mxu0 0.0
    %1124 = vmatpush.msra.mxu0 0.0
    %1125 = vmatpush.msra.mxu0 %v1082
    %1126 = vmatmul.f32.gmra.mxu0 %v1088
    %v1127 = vpop.f32.mrf.mxu0
    %v1128 = vadd.f32 0.0, %v1127
    %1129 = vdwg.mxu0
    %1130 = vmatpush.msra.mxu0 0.0
    %1131 = vmatpush.msra.mxu0 0.0
    %1132 = vmatpush.msra.mxu0 0.0
    %1133 = vmatpush.msra.mxu0 0.0
    %1134 = vmatpush.msra.mxu0 0.0
    %1135 = vmatpush.msra.mxu0 0.0
    %1136 = vmatpush.msra.mxu0 0.0
    %1137 = vmatpush.msra.mxu0 0.0
    %1138 = vmatpush.msra.mxu0 0.0
    %1139 = vmatpush.msra.mxu0 0.0
    %1140 = vmatpush.msra.mxu0 0.0
    %1141 = vmatpush.msra.mxu0 0.0
    %1142 = vmatpush.msra.mxu0 0.0
    %1143 = vmatpush.msra.mxu0 0.0
    %1144 = vmatpush.msra.mxu0 0.0
    %1145 = vmatpush.msra.mxu0 %v1083
    %1146 = vmatmul.f32.gmra.mxu0 %v1088
    %v1147 = vpop.f32.mrf.mxu0
    %v1148 = vadd.f32 0.0, %v1147
    %1149 = vdwg.mxu0
    %1150 = vmatpush.msra.mxu0 0.0
    %1151 = vmatpush.msra.mxu0 0.0
    %1152 = vmatpush.msra.mxu0 0.0
    %1153 = vmatpush.msra.mxu0 0.0
    %1154 = vmatpush.msra.mxu0 0.0
    %1155 = vmatpush.msra.mxu0 0.0
    %1156 = vmatpush.msra.mxu0 0.0
    %1157 = vmatpush.msra.mxu0 0.0
    %1158 = vmatpush.msra.mxu0 0.0
    %1159 = vmatpush.msra.mxu0 0.0
    %1160 = vmatpush.msra.mxu0 0.0
    %1161 = vmatpush.msra.mxu0 0.0
    %1162 = vmatpush.msra.mxu0 0.0
    %1163 = vmatpush.msra.mxu0 0.0
    %1164 = vmatpush.msra.mxu0 0.0
    %1165 = vmatpush.msra.mxu0 %v1084
    %1166 = vmatmul.f32.gmra.mxu0 %v1088
    %v1167 = vpop.f32.mrf.mxu0
    %v1168 = vadd.f32 0.0, %v1167
    %1169 = vdwg.mxu0
    %v1170 = vadd.f32 %v1064, %v1108
    %v1171 = vadd.f32 %v1065, %v1128
    %v1172 = vadd.f32 %v1066, %v1148
    %v1173 = vadd.f32 %v1067, %v1168
    %v1174 = vadd.f32 %v77, %v1170
    %v1175 = vadd.f32 %v78, %v1171
    %v1176 = vadd.f32 %v79, %v1172
    %v1177 = vadd.f32 %v80, %v1173
    %1178 = vrot.lane.b32.xlu0 %v1170, 2
    %v1179 = vpop.permute.xlu0 %1178
    %1180 = vrot.lane.b32.xlu0 %v1171, 2
    %v1181 = vpop.permute.xlu0 %1180
    %1182 = vrot.lane.b32.xlu0 %v1172, 2
    %v1183 = vpop.permute.xlu0 %1182
    %1184 = vrot.lane.b32.xlu0 %v1173, 2
    %v1185 = vpop.permute.xlu0 %1184
    %v1186 = vsel %vm89, %v1183, %v1185
    %v1187 = vsel %vm89, %v1181, %v1183
    %v1188 = vsel %vm89, %v1179, %v1181
    %v1189 = vsel %vm89, %v1185, %v1179
    %v1190 = vsel %vm45, %v1189, -inf
    %v1191 = vsel %vm46, %v1188, -inf
    %v1192 = vsel %vm47, %v1187, -inf
    %v1193 = vsel %vm48, %v1186, -inf
    %v1194 = vmax.f32 %v1170, %v1190
    %v1195 = vmax.f32 %v1171, %v1191
    %v1196 = vmax.f32 %v1172, %v1192
    %v1197 = vmax.f32 %v1173, %v1193
    %1198 = vrot.lane.b32.xlu0 %v1170, 1
    %v1199 = vpop.permute.xlu0 %1198
    %1200 = vrot.lane.b32.xlu0 %v1171, 1
    %v1201 = vpop.permute.xlu0 %1200
    %1202 = vrot.lane.b32.xlu0 %v1172, 1
    %v1203 = vpop.permute.xlu0 %1202
    %1204 = vrot.lane.b32.xlu0 %v1173, 1
    %v1205 = vpop.permute.xlu0 %1204
    %v1206 = vsel %vm110, %v1203, %v1205
    %v1207 = vsel %vm110, %v1201, %v1203
    %v1208 = vsel %vm110, %v1199, %v1201
    %v1209 = vsel %vm110, %v1205, %v1199
    %v1210 = vsel %vm29, %v1209, -inf
    %v1211 = vsel %vm30, %v1208, -inf
    %v1212 = vsel %vm31, %v1207, -inf
    %v1213 = vsel %vm32, %v1206, -inf
    %v1214 = vmax.f32 %v1194, %v1210
    %v1215 = vmax.f32 %v1195, %v1211
    %v1216 = vmax.f32 %v1196, %v1212
    %v1217 = vmax.f32 %v1197, %v1213
    %1218 = vrot.lane.b32.xlu0 %v1170, 127
    %v1219 = vpop.permute.xlu0 %1218
    %1220 = vrot.lane.b32.xlu0 %v1171, 127
    %v1221 = vpop.permute.xlu0 %1220
    %1222 = vrot.lane.b32.xlu0 %v1172, 127
    %v1223 = vpop.permute.xlu0 %1222
    %1224 = vrot.lane.b32.xlu0 %v1173, 127
    %v1225 = vpop.permute.xlu0 %1224
    %v1226 = vsel %vm131, %v1223, %v1225
    %v1227 = vsel %vm131, %v1221, %v1223
    %v1228 = vsel %vm131, %v1219, %v1221
    %v1229 = vsel %vm131, %v1225, %v1219
    %v1230 = vsel %vm25, %v1228, -inf
    %v1231 = vsel %vm26, %v1227, -inf
    %v1232 = vsel %vm27, %v1226, -inf
    %v1233 = vsel %vm28, %v1229, -inf
    %v1234 = vmax.f32 %v1214, %v1230
    %v1235 = vmax.f32 %v1215, %v1231
    %v1236 = vmax.f32 %v1216, %v1232
    %v1237 = vmax.f32 %v1217, %v1233
    %1238 = vrot.lane.b32.xlu0 %v1170, 126
    %v1239 = vpop.permute.xlu0 %1238
    %1240 = vrot.lane.b32.xlu0 %v1171, 126
    %v1241 = vpop.permute.xlu0 %1240
    %1242 = vrot.lane.b32.xlu0 %v1172, 126
    %v1243 = vpop.permute.xlu0 %1242
    %1244 = vrot.lane.b32.xlu0 %v1173, 126
    %v1245 = vpop.permute.xlu0 %1244
    %v1246 = vsel %vm152, %v1243, %v1245
    %v1247 = vsel %vm152, %v1241, %v1243
    %v1248 = vsel %vm152, %v1239, %v1241
    %v1249 = vsel %vm152, %v1245, %v1239
    %v1250 = vsel %vm41, %v1248, -inf
    %v1251 = vsel %vm42, %v1247, -inf
    %v1252 = vsel %vm43, %v1246, -inf
    %v1253 = vsel %vm44, %v1249, -inf
    %v1254 = vmax.f32 %v1234, %v1250
    %v1255 = vmax.f32 %v1235, %v1251
    %v1256 = vmax.f32 %v1236, %v1252
    %v1257 = vmax.f32 %v1237, %v1253
    %1258 = vrot.lane.b32.xlu0 %v1254, 32
    %v1259 = vpop.permute.xlu0 %1258
    %1260 = vrot.lane.b32.xlu0 %v1255, 32
    %v1261 = vpop.permute.xlu0 %1260
    %1262 = vrot.lane.b32.xlu0 %v1256, 32
    %v1263 = vpop.permute.xlu0 %1262
    %1264 = vrot.lane.b32.xlu0 %v1257, 32
    %v1265 = vpop.permute.xlu0 %1264
    %v1266 = vsel %vm173, %v1263, %v1265
    %v1267 = vsel %vm173, %v1261, %v1263
    %v1268 = vsel %vm173, %v1259, %v1261
    %v1269 = vsel %vm173, %v1265, %v1259
    %v1270 = vsel %vm53, %v1269, -inf
    %v1271 = vsel %vm54, %v1268, -inf
    %v1272 = vsel %vm55, %v1267, -inf
    %v1273 = vsel %vm56, %v1266, -inf
    %v1274 = vmax.f32 %v1254, %v1270
    %v1275 = vmax.f32 %v1255, %v1271
    %v1276 = vmax.f32 %v1256, %v1272
    %v1277 = vmax.f32 %v1257, %v1273
    %1278 = vrot.lane.b32.xlu0 %v1254, 16
    %v1279 = vpop.permute.xlu0 %1278
    %1280 = vrot.lane.b32.xlu0 %v1255, 16
    %v1281 = vpop.permute.xlu0 %1280
    %1282 = vrot.lane.b32.xlu0 %v1256, 16
    %v1283 = vpop.permute.xlu0 %1282
    %1284 = vrot.lane.b32.xlu0 %v1257, 16
    %v1285 = vpop.permute.xlu0 %1284
    %v1286 = vsel %vm194, %v1283, %v1285
    %v1287 = vsel %vm194, %v1281, %v1283
    %v1288 = vsel %vm194, %v1279, %v1281
    %v1289 = vsel %vm194, %v1285, %v1279
    %v1290 = vsel %vm37, %v1289, -inf
    %v1291 = vsel %vm38, %v1288, -inf
    %v1292 = vsel %vm39, %v1287, -inf
    %v1293 = vsel %vm40, %v1286, -inf
    %v1294 = vmax.f32 %v1274, %v1290
    %v1295 = vmax.f32 %v1275, %v1291
    %v1296 = vmax.f32 %v1276, %v1292
    %v1297 = vmax.f32 %v1277, %v1293
    %1298 = vrot.lane.b32.xlu0 %v1254, 112
    %v1299 = vpop.permute.xlu0 %1298
    %1300 = vrot.lane.b32.xlu0 %v1255, 112
    %v1301 = vpop.permute.xlu0 %1300
    %1302 = vrot.lane.b32.xlu0 %v1256, 112
    %v1303 = vpop.permute.xlu0 %1302
    %1304 = vrot.lane.b32.xlu0 %v1257, 112
    %v1305 = vpop.permute.xlu0 %1304
    %v1306 = vsel %vm215, %v1303, %v1305
    %v1307 = vsel %vm215, %v1301, %v1303
    %v1308 = vsel %vm215, %v1299, %v1301
    %v1309 = vsel %vm215, %v1305, %v1299
    %v1310 = vsel %vm33, %v1308, -inf
    %v1311 = vsel %vm34, %v1307, -inf
    %v1312 = vsel %vm35, %v1306, -inf
    %v1313 = vsel %vm36, %v1309, -inf
    %v1314 = vmax.f32 %v1294, %v1310
    %v1315 = vmax.f32 %v1295, %v1311
    %v1316 = vmax.f32 %v1296, %v1312
    %v1317 = vmax.f32 %v1297, %v1313
    %1318 = vrot.lane.b32.xlu0 %v1254, 96
    %v1319 = vpop.permute.xlu0 %1318
    %1320 = vrot.lane.b32.xlu0 %v1255, 96
    %v1321 = vpop.permute.xlu0 %1320
    %1322 = vrot.lane.b32.xlu0 %v1256, 96
    %v1323 = vpop.permute.xlu0 %1322
    %1324 = vrot.lane.b32.xlu0 %v1257, 96
    %v1325 = vpop.permute.xlu0 %1324
    %v1326 = vsel %vm236, %v1323, %v1325
    %v1327 = vsel %vm236, %v1321, %v1323
    %v1328 = vsel %vm236, %v1319, %v1321
    %v1329 = vsel %vm236, %v1325, %v1319
    %v1330 = vsel %vm49, %v1328, -inf
    %v1331 = vsel %vm50, %v1327, -inf
    %v1332 = vsel %vm51, %v1326, -inf
    %v1333 = vsel %vm52, %v1329, -inf
    %v1334 = vmax.f32 %v1314, %v1330
    %v1335 = vmax.f32 %v1315, %v1331
    %v1336 = vmax.f32 %v1316, %v1332
    %v1337 = vmax.f32 %v1317, %v1333
    %1338 = vrot.lane.b32.xlu0 %v1334, 17
    %v1339 = vpop.permute.xlu0 %1338
    %1340 = vrot.lane.b32.xlu0 %v1335, 17
    %v1341 = vpop.permute.xlu0 %1340
    %1342 = vrot.lane.b32.xlu0 %v1336, 17
    %v1343 = vpop.permute.xlu0 %1342
    %1344 = vrot.lane.b32.xlu0 %v1337, 17
    %v1345 = vpop.permute.xlu0 %1344
    %v1346 = vsel %vm257, %v1343, %v1345
    %v1347 = vsel %vm257, %v1341, %v1343
    %v1348 = vsel %vm257, %v1339, %v1341
    %v1349 = vsel %vm257, %v1345, %v1339
    %v1350 = vsel %vm57, %v1349, 0.0
    %v1351 = vsel %vm58, %v1348, 0.0
    %v1352 = vsel %vm59, %v1347, 0.0
    %v1353 = vsel %vm60, %v1346, 0.0
    %s1354 = scalar_lea.vmem %s1, 72
    %v1355 = vld [vmem:[%s1354] sm:$0xff]
    %1356 = vrot.lane.b32.xlu0 %v1334, 16
    %v1357 = vpop.permute.xlu0 %1356
    %1358 = vrot.lane.b32.xlu0 %v1335, 16
    %v1359 = vpop.permute.xlu0 %1358
    %1360 = vrot.lane.b32.xlu0 %v1336, 16
    %v1361 = vpop.permute.xlu0 %1360
    %1362 = vrot.lane.b32.xlu0 %v1337, 16
    %v1363 = vpop.permute.xlu0 %1362
    %v1364 = vsel %vm194, %v1361, %v1363
    %v1365 = vsel %vm194, %v1359, %v1361
    %v1366 = vsel %vm194, %v1357, %v1359
    %v1367 = vsel %vm194, %v1363, %v1357
    %v1368 = vsel %vm37, %v1367, 0.0
    %v1369 = vsel %vm38, %v1366, 0.0
    %v1370 = vsel %vm39, %v1365, 0.0
    %v1371 = vsel %vm40, %v1364, 0.0
    %s1372 = scalar_lea.vmem %s1, 80
    %v1373 = vld [vmem:[%s1372] sm:$0xff]
    %v1375 = vsel %vm285, %v1373, 0
    %1377 = vmatpush.msra.mxu0 0.0
    %1378 = vmatpush.msra.mxu0 0.0
    %1379 = vmatpush.msra.mxu0 0.0
    %1380 = vmatpush.msra.mxu0 0.0
    %1381 = vmatpush.msra.mxu0 0.0
    %1382 = vmatpush.msra.mxu0 0.0
    %1383 = vmatpush.msra.mxu0 0.0
    %1384 = vmatpush.msra.mxu0 0.0
    %1385 = vmatpush.msra.mxu0 0.0
    %1386 = vmatpush.msra.mxu0 0.0
    %1387 = vmatpush.msra.mxu0 0.0
    %1388 = vmatpush.msra.mxu0 0.0
    %1389 = vmatpush.msra.mxu0 0.0
    %1390 = vmatpush.msra.mxu0 0.0
    %1391 = vmatpush.msra.mxu0 0.0
    %1392 = vmatpush.msra.mxu0 %v1368
    %1393 = vmatmul.f32.gmra.mxu0 %v1375
    %v1394 = vpop.f32.mrf.mxu0
    %v1395 = vadd.f32 0.0, %v1394
    %1396 = vdwg.mxu0
    %1397 = vmatpush.msra.mxu0 0.0
    %1398 = vmatpush.msra.mxu0 0.0
    %1399 = vmatpush.msra.mxu0 0.0
    %1400 = vmatpush.msra.mxu0 0.0
    %1401 = vmatpush.msra.mxu0 0.0
    %1402 = vmatpush.msra.mxu0 0.0
    %1403 = vmatpush.msra.mxu0 0.0
    %1404 = vmatpush.msra.mxu0 0.0
    %1405 = vmatpush.msra.mxu0 0.0
    %1406 = vmatpush.msra.mxu0 0.0
    %1407 = vmatpush.msra.mxu0 0.0
    %1408 = vmatpush.msra.mxu0 0.0
    %1409 = vmatpush.msra.mxu0 0.0
    %1410 = vmatpush.msra.mxu0 0.0
    %1411 = vmatpush.msra.mxu0 0.0
    %1412 = vmatpush.msra.mxu0 %v1369
    %1413 = vmatmul.f32.gmra.mxu0 %v1375
    %v1414 = vpop.f32.mrf.mxu0
    %v1415 = vadd.f32 0.0, %v1414
    %1416 = vdwg.mxu0
    %1417 = vmatpush.msra.mxu0 0.0
    %1418 = vmatpush.msra.mxu0 0.0
    %1419 = vmatpush.msra.mxu0 0.0
    %1420 = vmatpush.msra.mxu0 0.0
    %1421 = vmatpush.msra.mxu0 0.0
    %1422 = vmatpush.msra.mxu0 0.0
    %1423 = vmatpush.msra.mxu0 0.0
    %1424 = vmatpush.msra.mxu0 0.0
    %1425 = vmatpush.msra.mxu0 0.0
    %1426 = vmatpush.msra.mxu0 0.0
    %1427 = vmatpush.msra.mxu0 0.0
    %1428 = vmatpush.msra.mxu0 0.0
    %1429 = vmatpush.msra.mxu0 0.0
    %1430 = vmatpush.msra.mxu0 0.0
    %1431 = vmatpush.msra.mxu0 0.0
    %1432 = vmatpush.msra.mxu0 %v1370
    %1433 = vmatmul.f32.gmra.mxu0 %v1375
    %v1434 = vpop.f32.mrf.mxu0
    %v1435 = vadd.f32 0.0, %v1434
    %1436 = vdwg.mxu0
    %1437 = vmatpush.msra.mxu0 0.0
    %1438 = vmatpush.msra.mxu0 0.0
    %1439 = vmatpush.msra.mxu0 0.0
    %1440 = vmatpush.msra.mxu0 0.0
    %1441 = vmatpush.msra.mxu0 0.0
    %1442 = vmatpush.msra.mxu0 0.0
    %1443 = vmatpush.msra.mxu0 0.0
    %1444 = vmatpush.msra.mxu0 0.0
    %1445 = vmatpush.msra.mxu0 0.0
    %1446 = vmatpush.msra.mxu0 0.0
    %1447 = vmatpush.msra.mxu0 0.0
    %1448 = vmatpush.msra.mxu0 0.0
    %1449 = vmatpush.msra.mxu0 0.0
    %1450 = vmatpush.msra.mxu0 0.0
    %1451 = vmatpush.msra.mxu0 0.0
    %1452 = vmatpush.msra.mxu0 %v1371
    %1453 = vmatmul.f32.gmra.mxu0 %v1375
    %v1454 = vpop.f32.mrf.mxu0
    %v1455 = vadd.f32 0.0, %v1454
    %1456 = vdwg.mxu0
    %v1458 = vsel %vm285, %v1355, 0
    %1460 = vmatpush.msra.mxu0 0.0
    %1461 = vmatpush.msra.mxu0 0.0
    %1462 = vmatpush.msra.mxu0 0.0
    %1463 = vmatpush.msra.mxu0 0.0
    %1464 = vmatpush.msra.mxu0 0.0
    %1465 = vmatpush.msra.mxu0 0.0
    %1466 = vmatpush.msra.mxu0 0.0
    %1467 = vmatpush.msra.mxu0 0.0
    %1468 = vmatpush.msra.mxu0 0.0
    %1469 = vmatpush.msra.mxu0 0.0
    %1470 = vmatpush.msra.mxu0 0.0
    %1471 = vmatpush.msra.mxu0 0.0
    %1472 = vmatpush.msra.mxu0 0.0
    %1473 = vmatpush.msra.mxu0 0.0
    %1474 = vmatpush.msra.mxu0 0.0
    %1475 = vmatpush.msra.mxu0 %v1350
    %1476 = vmatmul.f32.gmra.mxu0 %v1458
    %v1477 = vpop.f32.mrf.mxu0
    %v1478 = vadd.f32 %v1395, %v1477
    %1479 = vdwg.mxu0
    %1480 = vmatpush.msra.mxu0 0.0
    %1481 = vmatpush.msra.mxu0 0.0
    %1482 = vmatpush.msra.mxu0 0.0
    %1483 = vmatpush.msra.mxu0 0.0
    %1484 = vmatpush.msra.mxu0 0.0
    %1485 = vmatpush.msra.mxu0 0.0
    %1486 = vmatpush.msra.mxu0 0.0
    %1487 = vmatpush.msra.mxu0 0.0
    %1488 = vmatpush.msra.mxu0 0.0
    %1489 = vmatpush.msra.mxu0 0.0
    %1490 = vmatpush.msra.mxu0 0.0
    %1491 = vmatpush.msra.mxu0 0.0
    %1492 = vmatpush.msra.mxu0 0.0
    %1493 = vmatpush.msra.mxu0 0.0
    %1494 = vmatpush.msra.mxu0 0.0
    %1495 = vmatpush.msra.mxu0 %v1351
    %1496 = vmatmul.f32.gmra.mxu0 %v1458
    %v1497 = vpop.f32.mrf.mxu0
    %v1498 = vadd.f32 %v1415, %v1497
    %1499 = vdwg.mxu0
    %1500 = vmatpush.msra.mxu0 0.0
    %1501 = vmatpush.msra.mxu0 0.0
    %1502 = vmatpush.msra.mxu0 0.0
    %1503 = vmatpush.msra.mxu0 0.0
    %1504 = vmatpush.msra.mxu0 0.0
    %1505 = vmatpush.msra.mxu0 0.0
    %1506 = vmatpush.msra.mxu0 0.0
    %1507 = vmatpush.msra.mxu0 0.0
    %1508 = vmatpush.msra.mxu0 0.0
    %1509 = vmatpush.msra.mxu0 0.0
    %1510 = vmatpush.msra.mxu0 0.0
    %1511 = vmatpush.msra.mxu0 0.0
    %1512 = vmatpush.msra.mxu0 0.0
    %1513 = vmatpush.msra.mxu0 0.0
    %1514 = vmatpush.msra.mxu0 0.0
    %1515 = vmatpush.msra.mxu0 %v1352
    %1516 = vmatmul.f32.gmra.mxu0 %v1458
    %v1517 = vpop.f32.mrf.mxu0
    %v1518 = vadd.f32 %v1435, %v1517
    %1519 = vdwg.mxu0
    %1520 = vmatpush.msra.mxu0 0.0
    %1521 = vmatpush.msra.mxu0 0.0
    %1522 = vmatpush.msra.mxu0 0.0
    %1523 = vmatpush.msra.mxu0 0.0
    %1524 = vmatpush.msra.mxu0 0.0
    %1525 = vmatpush.msra.mxu0 0.0
    %1526 = vmatpush.msra.mxu0 0.0
    %1527 = vmatpush.msra.mxu0 0.0
    %1528 = vmatpush.msra.mxu0 0.0
    %1529 = vmatpush.msra.mxu0 0.0
    %1530 = vmatpush.msra.mxu0 0.0
    %1531 = vmatpush.msra.mxu0 0.0
    %1532 = vmatpush.msra.mxu0 0.0
    %1533 = vmatpush.msra.mxu0 0.0
    %1534 = vmatpush.msra.mxu0 0.0
    %1535 = vmatpush.msra.mxu0 %v1353
    %1536 = vmatmul.f32.gmra.mxu0 %v1458
    %v1537 = vpop.f32.mrf.mxu0
    %v1538 = vadd.f32 %v1455, %v1537
    %1539 = vdwg.mxu0
    %1540 = vrot.lane.b32.xlu0 %v1334, 15
    %v1541 = vpop.permute.xlu0 %1540
    %1542 = vrot.lane.b32.xlu0 %v1335, 15
    %v1543 = vpop.permute.xlu0 %1542
    %1544 = vrot.lane.b32.xlu0 %v1336, 15
    %v1545 = vpop.permute.xlu0 %1544
    %1546 = vrot.lane.b32.xlu0 %v1337, 15
    %v1547 = vpop.permute.xlu0 %1546
    %v1548 = vsel %vm460, %v1545, %v1547
    %v1549 = vsel %vm460, %v1543, %v1545
    %v1550 = vsel %vm460, %v1541, %v1543
    %v1551 = vsel %vm460, %v1547, %v1541
    %v1552 = vsel %vm61, %v1551, 0.0
    %v1553 = vsel %vm62, %v1550, 0.0
    %v1554 = vsel %vm63, %v1549, 0.0
    %v1555 = vsel %vm64, %v1548, 0.0
    %s1556 = scalar_lea.vmem %s1, 88
    %v1557 = vld [vmem:[%s1556] sm:$0xff]
    %v1559 = vsel %vm285, %v1557, 0
    %1561 = vmatpush.msra.mxu0 0.0
    %1562 = vmatpush.msra.mxu0 0.0
    %1563 = vmatpush.msra.mxu0 0.0
    %1564 = vmatpush.msra.mxu0 0.0
    %1565 = vmatpush.msra.mxu0 0.0
    %1566 = vmatpush.msra.mxu0 0.0
    %1567 = vmatpush.msra.mxu0 0.0
    %1568 = vmatpush.msra.mxu0 0.0
    %1569 = vmatpush.msra.mxu0 0.0
    %1570 = vmatpush.msra.mxu0 0.0
    %1571 = vmatpush.msra.mxu0 0.0
    %1572 = vmatpush.msra.mxu0 0.0
    %1573 = vmatpush.msra.mxu0 0.0
    %1574 = vmatpush.msra.mxu0 0.0
    %1575 = vmatpush.msra.mxu0 0.0
    %1576 = vmatpush.msra.mxu0 %v1552
    %1577 = vmatmul.f32.gmra.mxu0 %v1559
    %v1578 = vpop.f32.mrf.mxu0
    %v1579 = vadd.f32 0.0, %v1578
    %1580 = vdwg.mxu0
    %1581 = vmatpush.msra.mxu0 0.0
    %1582 = vmatpush.msra.mxu0 0.0
    %1583 = vmatpush.msra.mxu0 0.0
    %1584 = vmatpush.msra.mxu0 0.0
    %1585 = vmatpush.msra.mxu0 0.0
    %1586 = vmatpush.msra.mxu0 0.0
    %1587 = vmatpush.msra.mxu0 0.0
    %1588 = vmatpush.msra.mxu0 0.0
    %1589 = vmatpush.msra.mxu0 0.0
    %1590 = vmatpush.msra.mxu0 0.0
    %1591 = vmatpush.msra.mxu0 0.0
    %1592 = vmatpush.msra.mxu0 0.0
    %1593 = vmatpush.msra.mxu0 0.0
    %1594 = vmatpush.msra.mxu0 0.0
    %1595 = vmatpush.msra.mxu0 0.0
    %1596 = vmatpush.msra.mxu0 %v1553
    %1597 = vmatmul.f32.gmra.mxu0 %v1559
    %v1598 = vpop.f32.mrf.mxu0
    %v1599 = vadd.f32 0.0, %v1598
    %1600 = vdwg.mxu0
    %1601 = vmatpush.msra.mxu0 0.0
    %1602 = vmatpush.msra.mxu0 0.0
    %1603 = vmatpush.msra.mxu0 0.0
    %1604 = vmatpush.msra.mxu0 0.0
    %1605 = vmatpush.msra.mxu0 0.0
    %1606 = vmatpush.msra.mxu0 0.0
    %1607 = vmatpush.msra.mxu0 0.0
    %1608 = vmatpush.msra.mxu0 0.0
    %1609 = vmatpush.msra.mxu0 0.0
    %1610 = vmatpush.msra.mxu0 0.0
    %1611 = vmatpush.msra.mxu0 0.0
    %1612 = vmatpush.msra.mxu0 0.0
    %1613 = vmatpush.msra.mxu0 0.0
    %1614 = vmatpush.msra.mxu0 0.0
    %1615 = vmatpush.msra.mxu0 0.0
    %1616 = vmatpush.msra.mxu0 %v1554
    %1617 = vmatmul.f32.gmra.mxu0 %v1559
    %v1618 = vpop.f32.mrf.mxu0
    %v1619 = vadd.f32 0.0, %v1618
    %1620 = vdwg.mxu0
    %1621 = vmatpush.msra.mxu0 0.0
    %1622 = vmatpush.msra.mxu0 0.0
    %1623 = vmatpush.msra.mxu0 0.0
    %1624 = vmatpush.msra.mxu0 0.0
    %1625 = vmatpush.msra.mxu0 0.0
    %1626 = vmatpush.msra.mxu0 0.0
    %1627 = vmatpush.msra.mxu0 0.0
    %1628 = vmatpush.msra.mxu0 0.0
    %1629 = vmatpush.msra.mxu0 0.0
    %1630 = vmatpush.msra.mxu0 0.0
    %1631 = vmatpush.msra.mxu0 0.0
    %1632 = vmatpush.msra.mxu0 0.0
    %1633 = vmatpush.msra.mxu0 0.0
    %1634 = vmatpush.msra.mxu0 0.0
    %1635 = vmatpush.msra.mxu0 0.0
    %1636 = vmatpush.msra.mxu0 %v1555
    %1637 = vmatmul.f32.gmra.mxu0 %v1559
    %v1638 = vpop.f32.mrf.mxu0
    %v1639 = vadd.f32 0.0, %v1638
    %1640 = vdwg.mxu0
    %v1641 = vadd.f32 %v1478, %v1579
    %v1642 = vadd.f32 %v1498, %v1599
    %v1643 = vadd.f32 %v1518, %v1619
    %v1644 = vadd.f32 %v1538, %v1639
    %1645 = vrot.lane.b32.xlu0 %v1334, 1
    %v1646 = vpop.permute.xlu0 %1645
    %1647 = vrot.lane.b32.xlu0 %v1335, 1
    %v1648 = vpop.permute.xlu0 %1647
    %1649 = vrot.lane.b32.xlu0 %v1336, 1
    %v1650 = vpop.permute.xlu0 %1649
    %1651 = vrot.lane.b32.xlu0 %v1337, 1
    %v1652 = vpop.permute.xlu0 %1651
    %v1653 = vsel %vm110, %v1650, %v1652
    %v1654 = vsel %vm110, %v1648, %v1650
    %v1655 = vsel %vm110, %v1646, %v1648
    %v1656 = vsel %vm110, %v1652, %v1646
    %v1657 = vsel %vm29, %v1656, 0.0
    %v1658 = vsel %vm30, %v1655, 0.0
    %v1659 = vsel %vm31, %v1654, 0.0
    %v1660 = vsel %vm32, %v1653, 0.0
    %s1661 = scalar_lea.vmem %s1, 96
    %v1662 = vld [vmem:[%s1661] sm:$0xff]
    %v1664 = vsel %vm285, %v1662, 0
    %1666 = vmatpush.msra.mxu0 0.0
    %1667 = vmatpush.msra.mxu0 0.0
    %1668 = vmatpush.msra.mxu0 0.0
    %1669 = vmatpush.msra.mxu0 0.0
    %1670 = vmatpush.msra.mxu0 0.0
    %1671 = vmatpush.msra.mxu0 0.0
    %1672 = vmatpush.msra.mxu0 0.0
    %1673 = vmatpush.msra.mxu0 0.0
    %1674 = vmatpush.msra.mxu0 0.0
    %1675 = vmatpush.msra.mxu0 0.0
    %1676 = vmatpush.msra.mxu0 0.0
    %1677 = vmatpush.msra.mxu0 0.0
    %1678 = vmatpush.msra.mxu0 0.0
    %1679 = vmatpush.msra.mxu0 0.0
    %1680 = vmatpush.msra.mxu0 0.0
    %1681 = vmatpush.msra.mxu0 %v1657
    %1682 = vmatmul.f32.gmra.mxu0 %v1664
    %v1683 = vpop.f32.mrf.mxu0
    %v1684 = vadd.f32 0.0, %v1683
    %1685 = vdwg.mxu0
    %1686 = vmatpush.msra.mxu0 0.0
    %1687 = vmatpush.msra.mxu0 0.0
    %1688 = vmatpush.msra.mxu0 0.0
    %1689 = vmatpush.msra.mxu0 0.0
    %1690 = vmatpush.msra.mxu0 0.0
    %1691 = vmatpush.msra.mxu0 0.0
    %1692 = vmatpush.msra.mxu0 0.0
    %1693 = vmatpush.msra.mxu0 0.0
    %1694 = vmatpush.msra.mxu0 0.0
    %1695 = vmatpush.msra.mxu0 0.0
    %1696 = vmatpush.msra.mxu0 0.0
    %1697 = vmatpush.msra.mxu0 0.0
    %1698 = vmatpush.msra.mxu0 0.0
    %1699 = vmatpush.msra.mxu0 0.0
    %1700 = vmatpush.msra.mxu0 0.0
    %1701 = vmatpush.msra.mxu0 %v1658
    %1702 = vmatmul.f32.gmra.mxu0 %v1664
    %v1703 = vpop.f32.mrf.mxu0
    %v1704 = vadd.f32 0.0, %v1703
    %1705 = vdwg.mxu0
    %1706 = vmatpush.msra.mxu0 0.0
    %1707 = vmatpush.msra.mxu0 0.0
    %1708 = vmatpush.msra.mxu0 0.0
    %1709 = vmatpush.msra.mxu0 0.0
    %1710 = vmatpush.msra.mxu0 0.0
    %1711 = vmatpush.msra.mxu0 0.0
    %1712 = vmatpush.msra.mxu0 0.0
    %1713 = vmatpush.msra.mxu0 0.0
    %1714 = vmatpush.msra.mxu0 0.0
    %1715 = vmatpush.msra.mxu0 0.0
    %1716 = vmatpush.msra.mxu0 0.0
    %1717 = vmatpush.msra.mxu0 0.0
    %1718 = vmatpush.msra.mxu0 0.0
    %1719 = vmatpush.msra.mxu0 0.0
    %1720 = vmatpush.msra.mxu0 0.0
    %1721 = vmatpush.msra.mxu0 %v1659
    %1722 = vmatmul.f32.gmra.mxu0 %v1664
    %v1723 = vpop.f32.mrf.mxu0
    %v1724 = vadd.f32 0.0, %v1723
    %1725 = vdwg.mxu0
    %1726 = vmatpush.msra.mxu0 0.0
    %1727 = vmatpush.msra.mxu0 0.0
    %1728 = vmatpush.msra.mxu0 0.0
    %1729 = vmatpush.msra.mxu0 0.0
    %1730 = vmatpush.msra.mxu0 0.0
    %1731 = vmatpush.msra.mxu0 0.0
    %1732 = vmatpush.msra.mxu0 0.0
    %1733 = vmatpush.msra.mxu0 0.0
    %1734 = vmatpush.msra.mxu0 0.0
    %1735 = vmatpush.msra.mxu0 0.0
    %1736 = vmatpush.msra.mxu0 0.0
    %1737 = vmatpush.msra.mxu0 0.0
    %1738 = vmatpush.msra.mxu0 0.0
    %1739 = vmatpush.msra.mxu0 0.0
    %1740 = vmatpush.msra.mxu0 0.0
    %1741 = vmatpush.msra.mxu0 %v1660
    %1742 = vmatmul.f32.gmra.mxu0 %v1664
    %v1743 = vpop.f32.mrf.mxu0
    %v1744 = vadd.f32 0.0, %v1743
    %1745 = vdwg.mxu0
    %v1746 = vadd.f32 %v1641, %v1684
    %v1747 = vadd.f32 %v1642, %v1704
    %v1748 = vadd.f32 %v1643, %v1724
    %v1749 = vadd.f32 %v1644, %v1744
    %s1750 = scalar_lea.vmem %s1, 104
    %v1751 = vld [vmem:[%s1750] sm:$0xff]
    %v1753 = vsel %vm285, %v1751, 0
    %1755 = vmatpush.msra.mxu0 0.0
    %1756 = vmatpush.msra.mxu0 0.0
    %1757 = vmatpush.msra.mxu0 0.0
    %1758 = vmatpush.msra.mxu0 0.0
    %1759 = vmatpush.msra.mxu0 0.0
    %1760 = vmatpush.msra.mxu0 0.0
    %1761 = vmatpush.msra.mxu0 0.0
    %1762 = vmatpush.msra.mxu0 0.0
    %1763 = vmatpush.msra.mxu0 0.0
    %1764 = vmatpush.msra.mxu0 0.0
    %1765 = vmatpush.msra.mxu0 0.0
    %1766 = vmatpush.msra.mxu0 0.0
    %1767 = vmatpush.msra.mxu0 0.0
    %1768 = vmatpush.msra.mxu0 0.0
    %1769 = vmatpush.msra.mxu0 0.0
    %1770 = vmatpush.msra.mxu0 %v1334
    %1771 = vmatmul.f32.gmra.mxu0 %v1753
    %v1772 = vpop.f32.mrf.mxu0
    %v1773 = vadd.f32 0.0, %v1772
    %1774 = vdwg.mxu0
    %1775 = vmatpush.msra.mxu0 0.0
    %1776 = vmatpush.msra.mxu0 0.0
    %1777 = vmatpush.msra.mxu0 0.0
    %1778 = vmatpush.msra.mxu0 0.0
    %1779 = vmatpush.msra.mxu0 0.0
    %1780 = vmatpush.msra.mxu0 0.0
    %1781 = vmatpush.msra.mxu0 0.0
    %1782 = vmatpush.msra.mxu0 0.0
    %1783 = vmatpush.msra.mxu0 0.0
    %1784 = vmatpush.msra.mxu0 0.0
    %1785 = vmatpush.msra.mxu0 0.0
    %1786 = vmatpush.msra.mxu0 0.0
    %1787 = vmatpush.msra.mxu0 0.0
    %1788 = vmatpush.msra.mxu0 0.0
    %1789 = vmatpush.msra.mxu0 0.0
    %1790 = vmatpush.msra.mxu0 %v1335
    %1791 = vmatmul.f32.gmra.mxu0 %v1753
    %v1792 = vpop.f32.mrf.mxu0
    %v1793 = vadd.f32 0.0, %v1792
    %1794 = vdwg.mxu0
    %1795 = vmatpush.msra.mxu0 0.0
    %1796 = vmatpush.msra.mxu0 0.0
    %1797 = vmatpush.msra.mxu0 0.0
    %1798 = vmatpush.msra.mxu0 0.0
    %1799 = vmatpush.msra.mxu0 0.0
    %1800 = vmatpush.msra.mxu0 0.0
    %1801 = vmatpush.msra.mxu0 0.0
    %1802 = vmatpush.msra.mxu0 0.0
    %1803 = vmatpush.msra.mxu0 0.0
    %1804 = vmatpush.msra.mxu0 0.0
    %1805 = vmatpush.msra.mxu0 0.0
    %1806 = vmatpush.msra.mxu0 0.0
    %1807 = vmatpush.msra.mxu0 0.0
    %1808 = vmatpush.msra.mxu0 0.0
    %1809 = vmatpush.msra.mxu0 0.0
    %1810 = vmatpush.msra.mxu0 %v1336
    %1811 = vmatmul.f32.gmra.mxu0 %v1753
    %v1812 = vpop.f32.mrf.mxu0
    %v1813 = vadd.f32 0.0, %v1812
    %1814 = vdwg.mxu0
    %1815 = vmatpush.msra.mxu0 0.0
    %1816 = vmatpush.msra.mxu0 0.0
    %1817 = vmatpush.msra.mxu0 0.0
    %1818 = vmatpush.msra.mxu0 0.0
    %1819 = vmatpush.msra.mxu0 0.0
    %1820 = vmatpush.msra.mxu0 0.0
    %1821 = vmatpush.msra.mxu0 0.0
    %1822 = vmatpush.msra.mxu0 0.0
    %1823 = vmatpush.msra.mxu0 0.0
    %1824 = vmatpush.msra.mxu0 0.0
    %1825 = vmatpush.msra.mxu0 0.0
    %1826 = vmatpush.msra.mxu0 0.0
    %1827 = vmatpush.msra.mxu0 0.0
    %1828 = vmatpush.msra.mxu0 0.0
    %1829 = vmatpush.msra.mxu0 0.0
    %1830 = vmatpush.msra.mxu0 %v1337
    %1831 = vmatmul.f32.gmra.mxu0 %v1753
    %v1832 = vpop.f32.mrf.mxu0
    %v1833 = vadd.f32 0.0, %v1832
    %1834 = vdwg.mxu0
    %v1835 = vadd.f32 %v1746, %v1773
    %v1836 = vadd.f32 %v1747, %v1793
    %v1837 = vadd.f32 %v1748, %v1813
    %v1838 = vadd.f32 %v1749, %v1833
    %1839 = vrot.lane.b32.xlu0 %v1334, 127
    %v1840 = vpop.permute.xlu0 %1839
    %1841 = vrot.lane.b32.xlu0 %v1335, 127
    %v1842 = vpop.permute.xlu0 %1841
    %1843 = vrot.lane.b32.xlu0 %v1336, 127
    %v1844 = vpop.permute.xlu0 %1843
    %1845 = vrot.lane.b32.xlu0 %v1337, 127
    %v1846 = vpop.permute.xlu0 %1845
    %v1847 = vsel %vm131, %v1844, %v1846
    %v1848 = vsel %vm131, %v1842, %v1844
    %v1849 = vsel %vm131, %v1840, %v1842
    %v1850 = vsel %vm131, %v1846, %v1840
    %v1851 = vsel %vm25, %v1849, 0.0
    %v1852 = vsel %vm26, %v1848, 0.0
    %v1853 = vsel %vm27, %v1847, 0.0
    %v1854 = vsel %vm28, %v1850, 0.0
    %s1855 = scalar_lea.vmem %s1, 112
    %v1856 = vld [vmem:[%s1855] sm:$0xff]
    %v1858 = vsel %vm285, %v1856, 0
    %1860 = vmatpush.msra.mxu0 0.0
    %1861 = vmatpush.msra.mxu0 0.0
    %1862 = vmatpush.msra.mxu0 0.0
    %1863 = vmatpush.msra.mxu0 0.0
    %1864 = vmatpush.msra.mxu0 0.0
    %1865 = vmatpush.msra.mxu0 0.0
    %1866 = vmatpush.msra.mxu0 0.0
    %1867 = vmatpush.msra.mxu0 0.0
    %1868 = vmatpush.msra.mxu0 0.0
    %1869 = vmatpush.msra.mxu0 0.0
    %1870 = vmatpush.msra.mxu0 0.0
    %1871 = vmatpush.msra.mxu0 0.0
    %1872 = vmatpush.msra.mxu0 0.0
    %1873 = vmatpush.msra.mxu0 0.0
    %1874 = vmatpush.msra.mxu0 0.0
    %1875 = vmatpush.msra.mxu0 %v1851
    %1876 = vmatmul.f32.gmra.mxu0 %v1858
    %v1877 = vpop.f32.mrf.mxu0
    %v1878 = vadd.f32 0.0, %v1877
    %1879 = vdwg.mxu0
    %1880 = vmatpush.msra.mxu0 0.0
    %1881 = vmatpush.msra.mxu0 0.0
    %1882 = vmatpush.msra.mxu0 0.0
    %1883 = vmatpush.msra.mxu0 0.0
    %1884 = vmatpush.msra.mxu0 0.0
    %1885 = vmatpush.msra.mxu0 0.0
    %1886 = vmatpush.msra.mxu0 0.0
    %1887 = vmatpush.msra.mxu0 0.0
    %1888 = vmatpush.msra.mxu0 0.0
    %1889 = vmatpush.msra.mxu0 0.0
    %1890 = vmatpush.msra.mxu0 0.0
    %1891 = vmatpush.msra.mxu0 0.0
    %1892 = vmatpush.msra.mxu0 0.0
    %1893 = vmatpush.msra.mxu0 0.0
    %1894 = vmatpush.msra.mxu0 0.0
    %1895 = vmatpush.msra.mxu0 %v1852
    %1896 = vmatmul.f32.gmra.mxu0 %v1858
    %v1897 = vpop.f32.mrf.mxu0
    %v1898 = vadd.f32 0.0, %v1897
    %1899 = vdwg.mxu0
    %1900 = vmatpush.msra.mxu0 0.0
    %1901 = vmatpush.msra.mxu0 0.0
    %1902 = vmatpush.msra.mxu0 0.0
    %1903 = vmatpush.msra.mxu0 0.0
    %1904 = vmatpush.msra.mxu0 0.0
    %1905 = vmatpush.msra.mxu0 0.0
    %1906 = vmatpush.msra.mxu0 0.0
    %1907 = vmatpush.msra.mxu0 0.0
    %1908 = vmatpush.msra.mxu0 0.0
    %1909 = vmatpush.msra.mxu0 0.0
    %1910 = vmatpush.msra.mxu0 0.0
    %1911 = vmatpush.msra.mxu0 0.0
    %1912 = vmatpush.msra.mxu0 0.0
    %1913 = vmatpush.msra.mxu0 0.0
    %1914 = vmatpush.msra.mxu0 0.0
    %1915 = vmatpush.msra.mxu0 %v1853
    %1916 = vmatmul.f32.gmra.mxu0 %v1858
    %v1917 = vpop.f32.mrf.mxu0
    %v1918 = vadd.f32 0.0, %v1917
    %1919 = vdwg.mxu0
    %1920 = vmatpush.msra.mxu0 0.0
    %1921 = vmatpush.msra.mxu0 0.0
    %1922 = vmatpush.msra.mxu0 0.0
    %1923 = vmatpush.msra.mxu0 0.0
    %1924 = vmatpush.msra.mxu0 0.0
    %1925 = vmatpush.msra.mxu0 0.0
    %1926 = vmatpush.msra.mxu0 0.0
    %1927 = vmatpush.msra.mxu0 0.0
    %1928 = vmatpush.msra.mxu0 0.0
    %1929 = vmatpush.msra.mxu0 0.0
    %1930 = vmatpush.msra.mxu0 0.0
    %1931 = vmatpush.msra.mxu0 0.0
    %1932 = vmatpush.msra.mxu0 0.0
    %1933 = vmatpush.msra.mxu0 0.0
    %1934 = vmatpush.msra.mxu0 0.0
    %1935 = vmatpush.msra.mxu0 %v1854
    %1936 = vmatmul.f32.gmra.mxu0 %v1858
    %v1937 = vpop.f32.mrf.mxu0
    %v1938 = vadd.f32 0.0, %v1937
    %1939 = vdwg.mxu0
    %v1940 = vadd.f32 %v1835, %v1878
    %v1941 = vadd.f32 %v1836, %v1898
    %v1942 = vadd.f32 %v1837, %v1918
    %v1943 = vadd.f32 %v1838, %v1938
    %1944 = vrot.lane.b32.xlu0 %v1334, 113
    %v1945 = vpop.permute.xlu0 %1944
    %1946 = vrot.lane.b32.xlu0 %v1335, 113
    %v1947 = vpop.permute.xlu0 %1946
    %1948 = vrot.lane.b32.xlu0 %v1336, 113
    %v1949 = vpop.permute.xlu0 %1948
    %1950 = vrot.lane.b32.xlu0 %v1337, 113
    %v1951 = vpop.permute.xlu0 %1950
    %v1952 = vsel %vm865, %v1949, %v1951
    %v1953 = vsel %vm865, %v1947, %v1949
    %v1954 = vsel %vm865, %v1945, %v1947
    %v1955 = vsel %vm865, %v1951, %v1945
    %v1956 = vsel %vm65, %v1954, 0.0
    %v1957 = vsel %vm66, %v1953, 0.0
    %v1958 = vsel %vm67, %v1952, 0.0
    %v1959 = vsel %vm68, %v1955, 0.0
    %s1960 = scalar_lea.vmem %s1, 120
    %v1961 = vld [vmem:[%s1960] sm:$0xff]
    %v1963 = vsel %vm285, %v1961, 0
    %1965 = vmatpush.msra.mxu0 0.0
    %1966 = vmatpush.msra.mxu0 0.0
    %1967 = vmatpush.msra.mxu0 0.0
    %1968 = vmatpush.msra.mxu0 0.0
    %1969 = vmatpush.msra.mxu0 0.0
    %1970 = vmatpush.msra.mxu0 0.0
    %1971 = vmatpush.msra.mxu0 0.0
    %1972 = vmatpush.msra.mxu0 0.0
    %1973 = vmatpush.msra.mxu0 0.0
    %1974 = vmatpush.msra.mxu0 0.0
    %1975 = vmatpush.msra.mxu0 0.0
    %1976 = vmatpush.msra.mxu0 0.0
    %1977 = vmatpush.msra.mxu0 0.0
    %1978 = vmatpush.msra.mxu0 0.0
    %1979 = vmatpush.msra.mxu0 0.0
    %1980 = vmatpush.msra.mxu0 %v1956
    %1981 = vmatmul.f32.gmra.mxu0 %v1963
    %v1982 = vpop.f32.mrf.mxu0
    %v1983 = vadd.f32 0.0, %v1982
    %1984 = vdwg.mxu0
    %1985 = vmatpush.msra.mxu0 0.0
    %1986 = vmatpush.msra.mxu0 0.0
    %1987 = vmatpush.msra.mxu0 0.0
    %1988 = vmatpush.msra.mxu0 0.0
    %1989 = vmatpush.msra.mxu0 0.0
    %1990 = vmatpush.msra.mxu0 0.0
    %1991 = vmatpush.msra.mxu0 0.0
    %1992 = vmatpush.msra.mxu0 0.0
    %1993 = vmatpush.msra.mxu0 0.0
    %1994 = vmatpush.msra.mxu0 0.0
    %1995 = vmatpush.msra.mxu0 0.0
    %1996 = vmatpush.msra.mxu0 0.0
    %1997 = vmatpush.msra.mxu0 0.0
    %1998 = vmatpush.msra.mxu0 0.0
    %1999 = vmatpush.msra.mxu0 0.0
    %2000 = vmatpush.msra.mxu0 %v1957
    %2001 = vmatmul.f32.gmra.mxu0 %v1963
    %v2002 = vpop.f32.mrf.mxu0
    %v2003 = vadd.f32 0.0, %v2002
    %2004 = vdwg.mxu0
    %2005 = vmatpush.msra.mxu0 0.0
    %2006 = vmatpush.msra.mxu0 0.0
    %2007 = vmatpush.msra.mxu0 0.0
    %2008 = vmatpush.msra.mxu0 0.0
    %2009 = vmatpush.msra.mxu0 0.0
    %2010 = vmatpush.msra.mxu0 0.0
    %2011 = vmatpush.msra.mxu0 0.0
    %2012 = vmatpush.msra.mxu0 0.0
    %2013 = vmatpush.msra.mxu0 0.0
    %2014 = vmatpush.msra.mxu0 0.0
    %2015 = vmatpush.msra.mxu0 0.0
    %2016 = vmatpush.msra.mxu0 0.0
    %2017 = vmatpush.msra.mxu0 0.0
    %2018 = vmatpush.msra.mxu0 0.0
    %2019 = vmatpush.msra.mxu0 0.0
    %2020 = vmatpush.msra.mxu0 %v1958
    %2021 = vmatmul.f32.gmra.mxu0 %v1963
    %v2022 = vpop.f32.mrf.mxu0
    %v2023 = vadd.f32 0.0, %v2022
    %2024 = vdwg.mxu0
    %2025 = vmatpush.msra.mxu0 0.0
    %2026 = vmatpush.msra.mxu0 0.0
    %2027 = vmatpush.msra.mxu0 0.0
    %2028 = vmatpush.msra.mxu0 0.0
    %2029 = vmatpush.msra.mxu0 0.0
    %2030 = vmatpush.msra.mxu0 0.0
    %2031 = vmatpush.msra.mxu0 0.0
    %2032 = vmatpush.msra.mxu0 0.0
    %2033 = vmatpush.msra.mxu0 0.0
    %2034 = vmatpush.msra.mxu0 0.0
    %2035 = vmatpush.msra.mxu0 0.0
    %2036 = vmatpush.msra.mxu0 0.0
    %2037 = vmatpush.msra.mxu0 0.0
    %2038 = vmatpush.msra.mxu0 0.0
    %2039 = vmatpush.msra.mxu0 0.0
    %2040 = vmatpush.msra.mxu0 %v1959
    %2041 = vmatmul.f32.gmra.mxu0 %v1963
    %v2042 = vpop.f32.mrf.mxu0
    %v2043 = vadd.f32 0.0, %v2042
    %2044 = vdwg.mxu0
    %v2045 = vadd.f32 %v1940, %v1983
    %v2046 = vadd.f32 %v1941, %v2003
    %v2047 = vadd.f32 %v1942, %v2023
    %v2048 = vadd.f32 %v1943, %v2043
    %2049 = vrot.lane.b32.xlu0 %v1334, 112
    %v2050 = vpop.permute.xlu0 %2049
    %2051 = vrot.lane.b32.xlu0 %v1335, 112
    %v2052 = vpop.permute.xlu0 %2051
    %2053 = vrot.lane.b32.xlu0 %v1336, 112
    %v2054 = vpop.permute.xlu0 %2053
    %2055 = vrot.lane.b32.xlu0 %v1337, 112
    %v2056 = vpop.permute.xlu0 %2055
    %v2057 = vsel %vm215, %v2054, %v2056
    %v2058 = vsel %vm215, %v2052, %v2054
    %v2059 = vsel %vm215, %v2050, %v2052
    %v2060 = vsel %vm215, %v2056, %v2050
    %v2061 = vsel %vm33, %v2059, 0.0
    %v2062 = vsel %vm34, %v2058, 0.0
    %v2063 = vsel %vm35, %v2057, 0.0
    %v2064 = vsel %vm36, %v2060, 0.0
    %s2065 = scalar_lea.vmem %s1, 128
    %v2066 = vld [vmem:[%s2065] sm:$0xff]
    %v2068 = vsel %vm285, %v2066, 0
    %2070 = vmatpush.msra.mxu0 0.0
    %2071 = vmatpush.msra.mxu0 0.0
    %2072 = vmatpush.msra.mxu0 0.0
    %2073 = vmatpush.msra.mxu0 0.0
    %2074 = vmatpush.msra.mxu0 0.0
    %2075 = vmatpush.msra.mxu0 0.0
    %2076 = vmatpush.msra.mxu0 0.0
    %2077 = vmatpush.msra.mxu0 0.0
    %2078 = vmatpush.msra.mxu0 0.0
    %2079 = vmatpush.msra.mxu0 0.0
    %2080 = vmatpush.msra.mxu0 0.0
    %2081 = vmatpush.msra.mxu0 0.0
    %2082 = vmatpush.msra.mxu0 0.0
    %2083 = vmatpush.msra.mxu0 0.0
    %2084 = vmatpush.msra.mxu0 0.0
    %2085 = vmatpush.msra.mxu0 %v2061
    %2086 = vmatmul.f32.gmra.mxu0 %v2068
    %v2087 = vpop.f32.mrf.mxu0
    %v2088 = vadd.f32 0.0, %v2087
    %2089 = vdwg.mxu0
    %2090 = vmatpush.msra.mxu0 0.0
    %2091 = vmatpush.msra.mxu0 0.0
    %2092 = vmatpush.msra.mxu0 0.0
    %2093 = vmatpush.msra.mxu0 0.0
    %2094 = vmatpush.msra.mxu0 0.0
    %2095 = vmatpush.msra.mxu0 0.0
    %2096 = vmatpush.msra.mxu0 0.0
    %2097 = vmatpush.msra.mxu0 0.0
    %2098 = vmatpush.msra.mxu0 0.0
    %2099 = vmatpush.msra.mxu0 0.0
    %2100 = vmatpush.msra.mxu0 0.0
    %2101 = vmatpush.msra.mxu0 0.0
    %2102 = vmatpush.msra.mxu0 0.0
    %2103 = vmatpush.msra.mxu0 0.0
    %2104 = vmatpush.msra.mxu0 0.0
    %2105 = vmatpush.msra.mxu0 %v2062
    %2106 = vmatmul.f32.gmra.mxu0 %v2068
    %v2107 = vpop.f32.mrf.mxu0
    %v2108 = vadd.f32 0.0, %v2107
    %2109 = vdwg.mxu0
    %2110 = vmatpush.msra.mxu0 0.0
    %2111 = vmatpush.msra.mxu0 0.0
    %2112 = vmatpush.msra.mxu0 0.0
    %2113 = vmatpush.msra.mxu0 0.0
    %2114 = vmatpush.msra.mxu0 0.0
    %2115 = vmatpush.msra.mxu0 0.0
    %2116 = vmatpush.msra.mxu0 0.0
    %2117 = vmatpush.msra.mxu0 0.0
    %2118 = vmatpush.msra.mxu0 0.0
    %2119 = vmatpush.msra.mxu0 0.0
    %2120 = vmatpush.msra.mxu0 0.0
    %2121 = vmatpush.msra.mxu0 0.0
    %2122 = vmatpush.msra.mxu0 0.0
    %2123 = vmatpush.msra.mxu0 0.0
    %2124 = vmatpush.msra.mxu0 0.0
    %2125 = vmatpush.msra.mxu0 %v2063
    %2126 = vmatmul.f32.gmra.mxu0 %v2068
    %v2127 = vpop.f32.mrf.mxu0
    %v2128 = vadd.f32 0.0, %v2127
    %2129 = vdwg.mxu0
    %2130 = vmatpush.msra.mxu0 0.0
    %2131 = vmatpush.msra.mxu0 0.0
    %2132 = vmatpush.msra.mxu0 0.0
    %2133 = vmatpush.msra.mxu0 0.0
    %2134 = vmatpush.msra.mxu0 0.0
    %2135 = vmatpush.msra.mxu0 0.0
    %2136 = vmatpush.msra.mxu0 0.0
    %2137 = vmatpush.msra.mxu0 0.0
    %2138 = vmatpush.msra.mxu0 0.0
    %2139 = vmatpush.msra.mxu0 0.0
    %2140 = vmatpush.msra.mxu0 0.0
    %2141 = vmatpush.msra.mxu0 0.0
    %2142 = vmatpush.msra.mxu0 0.0
    %2143 = vmatpush.msra.mxu0 0.0
    %2144 = vmatpush.msra.mxu0 0.0
    %2145 = vmatpush.msra.mxu0 %v2064
    %2146 = vmatmul.f32.gmra.mxu0 %v2068
    %v2147 = vpop.f32.mrf.mxu0
    %v2148 = vadd.f32 0.0, %v2147
    %2149 = vdwg.mxu0
    %v2150 = vadd.f32 %v2045, %v2088
    %v2151 = vadd.f32 %v2046, %v2108
    %v2152 = vadd.f32 %v2047, %v2128
    %v2153 = vadd.f32 %v2048, %v2148
    %2154 = vrot.lane.b32.xlu0 %v1334, 111
    %v2155 = vpop.permute.xlu0 %2154
    %2156 = vrot.lane.b32.xlu0 %v1335, 111
    %v2157 = vpop.permute.xlu0 %2156
    %2158 = vrot.lane.b32.xlu0 %v1336, 111
    %v2159 = vpop.permute.xlu0 %2158
    %2160 = vrot.lane.b32.xlu0 %v1337, 111
    %v2161 = vpop.permute.xlu0 %2160
    %v2162 = vsel %vm1076, %v2159, %v2161
    %v2163 = vsel %vm1076, %v2157, %v2159
    %v2164 = vsel %vm1076, %v2155, %v2157
    %v2165 = vsel %vm1076, %v2161, %v2155
    %v2166 = vsel %vm69, %v2164, 0.0
    %v2167 = vsel %vm70, %v2163, 0.0
    %v2168 = vsel %vm71, %v2162, 0.0
    %v2169 = vsel %vm72, %v2165, 0.0
    %s2170 = scalar_lea.vmem %s1, 136
    %v2171 = vld [vmem:[%s2170] sm:$0xff]
    %v2173 = vsel %vm285, %v2171, 0
    %2175 = vmatpush.msra.mxu0 0.0
    %2176 = vmatpush.msra.mxu0 0.0
    %2177 = vmatpush.msra.mxu0 0.0
    %2178 = vmatpush.msra.mxu0 0.0
    %2179 = vmatpush.msra.mxu0 0.0
    %2180 = vmatpush.msra.mxu0 0.0
    %2181 = vmatpush.msra.mxu0 0.0
    %2182 = vmatpush.msra.mxu0 0.0
    %2183 = vmatpush.msra.mxu0 0.0
    %2184 = vmatpush.msra.mxu0 0.0
    %2185 = vmatpush.msra.mxu0 0.0
    %2186 = vmatpush.msra.mxu0 0.0
    %2187 = vmatpush.msra.mxu0 0.0
    %2188 = vmatpush.msra.mxu0 0.0
    %2189 = vmatpush.msra.mxu0 0.0
    %2190 = vmatpush.msra.mxu0 %v2166
    %2191 = vmatmul.f32.gmra.mxu0 %v2173
    %v2192 = vpop.f32.mrf.mxu0
    %v2193 = vadd.f32 0.0, %v2192
    %2194 = vdwg.mxu0
    %2195 = vmatpush.msra.mxu0 0.0
    %2196 = vmatpush.msra.mxu0 0.0
    %2197 = vmatpush.msra.mxu0 0.0
    %2198 = vmatpush.msra.mxu0 0.0
    %2199 = vmatpush.msra.mxu0 0.0
    %2200 = vmatpush.msra.mxu0 0.0
    %2201 = vmatpush.msra.mxu0 0.0
    %2202 = vmatpush.msra.mxu0 0.0
    %2203 = vmatpush.msra.mxu0 0.0
    %2204 = vmatpush.msra.mxu0 0.0
    %2205 = vmatpush.msra.mxu0 0.0
    %2206 = vmatpush.msra.mxu0 0.0
    %2207 = vmatpush.msra.mxu0 0.0
    %2208 = vmatpush.msra.mxu0 0.0
    %2209 = vmatpush.msra.mxu0 0.0
    %2210 = vmatpush.msra.mxu0 %v2167
    %2211 = vmatmul.f32.gmra.mxu0 %v2173
    %v2212 = vpop.f32.mrf.mxu0
    %v2213 = vadd.f32 0.0, %v2212
    %2214 = vdwg.mxu0
    %2215 = vmatpush.msra.mxu0 0.0
    %2216 = vmatpush.msra.mxu0 0.0
    %2217 = vmatpush.msra.mxu0 0.0
    %2218 = vmatpush.msra.mxu0 0.0
    %2219 = vmatpush.msra.mxu0 0.0
    %2220 = vmatpush.msra.mxu0 0.0
    %2221 = vmatpush.msra.mxu0 0.0
    %2222 = vmatpush.msra.mxu0 0.0
    %2223 = vmatpush.msra.mxu0 0.0
    %2224 = vmatpush.msra.mxu0 0.0
    %2225 = vmatpush.msra.mxu0 0.0
    %2226 = vmatpush.msra.mxu0 0.0
    %2227 = vmatpush.msra.mxu0 0.0
    %2228 = vmatpush.msra.mxu0 0.0
    %2229 = vmatpush.msra.mxu0 0.0
    %2230 = vmatpush.msra.mxu0 %v2168
    %2231 = vmatmul.f32.gmra.mxu0 %v2173
    %v2232 = vpop.f32.mrf.mxu0
    %v2233 = vadd.f32 0.0, %v2232
    %2234 = vdwg.mxu0
    %2235 = vmatpush.msra.mxu0 0.0
    %2236 = vmatpush.msra.mxu0 0.0
    %2237 = vmatpush.msra.mxu0 0.0
    %2238 = vmatpush.msra.mxu0 0.0
    %2239 = vmatpush.msra.mxu0 0.0
    %2240 = vmatpush.msra.mxu0 0.0
    %2241 = vmatpush.msra.mxu0 0.0
    %2242 = vmatpush.msra.mxu0 0.0
    %2243 = vmatpush.msra.mxu0 0.0
    %2244 = vmatpush.msra.mxu0 0.0
    %2245 = vmatpush.msra.mxu0 0.0
    %2246 = vmatpush.msra.mxu0 0.0
    %2247 = vmatpush.msra.mxu0 0.0
    %2248 = vmatpush.msra.mxu0 0.0
    %2249 = vmatpush.msra.mxu0 0.0
    %2250 = vmatpush.msra.mxu0 %v2169
    %2251 = vmatmul.f32.gmra.mxu0 %v2173
    %v2252 = vpop.f32.mrf.mxu0
    %v2253 = vadd.f32 0.0, %v2252
    %2254 = vdwg.mxu0
    %v2255 = vadd.f32 %v2150, %v2193
    %v2256 = vadd.f32 %v2151, %v2213
    %v2257 = vadd.f32 %v2152, %v2233
    %v2258 = vadd.f32 %v2153, %v2253
    %v2259 = vadd.f32 %v1174, %v2255
    %v2260 = vadd.f32 %v1175, %v2256
    %v2261 = vadd.f32 %v1176, %v2257
    %v2262 = vadd.f32 %v1177, %v2258
    %2263 = vrot.lane.b32.xlu0 %v2255, 2
    %v2264 = vpop.permute.xlu0 %2263
    %2265 = vrot.lane.b32.xlu0 %v2256, 2
    %v2266 = vpop.permute.xlu0 %2265
    %2267 = vrot.lane.b32.xlu0 %v2257, 2
    %v2268 = vpop.permute.xlu0 %2267
    %2269 = vrot.lane.b32.xlu0 %v2258, 2
    %v2270 = vpop.permute.xlu0 %2269
    %v2271 = vsel %vm89, %v2268, %v2270
    %v2272 = vsel %vm89, %v2266, %v2268
    %v2273 = vsel %vm89, %v2264, %v2266
    %v2274 = vsel %vm89, %v2270, %v2264
    %v2275 = vsel %vm45, %v2274, -inf
    %v2276 = vsel %vm46, %v2273, -inf
    %v2277 = vsel %vm47, %v2272, -inf
    %v2278 = vsel %vm48, %v2271, -inf
    %v2279 = vmax.f32 %v2255, %v2275
    %v2280 = vmax.f32 %v2256, %v2276
    %v2281 = vmax.f32 %v2257, %v2277
    %v2282 = vmax.f32 %v2258, %v2278
    %2283 = vrot.lane.b32.xlu0 %v2255, 1
    %v2284 = vpop.permute.xlu0 %2283
    %2285 = vrot.lane.b32.xlu0 %v2256, 1
    %v2286 = vpop.permute.xlu0 %2285
    %2287 = vrot.lane.b32.xlu0 %v2257, 1
    %v2288 = vpop.permute.xlu0 %2287
    %2289 = vrot.lane.b32.xlu0 %v2258, 1
    %v2290 = vpop.permute.xlu0 %2289
    %v2291 = vsel %vm110, %v2288, %v2290
    %v2292 = vsel %vm110, %v2286, %v2288
    %v2293 = vsel %vm110, %v2284, %v2286
    %v2294 = vsel %vm110, %v2290, %v2284
    %v2295 = vsel %vm29, %v2294, -inf
    %v2296 = vsel %vm30, %v2293, -inf
    %v2297 = vsel %vm31, %v2292, -inf
    %v2298 = vsel %vm32, %v2291, -inf
    %v2299 = vmax.f32 %v2279, %v2295
    %v2300 = vmax.f32 %v2280, %v2296
    %v2301 = vmax.f32 %v2281, %v2297
    %v2302 = vmax.f32 %v2282, %v2298
    %2303 = vrot.lane.b32.xlu0 %v2255, 127
    %v2304 = vpop.permute.xlu0 %2303
    %2305 = vrot.lane.b32.xlu0 %v2256, 127
    %v2306 = vpop.permute.xlu0 %2305
    %2307 = vrot.lane.b32.xlu0 %v2257, 127
    %v2308 = vpop.permute.xlu0 %2307
    %2309 = vrot.lane.b32.xlu0 %v2258, 127
    %v2310 = vpop.permute.xlu0 %2309
    %v2311 = vsel %vm131, %v2308, %v2310
    %v2312 = vsel %vm131, %v2306, %v2308
    %v2313 = vsel %vm131, %v2304, %v2306
    %v2314 = vsel %vm131, %v2310, %v2304
    %v2315 = vsel %vm25, %v2313, -inf
    %v2316 = vsel %vm26, %v2312, -inf
    %v2317 = vsel %vm27, %v2311, -inf
    %v2318 = vsel %vm28, %v2314, -inf
    %v2319 = vmax.f32 %v2299, %v2315
    %v2320 = vmax.f32 %v2300, %v2316
    %v2321 = vmax.f32 %v2301, %v2317
    %v2322 = vmax.f32 %v2302, %v2318
    %2323 = vrot.lane.b32.xlu0 %v2255, 126
    %v2324 = vpop.permute.xlu0 %2323
    %2325 = vrot.lane.b32.xlu0 %v2256, 126
    %v2326 = vpop.permute.xlu0 %2325
    %2327 = vrot.lane.b32.xlu0 %v2257, 126
    %v2328 = vpop.permute.xlu0 %2327
    %2329 = vrot.lane.b32.xlu0 %v2258, 126
    %v2330 = vpop.permute.xlu0 %2329
    %v2331 = vsel %vm152, %v2328, %v2330
    %v2332 = vsel %vm152, %v2326, %v2328
    %v2333 = vsel %vm152, %v2324, %v2326
    %v2334 = vsel %vm152, %v2330, %v2324
    %v2335 = vsel %vm41, %v2333, -inf
    %v2336 = vsel %vm42, %v2332, -inf
    %v2337 = vsel %vm43, %v2331, -inf
    %v2338 = vsel %vm44, %v2334, -inf
    %v2339 = vmax.f32 %v2319, %v2335
    %v2340 = vmax.f32 %v2320, %v2336
    %v2341 = vmax.f32 %v2321, %v2337
    %v2342 = vmax.f32 %v2322, %v2338
    %2343 = vrot.lane.b32.xlu0 %v2339, 32
    %v2344 = vpop.permute.xlu0 %2343
    %2345 = vrot.lane.b32.xlu0 %v2340, 32
    %v2346 = vpop.permute.xlu0 %2345
    %2347 = vrot.lane.b32.xlu0 %v2341, 32
    %v2348 = vpop.permute.xlu0 %2347
    %2349 = vrot.lane.b32.xlu0 %v2342, 32
    %v2350 = vpop.permute.xlu0 %2349
    %v2351 = vsel %vm173, %v2348, %v2350
    %v2352 = vsel %vm173, %v2346, %v2348
    %v2353 = vsel %vm173, %v2344, %v2346
    %v2354 = vsel %vm173, %v2350, %v2344
    %v2355 = vsel %vm53, %v2354, -inf
    %v2356 = vsel %vm54, %v2353, -inf
    %v2357 = vsel %vm55, %v2352, -inf
    %v2358 = vsel %vm56, %v2351, -inf
    %v2359 = vmax.f32 %v2339, %v2355
    %v2360 = vmax.f32 %v2340, %v2356
    %v2361 = vmax.f32 %v2341, %v2357
    %v2362 = vmax.f32 %v2342, %v2358
    %2363 = vrot.lane.b32.xlu0 %v2339, 16
    %v2364 = vpop.permute.xlu0 %2363
    %2365 = vrot.lane.b32.xlu0 %v2340, 16
    %v2366 = vpop.permute.xlu0 %2365
    %2367 = vrot.lane.b32.xlu0 %v2341, 16
    %v2368 = vpop.permute.xlu0 %2367
    %2369 = vrot.lane.b32.xlu0 %v2342, 16
    %v2370 = vpop.permute.xlu0 %2369
    %v2371 = vsel %vm194, %v2368, %v2370
    %v2372 = vsel %vm194, %v2366, %v2368
    %v2373 = vsel %vm194, %v2364, %v2366
    %v2374 = vsel %vm194, %v2370, %v2364
    %v2375 = vsel %vm37, %v2374, -inf
    %v2376 = vsel %vm38, %v2373, -inf
    %v2377 = vsel %vm39, %v2372, -inf
    %v2378 = vsel %vm40, %v2371, -inf
    %v2379 = vmax.f32 %v2359, %v2375
    %v2380 = vmax.f32 %v2360, %v2376
    %v2381 = vmax.f32 %v2361, %v2377
    %v2382 = vmax.f32 %v2362, %v2378
    %2383 = vrot.lane.b32.xlu0 %v2339, 112
    %v2384 = vpop.permute.xlu0 %2383
    %2385 = vrot.lane.b32.xlu0 %v2340, 112
    %v2386 = vpop.permute.xlu0 %2385
    %2387 = vrot.lane.b32.xlu0 %v2341, 112
    %v2388 = vpop.permute.xlu0 %2387
    %2389 = vrot.lane.b32.xlu0 %v2342, 112
    %v2390 = vpop.permute.xlu0 %2389
    %v2391 = vsel %vm215, %v2388, %v2390
    %v2392 = vsel %vm215, %v2386, %v2388
    %v2393 = vsel %vm215, %v2384, %v2386
    %v2394 = vsel %vm215, %v2390, %v2384
    %v2395 = vsel %vm33, %v2393, -inf
    %v2396 = vsel %vm34, %v2392, -inf
    %v2397 = vsel %vm35, %v2391, -inf
    %v2398 = vsel %vm36, %v2394, -inf
    %v2399 = vmax.f32 %v2379, %v2395
    %v2400 = vmax.f32 %v2380, %v2396
    %v2401 = vmax.f32 %v2381, %v2397
    %v2402 = vmax.f32 %v2382, %v2398
    %2403 = vrot.lane.b32.xlu0 %v2339, 96
    %v2404 = vpop.permute.xlu0 %2403
    %2405 = vrot.lane.b32.xlu0 %v2340, 96
    %v2406 = vpop.permute.xlu0 %2405
    %2407 = vrot.lane.b32.xlu0 %v2341, 96
    %v2408 = vpop.permute.xlu0 %2407
    %2409 = vrot.lane.b32.xlu0 %v2342, 96
    %v2410 = vpop.permute.xlu0 %2409
    %v2411 = vsel %vm236, %v2408, %v2410
    %v2412 = vsel %vm236, %v2406, %v2408
    %v2413 = vsel %vm236, %v2404, %v2406
    %v2414 = vsel %vm236, %v2410, %v2404
    %v2415 = vsel %vm49, %v2413, -inf
    %v2416 = vsel %vm50, %v2412, -inf
    %v2417 = vsel %vm51, %v2411, -inf
    %v2418 = vsel %vm52, %v2414, -inf
    %v2419 = vmax.f32 %v2399, %v2415
    %v2420 = vmax.f32 %v2400, %v2416
    %v2421 = vmax.f32 %v2401, %v2417
    %v2422 = vmax.f32 %v2402, %v2418
    %2423 = vrot.lane.b32.xlu0 %v2419, 17
    %v2424 = vpop.permute.xlu0 %2423
    %2425 = vrot.lane.b32.xlu0 %v2420, 17
    %v2426 = vpop.permute.xlu0 %2425
    %2427 = vrot.lane.b32.xlu0 %v2421, 17
    %v2428 = vpop.permute.xlu0 %2427
    %2429 = vrot.lane.b32.xlu0 %v2422, 17
    %v2430 = vpop.permute.xlu0 %2429
    %v2431 = vsel %vm257, %v2428, %v2430
    %v2432 = vsel %vm257, %v2426, %v2428
    %v2433 = vsel %vm257, %v2424, %v2426
    %v2434 = vsel %vm257, %v2430, %v2424
    %v2435 = vsel %vm57, %v2434, 0.0
    %v2436 = vsel %vm58, %v2433, 0.0
    %v2437 = vsel %vm59, %v2432, 0.0
    %v2438 = vsel %vm60, %v2431, 0.0
    %s2439 = scalar_lea.vmem %s1, 144
    %v2440 = vld [vmem:[%s2439] sm:$0xff]
    %2441 = vrot.lane.b32.xlu0 %v2419, 16
    %v2442 = vpop.permute.xlu0 %2441
    %2443 = vrot.lane.b32.xlu0 %v2420, 16
    %v2444 = vpop.permute.xlu0 %2443
    %2445 = vrot.lane.b32.xlu0 %v2421, 16
    %v2446 = vpop.permute.xlu0 %2445
    %2447 = vrot.lane.b32.xlu0 %v2422, 16
    %v2448 = vpop.permute.xlu0 %2447
    %v2449 = vsel %vm194, %v2446, %v2448
    %v2450 = vsel %vm194, %v2444, %v2446
    %v2451 = vsel %vm194, %v2442, %v2444
    %v2452 = vsel %vm194, %v2448, %v2442
    %v2453 = vsel %vm37, %v2452, 0.0
    %v2454 = vsel %vm38, %v2451, 0.0
    %v2455 = vsel %vm39, %v2450, 0.0
    %v2456 = vsel %vm40, %v2449, 0.0
    %s2457 = scalar_lea.vmem %s1, 152
    %v2458 = vld [vmem:[%s2457] sm:$0xff]
    %v2460 = vsel %vm285, %v2458, 0
    %2462 = vmatpush.msra.mxu0 0.0
    %2463 = vmatpush.msra.mxu0 0.0
    %2464 = vmatpush.msra.mxu0 0.0
    %2465 = vmatpush.msra.mxu0 0.0
    %2466 = vmatpush.msra.mxu0 0.0
    %2467 = vmatpush.msra.mxu0 0.0
    %2468 = vmatpush.msra.mxu0 0.0
    %2469 = vmatpush.msra.mxu0 0.0
    %2470 = vmatpush.msra.mxu0 0.0
    %2471 = vmatpush.msra.mxu0 0.0
    %2472 = vmatpush.msra.mxu0 0.0
    %2473 = vmatpush.msra.mxu0 0.0
    %2474 = vmatpush.msra.mxu0 0.0
    %2475 = vmatpush.msra.mxu0 0.0
    %2476 = vmatpush.msra.mxu0 0.0
    %2477 = vmatpush.msra.mxu0 %v2453
    %2478 = vmatmul.f32.gmra.mxu0 %v2460
    %v2479 = vpop.f32.mrf.mxu0
    %v2480 = vadd.f32 0.0, %v2479
    %2481 = vdwg.mxu0
    %2482 = vmatpush.msra.mxu0 0.0
    %2483 = vmatpush.msra.mxu0 0.0
    %2484 = vmatpush.msra.mxu0 0.0
    %2485 = vmatpush.msra.mxu0 0.0
    %2486 = vmatpush.msra.mxu0 0.0
    %2487 = vmatpush.msra.mxu0 0.0
    %2488 = vmatpush.msra.mxu0 0.0
    %2489 = vmatpush.msra.mxu0 0.0
    %2490 = vmatpush.msra.mxu0 0.0
    %2491 = vmatpush.msra.mxu0 0.0
    %2492 = vmatpush.msra.mxu0 0.0
    %2493 = vmatpush.msra.mxu0 0.0
    %2494 = vmatpush.msra.mxu0 0.0
    %2495 = vmatpush.msra.mxu0 0.0
    %2496 = vmatpush.msra.mxu0 0.0
    %2497 = vmatpush.msra.mxu0 %v2454
    %2498 = vmatmul.f32.gmra.mxu0 %v2460
    %v2499 = vpop.f32.mrf.mxu0
    %v2500 = vadd.f32 0.0, %v2499
    %2501 = vdwg.mxu0
    %2502 = vmatpush.msra.mxu0 0.0
    %2503 = vmatpush.msra.mxu0 0.0
    %2504 = vmatpush.msra.mxu0 0.0
    %2505 = vmatpush.msra.mxu0 0.0
    %2506 = vmatpush.msra.mxu0 0.0
    %2507 = vmatpush.msra.mxu0 0.0
    %2508 = vmatpush.msra.mxu0 0.0
    %2509 = vmatpush.msra.mxu0 0.0
    %2510 = vmatpush.msra.mxu0 0.0
    %2511 = vmatpush.msra.mxu0 0.0
    %2512 = vmatpush.msra.mxu0 0.0
    %2513 = vmatpush.msra.mxu0 0.0
    %2514 = vmatpush.msra.mxu0 0.0
    %2515 = vmatpush.msra.mxu0 0.0
    %2516 = vmatpush.msra.mxu0 0.0
    %2517 = vmatpush.msra.mxu0 %v2455
    %2518 = vmatmul.f32.gmra.mxu0 %v2460
    %v2519 = vpop.f32.mrf.mxu0
    %v2520 = vadd.f32 0.0, %v2519
    %2521 = vdwg.mxu0
    %2522 = vmatpush.msra.mxu0 0.0
    %2523 = vmatpush.msra.mxu0 0.0
    %2524 = vmatpush.msra.mxu0 0.0
    %2525 = vmatpush.msra.mxu0 0.0
    %2526 = vmatpush.msra.mxu0 0.0
    %2527 = vmatpush.msra.mxu0 0.0
    %2528 = vmatpush.msra.mxu0 0.0
    %2529 = vmatpush.msra.mxu0 0.0
    %2530 = vmatpush.msra.mxu0 0.0
    %2531 = vmatpush.msra.mxu0 0.0
    %2532 = vmatpush.msra.mxu0 0.0
    %2533 = vmatpush.msra.mxu0 0.0
    %2534 = vmatpush.msra.mxu0 0.0
    %2535 = vmatpush.msra.mxu0 0.0
    %2536 = vmatpush.msra.mxu0 0.0
    %2537 = vmatpush.msra.mxu0 %v2456
    %2538 = vmatmul.f32.gmra.mxu0 %v2460
    %v2539 = vpop.f32.mrf.mxu0
    %v2540 = vadd.f32 0.0, %v2539
    %2541 = vdwg.mxu0
    %v2543 = vsel %vm285, %v2440, 0
    %2545 = vmatpush.msra.mxu0 0.0
    %2546 = vmatpush.msra.mxu0 0.0
    %2547 = vmatpush.msra.mxu0 0.0
    %2548 = vmatpush.msra.mxu0 0.0
    %2549 = vmatpush.msra.mxu0 0.0
    %2550 = vmatpush.msra.mxu0 0.0
    %2551 = vmatpush.msra.mxu0 0.0
    %2552 = vmatpush.msra.mxu0 0.0
    %2553 = vmatpush.msra.mxu0 0.0
    %2554 = vmatpush.msra.mxu0 0.0
    %2555 = vmatpush.msra.mxu0 0.0
    %2556 = vmatpush.msra.mxu0 0.0
    %2557 = vmatpush.msra.mxu0 0.0
    %2558 = vmatpush.msra.mxu0 0.0
    %2559 = vmatpush.msra.mxu0 0.0
    %2560 = vmatpush.msra.mxu0 %v2435
    %2561 = vmatmul.f32.gmra.mxu0 %v2543
    %v2562 = vpop.f32.mrf.mxu0
    %v2563 = vadd.f32 %v2480, %v2562
    %2564 = vdwg.mxu0
    %2565 = vmatpush.msra.mxu0 0.0
    %2566 = vmatpush.msra.mxu0 0.0
    %2567 = vmatpush.msra.mxu0 0.0
    %2568 = vmatpush.msra.mxu0 0.0
    %2569 = vmatpush.msra.mxu0 0.0
    %2570 = vmatpush.msra.mxu0 0.0
    %2571 = vmatpush.msra.mxu0 0.0
    %2572 = vmatpush.msra.mxu0 0.0
    %2573 = vmatpush.msra.mxu0 0.0
    %2574 = vmatpush.msra.mxu0 0.0
    %2575 = vmatpush.msra.mxu0 0.0
    %2576 = vmatpush.msra.mxu0 0.0
    %2577 = vmatpush.msra.mxu0 0.0
    %2578 = vmatpush.msra.mxu0 0.0
    %2579 = vmatpush.msra.mxu0 0.0
    %2580 = vmatpush.msra.mxu0 %v2436
    %2581 = vmatmul.f32.gmra.mxu0 %v2543
    %v2582 = vpop.f32.mrf.mxu0
    %v2583 = vadd.f32 %v2500, %v2582
    %2584 = vdwg.mxu0
    %2585 = vmatpush.msra.mxu0 0.0
    %2586 = vmatpush.msra.mxu0 0.0
    %2587 = vmatpush.msra.mxu0 0.0
    %2588 = vmatpush.msra.mxu0 0.0
    %2589 = vmatpush.msra.mxu0 0.0
    %2590 = vmatpush.msra.mxu0 0.0
    %2591 = vmatpush.msra.mxu0 0.0
    %2592 = vmatpush.msra.mxu0 0.0
    %2593 = vmatpush.msra.mxu0 0.0
    %2594 = vmatpush.msra.mxu0 0.0
    %2595 = vmatpush.msra.mxu0 0.0
    %2596 = vmatpush.msra.mxu0 0.0
    %2597 = vmatpush.msra.mxu0 0.0
    %2598 = vmatpush.msra.mxu0 0.0
    %2599 = vmatpush.msra.mxu0 0.0
    %2600 = vmatpush.msra.mxu0 %v2437
    %2601 = vmatmul.f32.gmra.mxu0 %v2543
    %v2602 = vpop.f32.mrf.mxu0
    %v2603 = vadd.f32 %v2520, %v2602
    %2604 = vdwg.mxu0
    %2605 = vmatpush.msra.mxu0 0.0
    %2606 = vmatpush.msra.mxu0 0.0
    %2607 = vmatpush.msra.mxu0 0.0
    %2608 = vmatpush.msra.mxu0 0.0
    %2609 = vmatpush.msra.mxu0 0.0
    %2610 = vmatpush.msra.mxu0 0.0
    %2611 = vmatpush.msra.mxu0 0.0
    %2612 = vmatpush.msra.mxu0 0.0
    %2613 = vmatpush.msra.mxu0 0.0
    %2614 = vmatpush.msra.mxu0 0.0
    %2615 = vmatpush.msra.mxu0 0.0
    %2616 = vmatpush.msra.mxu0 0.0
    %2617 = vmatpush.msra.mxu0 0.0
    %2618 = vmatpush.msra.mxu0 0.0
    %2619 = vmatpush.msra.mxu0 0.0
    %2620 = vmatpush.msra.mxu0 %v2438
    %2621 = vmatmul.f32.gmra.mxu0 %v2543
    %v2622 = vpop.f32.mrf.mxu0
    %v2623 = vadd.f32 %v2540, %v2622
    %2624 = vdwg.mxu0
    %2625 = vrot.lane.b32.xlu0 %v2419, 15
    %v2626 = vpop.permute.xlu0 %2625
    %2627 = vrot.lane.b32.xlu0 %v2420, 15
    %v2628 = vpop.permute.xlu0 %2627
    %2629 = vrot.lane.b32.xlu0 %v2421, 15
    %v2630 = vpop.permute.xlu0 %2629
    %2631 = vrot.lane.b32.xlu0 %v2422, 15
    %v2632 = vpop.permute.xlu0 %2631
    %v2633 = vsel %vm460, %v2630, %v2632
    %v2634 = vsel %vm460, %v2628, %v2630
    %v2635 = vsel %vm460, %v2626, %v2628
    %v2636 = vsel %vm460, %v2632, %v2626
    %v2637 = vsel %vm61, %v2636, 0.0
    %v2638 = vsel %vm62, %v2635, 0.0
    %v2639 = vsel %vm63, %v2634, 0.0
    %v2640 = vsel %vm64, %v2633, 0.0
    %s2641 = scalar_lea.vmem %s1, 160
    %v2642 = vld [vmem:[%s2641] sm:$0xff]
    %v2644 = vsel %vm285, %v2642, 0
    %2646 = vmatpush.msra.mxu0 0.0
    %2647 = vmatpush.msra.mxu0 0.0
    %2648 = vmatpush.msra.mxu0 0.0
    %2649 = vmatpush.msra.mxu0 0.0
    %2650 = vmatpush.msra.mxu0 0.0
    %2651 = vmatpush.msra.mxu0 0.0
    %2652 = vmatpush.msra.mxu0 0.0
    %2653 = vmatpush.msra.mxu0 0.0
    %2654 = vmatpush.msra.mxu0 0.0
    %2655 = vmatpush.msra.mxu0 0.0
    %2656 = vmatpush.msra.mxu0 0.0
    %2657 = vmatpush.msra.mxu0 0.0
    %2658 = vmatpush.msra.mxu0 0.0
    %2659 = vmatpush.msra.mxu0 0.0
    %2660 = vmatpush.msra.mxu0 0.0
    %2661 = vmatpush.msra.mxu0 %v2637
    %2662 = vmatmul.f32.gmra.mxu0 %v2644
    %v2663 = vpop.f32.mrf.mxu0
    %v2664 = vadd.f32 0.0, %v2663
    %2665 = vdwg.mxu0
    %2666 = vmatpush.msra.mxu0 0.0
    %2667 = vmatpush.msra.mxu0 0.0
    %2668 = vmatpush.msra.mxu0 0.0
    %2669 = vmatpush.msra.mxu0 0.0
    %2670 = vmatpush.msra.mxu0 0.0
    %2671 = vmatpush.msra.mxu0 0.0
    %2672 = vmatpush.msra.mxu0 0.0
    %2673 = vmatpush.msra.mxu0 0.0
    %2674 = vmatpush.msra.mxu0 0.0
    %2675 = vmatpush.msra.mxu0 0.0
    %2676 = vmatpush.msra.mxu0 0.0
    %2677 = vmatpush.msra.mxu0 0.0
    %2678 = vmatpush.msra.mxu0 0.0
    %2679 = vmatpush.msra.mxu0 0.0
    %2680 = vmatpush.msra.mxu0 0.0
    %2681 = vmatpush.msra.mxu0 %v2638
    %2682 = vmatmul.f32.gmra.mxu0 %v2644
    %v2683 = vpop.f32.mrf.mxu0
    %v2684 = vadd.f32 0.0, %v2683
    %2685 = vdwg.mxu0
    %2686 = vmatpush.msra.mxu0 0.0
    %2687 = vmatpush.msra.mxu0 0.0
    %2688 = vmatpush.msra.mxu0 0.0
    %2689 = vmatpush.msra.mxu0 0.0
    %2690 = vmatpush.msra.mxu0 0.0
    %2691 = vmatpush.msra.mxu0 0.0
    %2692 = vmatpush.msra.mxu0 0.0
    %2693 = vmatpush.msra.mxu0 0.0
    %2694 = vmatpush.msra.mxu0 0.0
    %2695 = vmatpush.msra.mxu0 0.0
    %2696 = vmatpush.msra.mxu0 0.0
    %2697 = vmatpush.msra.mxu0 0.0
    %2698 = vmatpush.msra.mxu0 0.0
    %2699 = vmatpush.msra.mxu0 0.0
    %2700 = vmatpush.msra.mxu0 0.0
    %2701 = vmatpush.msra.mxu0 %v2639
    %2702 = vmatmul.f32.gmra.mxu0 %v2644
    %v2703 = vpop.f32.mrf.mxu0
    %v2704 = vadd.f32 0.0, %v2703
    %2705 = vdwg.mxu0
    %2706 = vmatpush.msra.mxu0 0.0
    %2707 = vmatpush.msra.mxu0 0.0
    %2708 = vmatpush.msra.mxu0 0.0
    %2709 = vmatpush.msra.mxu0 0.0
    %2710 = vmatpush.msra.mxu0 0.0
    %2711 = vmatpush.msra.mxu0 0.0
    %2712 = vmatpush.msra.mxu0 0.0
    %2713 = vmatpush.msra.mxu0 0.0
    %2714 = vmatpush.msra.mxu0 0.0
    %2715 = vmatpush.msra.mxu0 0.0
    %2716 = vmatpush.msra.mxu0 0.0
    %2717 = vmatpush.msra.mxu0 0.0
    %2718 = vmatpush.msra.mxu0 0.0
    %2719 = vmatpush.msra.mxu0 0.0
    %2720 = vmatpush.msra.mxu0 0.0
    %2721 = vmatpush.msra.mxu0 %v2640
    %2722 = vmatmul.f32.gmra.mxu0 %v2644
    %v2723 = vpop.f32.mrf.mxu0
    %v2724 = vadd.f32 0.0, %v2723
    %2725 = vdwg.mxu0
    %v2726 = vadd.f32 %v2563, %v2664
    %v2727 = vadd.f32 %v2583, %v2684
    %v2728 = vadd.f32 %v2603, %v2704
    %v2729 = vadd.f32 %v2623, %v2724
    %2730 = vrot.lane.b32.xlu0 %v2419, 1
    %v2731 = vpop.permute.xlu0 %2730
    %2732 = vrot.lane.b32.xlu0 %v2420, 1
    %v2733 = vpop.permute.xlu0 %2732
    %2734 = vrot.lane.b32.xlu0 %v2421, 1
    %v2735 = vpop.permute.xlu0 %2734
    %2736 = vrot.lane.b32.xlu0 %v2422, 1
    %v2737 = vpop.permute.xlu0 %2736
    %v2738 = vsel %vm110, %v2735, %v2737
    %v2739 = vsel %vm110, %v2733, %v2735
    %v2740 = vsel %vm110, %v2731, %v2733
    %v2741 = vsel %vm110, %v2737, %v2731
    %v2742 = vsel %vm29, %v2741, 0.0
    %v2743 = vsel %vm30, %v2740, 0.0
    %v2744 = vsel %vm31, %v2739, 0.0
    %v2745 = vsel %vm32, %v2738, 0.0
    %s2746 = scalar_lea.vmem %s1, 168
    %v2747 = vld [vmem:[%s2746] sm:$0xff]
    %v2749 = vsel %vm285, %v2747, 0
    %2751 = vmatpush.msra.mxu0 0.0
    %2752 = vmatpush.msra.mxu0 0.0
    %2753 = vmatpush.msra.mxu0 0.0
    %2754 = vmatpush.msra.mxu0 0.0
    %2755 = vmatpush.msra.mxu0 0.0
    %2756 = vmatpush.msra.mxu0 0.0
    %2757 = vmatpush.msra.mxu0 0.0
    %2758 = vmatpush.msra.mxu0 0.0
    %2759 = vmatpush.msra.mxu0 0.0
    %2760 = vmatpush.msra.mxu0 0.0
    %2761 = vmatpush.msra.mxu0 0.0
    %2762 = vmatpush.msra.mxu0 0.0
    %2763 = vmatpush.msra.mxu0 0.0
    %2764 = vmatpush.msra.mxu0 0.0
    %2765 = vmatpush.msra.mxu0 0.0
    %2766 = vmatpush.msra.mxu0 %v2742
    %2767 = vmatmul.f32.gmra.mxu0 %v2749
    %v2768 = vpop.f32.mrf.mxu0
    %v2769 = vadd.f32 0.0, %v2768
    %2770 = vdwg.mxu0
    %2771 = vmatpush.msra.mxu0 0.0
    %2772 = vmatpush.msra.mxu0 0.0
    %2773 = vmatpush.msra.mxu0 0.0
    %2774 = vmatpush.msra.mxu0 0.0
    %2775 = vmatpush.msra.mxu0 0.0
    %2776 = vmatpush.msra.mxu0 0.0
    %2777 = vmatpush.msra.mxu0 0.0
    %2778 = vmatpush.msra.mxu0 0.0
    %2779 = vmatpush.msra.mxu0 0.0
    %2780 = vmatpush.msra.mxu0 0.0
    %2781 = vmatpush.msra.mxu0 0.0
    %2782 = vmatpush.msra.mxu0 0.0
    %2783 = vmatpush.msra.mxu0 0.0
    %2784 = vmatpush.msra.mxu0 0.0
    %2785 = vmatpush.msra.mxu0 0.0
    %2786 = vmatpush.msra.mxu0 %v2743
    %2787 = vmatmul.f32.gmra.mxu0 %v2749
    %v2788 = vpop.f32.mrf.mxu0
    %v2789 = vadd.f32 0.0, %v2788
    %2790 = vdwg.mxu0
    %2791 = vmatpush.msra.mxu0 0.0
    %2792 = vmatpush.msra.mxu0 0.0
    %2793 = vmatpush.msra.mxu0 0.0
    %2794 = vmatpush.msra.mxu0 0.0
    %2795 = vmatpush.msra.mxu0 0.0
    %2796 = vmatpush.msra.mxu0 0.0
    %2797 = vmatpush.msra.mxu0 0.0
    %2798 = vmatpush.msra.mxu0 0.0
    %2799 = vmatpush.msra.mxu0 0.0
    %2800 = vmatpush.msra.mxu0 0.0
    %2801 = vmatpush.msra.mxu0 0.0
    %2802 = vmatpush.msra.mxu0 0.0
    %2803 = vmatpush.msra.mxu0 0.0
    %2804 = vmatpush.msra.mxu0 0.0
    %2805 = vmatpush.msra.mxu0 0.0
    %2806 = vmatpush.msra.mxu0 %v2744
    %2807 = vmatmul.f32.gmra.mxu0 %v2749
    %v2808 = vpop.f32.mrf.mxu0
    %v2809 = vadd.f32 0.0, %v2808
    %2810 = vdwg.mxu0
    %2811 = vmatpush.msra.mxu0 0.0
    %2812 = vmatpush.msra.mxu0 0.0
    %2813 = vmatpush.msra.mxu0 0.0
    %2814 = vmatpush.msra.mxu0 0.0
    %2815 = vmatpush.msra.mxu0 0.0
    %2816 = vmatpush.msra.mxu0 0.0
    %2817 = vmatpush.msra.mxu0 0.0
    %2818 = vmatpush.msra.mxu0 0.0
    %2819 = vmatpush.msra.mxu0 0.0
    %2820 = vmatpush.msra.mxu0 0.0
    %2821 = vmatpush.msra.mxu0 0.0
    %2822 = vmatpush.msra.mxu0 0.0
    %2823 = vmatpush.msra.mxu0 0.0
    %2824 = vmatpush.msra.mxu0 0.0
    %2825 = vmatpush.msra.mxu0 0.0
    %2826 = vmatpush.msra.mxu0 %v2745
    %2827 = vmatmul.f32.gmra.mxu0 %v2749
    %v2828 = vpop.f32.mrf.mxu0
    %v2829 = vadd.f32 0.0, %v2828
    %2830 = vdwg.mxu0
    %v2831 = vadd.f32 %v2726, %v2769
    %v2832 = vadd.f32 %v2727, %v2789
    %v2833 = vadd.f32 %v2728, %v2809
    %v2834 = vadd.f32 %v2729, %v2829
    %s2835 = scalar_lea.vmem %s1, 176
    %v2836 = vld [vmem:[%s2835] sm:$0xff]
    %v2838 = vsel %vm285, %v2836, 0
    %2840 = vmatpush.msra.mxu0 0.0
    %2841 = vmatpush.msra.mxu0 0.0
    %2842 = vmatpush.msra.mxu0 0.0
    %2843 = vmatpush.msra.mxu0 0.0
    %2844 = vmatpush.msra.mxu0 0.0
    %2845 = vmatpush.msra.mxu0 0.0
    %2846 = vmatpush.msra.mxu0 0.0
    %2847 = vmatpush.msra.mxu0 0.0
    %2848 = vmatpush.msra.mxu0 0.0
    %2849 = vmatpush.msra.mxu0 0.0
    %2850 = vmatpush.msra.mxu0 0.0
    %2851 = vmatpush.msra.mxu0 0.0
    %2852 = vmatpush.msra.mxu0 0.0
    %2853 = vmatpush.msra.mxu0 0.0
    %2854 = vmatpush.msra.mxu0 0.0
    %2855 = vmatpush.msra.mxu0 %v2419
    %2856 = vmatmul.f32.gmra.mxu0 %v2838
    %v2857 = vpop.f32.mrf.mxu0
    %v2858 = vadd.f32 0.0, %v2857
    %2859 = vdwg.mxu0
    %2860 = vmatpush.msra.mxu0 0.0
    %2861 = vmatpush.msra.mxu0 0.0
    %2862 = vmatpush.msra.mxu0 0.0
    %2863 = vmatpush.msra.mxu0 0.0
    %2864 = vmatpush.msra.mxu0 0.0
    %2865 = vmatpush.msra.mxu0 0.0
    %2866 = vmatpush.msra.mxu0 0.0
    %2867 = vmatpush.msra.mxu0 0.0
    %2868 = vmatpush.msra.mxu0 0.0
    %2869 = vmatpush.msra.mxu0 0.0
    %2870 = vmatpush.msra.mxu0 0.0
    %2871 = vmatpush.msra.mxu0 0.0
    %2872 = vmatpush.msra.mxu0 0.0
    %2873 = vmatpush.msra.mxu0 0.0
    %2874 = vmatpush.msra.mxu0 0.0
    %2875 = vmatpush.msra.mxu0 %v2420
    %2876 = vmatmul.f32.gmra.mxu0 %v2838
    %v2877 = vpop.f32.mrf.mxu0
    %v2878 = vadd.f32 0.0, %v2877
    %2879 = vdwg.mxu0
    %2880 = vmatpush.msra.mxu0 0.0
    %2881 = vmatpush.msra.mxu0 0.0
    %2882 = vmatpush.msra.mxu0 0.0
    %2883 = vmatpush.msra.mxu0 0.0
    %2884 = vmatpush.msra.mxu0 0.0
    %2885 = vmatpush.msra.mxu0 0.0
    %2886 = vmatpush.msra.mxu0 0.0
    %2887 = vmatpush.msra.mxu0 0.0
    %2888 = vmatpush.msra.mxu0 0.0
    %2889 = vmatpush.msra.mxu0 0.0
    %2890 = vmatpush.msra.mxu0 0.0
    %2891 = vmatpush.msra.mxu0 0.0
    %2892 = vmatpush.msra.mxu0 0.0
    %2893 = vmatpush.msra.mxu0 0.0
    %2894 = vmatpush.msra.mxu0 0.0
    %2895 = vmatpush.msra.mxu0 %v2421
    %2896 = vmatmul.f32.gmra.mxu0 %v2838
    %v2897 = vpop.f32.mrf.mxu0
    %v2898 = vadd.f32 0.0, %v2897
    %2899 = vdwg.mxu0
    %2900 = vmatpush.msra.mxu0 0.0
    %2901 = vmatpush.msra.mxu0 0.0
    %2902 = vmatpush.msra.mxu0 0.0
    %2903 = vmatpush.msra.mxu0 0.0
    %2904 = vmatpush.msra.mxu0 0.0
    %2905 = vmatpush.msra.mxu0 0.0
    %2906 = vmatpush.msra.mxu0 0.0
    %2907 = vmatpush.msra.mxu0 0.0
    %2908 = vmatpush.msra.mxu0 0.0
    %2909 = vmatpush.msra.mxu0 0.0
    %2910 = vmatpush.msra.mxu0 0.0
    %2911 = vmatpush.msra.mxu0 0.0
    %2912 = vmatpush.msra.mxu0 0.0
    %2913 = vmatpush.msra.mxu0 0.0
    %2914 = vmatpush.msra.mxu0 0.0
    %2915 = vmatpush.msra.mxu0 %v2422
    %2916 = vmatmul.f32.gmra.mxu0 %v2838
    %v2917 = vpop.f32.mrf.mxu0
    %v2918 = vadd.f32 0.0, %v2917
    %2919 = vdwg.mxu0
    %v2920 = vadd.f32 %v2831, %v2858
    %v2921 = vadd.f32 %v2832, %v2878
    %v2922 = vadd.f32 %v2833, %v2898
    %v2923 = vadd.f32 %v2834, %v2918
    %2924 = vrot.lane.b32.xlu0 %v2419, 127
    %v2925 = vpop.permute.xlu0 %2924
    %2926 = vrot.lane.b32.xlu0 %v2420, 127
    %v2927 = vpop.permute.xlu0 %2926
    %2928 = vrot.lane.b32.xlu0 %v2421, 127
    %v2929 = vpop.permute.xlu0 %2928
    %2930 = vrot.lane.b32.xlu0 %v2422, 127
    %v2931 = vpop.permute.xlu0 %2930
    %v2932 = vsel %vm131, %v2929, %v2931
    %v2933 = vsel %vm131, %v2927, %v2929
    %v2934 = vsel %vm131, %v2925, %v2927
    %v2935 = vsel %vm131, %v2931, %v2925
    %v2936 = vsel %vm25, %v2934, 0.0
    %v2937 = vsel %vm26, %v2933, 0.0
    %v2938 = vsel %vm27, %v2932, 0.0
    %v2939 = vsel %vm28, %v2935, 0.0
    %s2940 = scalar_lea.vmem %s1, 184
    %v2941 = vld [vmem:[%s2940] sm:$0xff]
    %v2943 = vsel %vm285, %v2941, 0
    %2945 = vmatpush.msra.mxu0 0.0
    %2946 = vmatpush.msra.mxu0 0.0
    %2947 = vmatpush.msra.mxu0 0.0
    %2948 = vmatpush.msra.mxu0 0.0
    %2949 = vmatpush.msra.mxu0 0.0
    %2950 = vmatpush.msra.mxu0 0.0
    %2951 = vmatpush.msra.mxu0 0.0
    %2952 = vmatpush.msra.mxu0 0.0
    %2953 = vmatpush.msra.mxu0 0.0
    %2954 = vmatpush.msra.mxu0 0.0
    %2955 = vmatpush.msra.mxu0 0.0
    %2956 = vmatpush.msra.mxu0 0.0
    %2957 = vmatpush.msra.mxu0 0.0
    %2958 = vmatpush.msra.mxu0 0.0
    %2959 = vmatpush.msra.mxu0 0.0
    %2960 = vmatpush.msra.mxu0 %v2936
    %2961 = vmatmul.f32.gmra.mxu0 %v2943
    %v2962 = vpop.f32.mrf.mxu0
    %v2963 = vadd.f32 0.0, %v2962
    %2964 = vdwg.mxu0
    %2965 = vmatpush.msra.mxu0 0.0
    %2966 = vmatpush.msra.mxu0 0.0
    %2967 = vmatpush.msra.mxu0 0.0
    %2968 = vmatpush.msra.mxu0 0.0
    %2969 = vmatpush.msra.mxu0 0.0
    %2970 = vmatpush.msra.mxu0 0.0
    %2971 = vmatpush.msra.mxu0 0.0
    %2972 = vmatpush.msra.mxu0 0.0
    %2973 = vmatpush.msra.mxu0 0.0
    %2974 = vmatpush.msra.mxu0 0.0
    %2975 = vmatpush.msra.mxu0 0.0
    %2976 = vmatpush.msra.mxu0 0.0
    %2977 = vmatpush.msra.mxu0 0.0
    %2978 = vmatpush.msra.mxu0 0.0
    %2979 = vmatpush.msra.mxu0 0.0
    %2980 = vmatpush.msra.mxu0 %v2937
    %2981 = vmatmul.f32.gmra.mxu0 %v2943
    %v2982 = vpop.f32.mrf.mxu0
    %v2983 = vadd.f32 0.0, %v2982
    %2984 = vdwg.mxu0
    %2985 = vmatpush.msra.mxu0 0.0
    %2986 = vmatpush.msra.mxu0 0.0
    %2987 = vmatpush.msra.mxu0 0.0
    %2988 = vmatpush.msra.mxu0 0.0
    %2989 = vmatpush.msra.mxu0 0.0
    %2990 = vmatpush.msra.mxu0 0.0
    %2991 = vmatpush.msra.mxu0 0.0
    %2992 = vmatpush.msra.mxu0 0.0
    %2993 = vmatpush.msra.mxu0 0.0
    %2994 = vmatpush.msra.mxu0 0.0
    %2995 = vmatpush.msra.mxu0 0.0
    %2996 = vmatpush.msra.mxu0 0.0
    %2997 = vmatpush.msra.mxu0 0.0
    %2998 = vmatpush.msra.mxu0 0.0
    %2999 = vmatpush.msra.mxu0 0.0
    %3000 = vmatpush.msra.mxu0 %v2938
    %3001 = vmatmul.f32.gmra.mxu0 %v2943
    %v3002 = vpop.f32.mrf.mxu0
    %v3003 = vadd.f32 0.0, %v3002
    %3004 = vdwg.mxu0
    %3005 = vmatpush.msra.mxu0 0.0
    %3006 = vmatpush.msra.mxu0 0.0
    %3007 = vmatpush.msra.mxu0 0.0
    %3008 = vmatpush.msra.mxu0 0.0
    %3009 = vmatpush.msra.mxu0 0.0
    %3010 = vmatpush.msra.mxu0 0.0
    %3011 = vmatpush.msra.mxu0 0.0
    %3012 = vmatpush.msra.mxu0 0.0
    %3013 = vmatpush.msra.mxu0 0.0
    %3014 = vmatpush.msra.mxu0 0.0
    %3015 = vmatpush.msra.mxu0 0.0
    %3016 = vmatpush.msra.mxu0 0.0
    %3017 = vmatpush.msra.mxu0 0.0
    %3018 = vmatpush.msra.mxu0 0.0
    %3019 = vmatpush.msra.mxu0 0.0
    %3020 = vmatpush.msra.mxu0 %v2939
    %3021 = vmatmul.f32.gmra.mxu0 %v2943
    %v3022 = vpop.f32.mrf.mxu0
    %v3023 = vadd.f32 0.0, %v3022
    %3024 = vdwg.mxu0
    %v3025 = vadd.f32 %v2920, %v2963
    %v3026 = vadd.f32 %v2921, %v2983
    %v3027 = vadd.f32 %v2922, %v3003
    %v3028 = vadd.f32 %v2923, %v3023
    %3029 = vrot.lane.b32.xlu0 %v2419, 113
    %v3030 = vpop.permute.xlu0 %3029
    %3031 = vrot.lane.b32.xlu0 %v2420, 113
    %v3032 = vpop.permute.xlu0 %3031
    %3033 = vrot.lane.b32.xlu0 %v2421, 113
    %v3034 = vpop.permute.xlu0 %3033
    %3035 = vrot.lane.b32.xlu0 %v2422, 113
    %v3036 = vpop.permute.xlu0 %3035
    %v3037 = vsel %vm865, %v3034, %v3036
    %v3038 = vsel %vm865, %v3032, %v3034
    %v3039 = vsel %vm865, %v3030, %v3032
    %v3040 = vsel %vm865, %v3036, %v3030
    %v3041 = vsel %vm65, %v3039, 0.0
    %v3042 = vsel %vm66, %v3038, 0.0
    %v3043 = vsel %vm67, %v3037, 0.0
    %v3044 = vsel %vm68, %v3040, 0.0
    %s3045 = scalar_lea.vmem %s1, 192
    %v3046 = vld [vmem:[%s3045] sm:$0xff]
    %v3048 = vsel %vm285, %v3046, 0
    %3050 = vmatpush.msra.mxu0 0.0
    %3051 = vmatpush.msra.mxu0 0.0
    %3052 = vmatpush.msra.mxu0 0.0
    %3053 = vmatpush.msra.mxu0 0.0
    %3054 = vmatpush.msra.mxu0 0.0
    %3055 = vmatpush.msra.mxu0 0.0
    %3056 = vmatpush.msra.mxu0 0.0
    %3057 = vmatpush.msra.mxu0 0.0
    %3058 = vmatpush.msra.mxu0 0.0
    %3059 = vmatpush.msra.mxu0 0.0
    %3060 = vmatpush.msra.mxu0 0.0
    %3061 = vmatpush.msra.mxu0 0.0
    %3062 = vmatpush.msra.mxu0 0.0
    %3063 = vmatpush.msra.mxu0 0.0
    %3064 = vmatpush.msra.mxu0 0.0
    %3065 = vmatpush.msra.mxu0 %v3041
    %3066 = vmatmul.f32.gmra.mxu0 %v3048
    %v3067 = vpop.f32.mrf.mxu0
    %v3068 = vadd.f32 0.0, %v3067
    %3069 = vdwg.mxu0
    %3070 = vmatpush.msra.mxu0 0.0
    %3071 = vmatpush.msra.mxu0 0.0
    %3072 = vmatpush.msra.mxu0 0.0
    %3073 = vmatpush.msra.mxu0 0.0
    %3074 = vmatpush.msra.mxu0 0.0
    %3075 = vmatpush.msra.mxu0 0.0
    %3076 = vmatpush.msra.mxu0 0.0
    %3077 = vmatpush.msra.mxu0 0.0
    %3078 = vmatpush.msra.mxu0 0.0
    %3079 = vmatpush.msra.mxu0 0.0
    %3080 = vmatpush.msra.mxu0 0.0
    %3081 = vmatpush.msra.mxu0 0.0
    %3082 = vmatpush.msra.mxu0 0.0
    %3083 = vmatpush.msra.mxu0 0.0
    %3084 = vmatpush.msra.mxu0 0.0
    %3085 = vmatpush.msra.mxu0 %v3042
    %3086 = vmatmul.f32.gmra.mxu0 %v3048
    %v3087 = vpop.f32.mrf.mxu0
    %v3088 = vadd.f32 0.0, %v3087
    %3089 = vdwg.mxu0
    %3090 = vmatpush.msra.mxu0 0.0
    %3091 = vmatpush.msra.mxu0 0.0
    %3092 = vmatpush.msra.mxu0 0.0
    %3093 = vmatpush.msra.mxu0 0.0
    %3094 = vmatpush.msra.mxu0 0.0
    %3095 = vmatpush.msra.mxu0 0.0
    %3096 = vmatpush.msra.mxu0 0.0
    %3097 = vmatpush.msra.mxu0 0.0
    %3098 = vmatpush.msra.mxu0 0.0
    %3099 = vmatpush.msra.mxu0 0.0
    %3100 = vmatpush.msra.mxu0 0.0
    %3101 = vmatpush.msra.mxu0 0.0
    %3102 = vmatpush.msra.mxu0 0.0
    %3103 = vmatpush.msra.mxu0 0.0
    %3104 = vmatpush.msra.mxu0 0.0
    %3105 = vmatpush.msra.mxu0 %v3043
    %3106 = vmatmul.f32.gmra.mxu0 %v3048
    %v3107 = vpop.f32.mrf.mxu0
    %v3108 = vadd.f32 0.0, %v3107
    %3109 = vdwg.mxu0
    %3110 = vmatpush.msra.mxu0 0.0
    %3111 = vmatpush.msra.mxu0 0.0
    %3112 = vmatpush.msra.mxu0 0.0
    %3113 = vmatpush.msra.mxu0 0.0
    %3114 = vmatpush.msra.mxu0 0.0
    %3115 = vmatpush.msra.mxu0 0.0
    %3116 = vmatpush.msra.mxu0 0.0
    %3117 = vmatpush.msra.mxu0 0.0
    %3118 = vmatpush.msra.mxu0 0.0
    %3119 = vmatpush.msra.mxu0 0.0
    %3120 = vmatpush.msra.mxu0 0.0
    %3121 = vmatpush.msra.mxu0 0.0
    %3122 = vmatpush.msra.mxu0 0.0
    %3123 = vmatpush.msra.mxu0 0.0
    %3124 = vmatpush.msra.mxu0 0.0
    %3125 = vmatpush.msra.mxu0 %v3044
    %3126 = vmatmul.f32.gmra.mxu0 %v3048
    %v3127 = vpop.f32.mrf.mxu0
    %v3128 = vadd.f32 0.0, %v3127
    %3129 = vdwg.mxu0
    %v3130 = vadd.f32 %v3025, %v3068
    %v3131 = vadd.f32 %v3026, %v3088
    %v3132 = vadd.f32 %v3027, %v3108
    %v3133 = vadd.f32 %v3028, %v3128
    %3134 = vrot.lane.b32.xlu0 %v2419, 112
    %v3135 = vpop.permute.xlu0 %3134
    %3136 = vrot.lane.b32.xlu0 %v2420, 112
    %v3137 = vpop.permute.xlu0 %3136
    %3138 = vrot.lane.b32.xlu0 %v2421, 112
    %v3139 = vpop.permute.xlu0 %3138
    %3140 = vrot.lane.b32.xlu0 %v2422, 112
    %v3141 = vpop.permute.xlu0 %3140
    %v3142 = vsel %vm215, %v3139, %v3141
    %v3143 = vsel %vm215, %v3137, %v3139
    %v3144 = vsel %vm215, %v3135, %v3137
    %v3145 = vsel %vm215, %v3141, %v3135
    %v3146 = vsel %vm33, %v3144, 0.0
    %v3147 = vsel %vm34, %v3143, 0.0
    %v3148 = vsel %vm35, %v3142, 0.0
    %v3149 = vsel %vm36, %v3145, 0.0
    %s3150 = scalar_lea.vmem %s1, 200
    %v3151 = vld [vmem:[%s3150] sm:$0xff]
    %v3153 = vsel %vm285, %v3151, 0
    %3155 = vmatpush.msra.mxu0 0.0
    %3156 = vmatpush.msra.mxu0 0.0
    %3157 = vmatpush.msra.mxu0 0.0
    %3158 = vmatpush.msra.mxu0 0.0
    %3159 = vmatpush.msra.mxu0 0.0
    %3160 = vmatpush.msra.mxu0 0.0
    %3161 = vmatpush.msra.mxu0 0.0
    %3162 = vmatpush.msra.mxu0 0.0
    %3163 = vmatpush.msra.mxu0 0.0
    %3164 = vmatpush.msra.mxu0 0.0
    %3165 = vmatpush.msra.mxu0 0.0
    %3166 = vmatpush.msra.mxu0 0.0
    %3167 = vmatpush.msra.mxu0 0.0
    %3168 = vmatpush.msra.mxu0 0.0
    %3169 = vmatpush.msra.mxu0 0.0
    %3170 = vmatpush.msra.mxu0 %v3146
    %3171 = vmatmul.f32.gmra.mxu0 %v3153
    %v3172 = vpop.f32.mrf.mxu0
    %v3173 = vadd.f32 0.0, %v3172
    %3174 = vdwg.mxu0
    %3175 = vmatpush.msra.mxu0 0.0
    %3176 = vmatpush.msra.mxu0 0.0
    %3177 = vmatpush.msra.mxu0 0.0
    %3178 = vmatpush.msra.mxu0 0.0
    %3179 = vmatpush.msra.mxu0 0.0
    %3180 = vmatpush.msra.mxu0 0.0
    %3181 = vmatpush.msra.mxu0 0.0
    %3182 = vmatpush.msra.mxu0 0.0
    %3183 = vmatpush.msra.mxu0 0.0
    %3184 = vmatpush.msra.mxu0 0.0
    %3185 = vmatpush.msra.mxu0 0.0
    %3186 = vmatpush.msra.mxu0 0.0
    %3187 = vmatpush.msra.mxu0 0.0
    %3188 = vmatpush.msra.mxu0 0.0
    %3189 = vmatpush.msra.mxu0 0.0
    %3190 = vmatpush.msra.mxu0 %v3147
    %3191 = vmatmul.f32.gmra.mxu0 %v3153
    %v3192 = vpop.f32.mrf.mxu0
    %v3193 = vadd.f32 0.0, %v3192
    %3194 = vdwg.mxu0
    %3195 = vmatpush.msra.mxu0 0.0
    %3196 = vmatpush.msra.mxu0 0.0
    %3197 = vmatpush.msra.mxu0 0.0
    %3198 = vmatpush.msra.mxu0 0.0
    %3199 = vmatpush.msra.mxu0 0.0
    %3200 = vmatpush.msra.mxu0 0.0
    %3201 = vmatpush.msra.mxu0 0.0
    %3202 = vmatpush.msra.mxu0 0.0
    %3203 = vmatpush.msra.mxu0 0.0
    %3204 = vmatpush.msra.mxu0 0.0
    %3205 = vmatpush.msra.mxu0 0.0
    %3206 = vmatpush.msra.mxu0 0.0
    %3207 = vmatpush.msra.mxu0 0.0
    %3208 = vmatpush.msra.mxu0 0.0
    %3209 = vmatpush.msra.mxu0 0.0
    %3210 = vmatpush.msra.mxu0 %v3148
    %3211 = vmatmul.f32.gmra.mxu0 %v3153
    %v3212 = vpop.f32.mrf.mxu0
    %v3213 = vadd.f32 0.0, %v3212
    %3214 = vdwg.mxu0
    %3215 = vmatpush.msra.mxu0 0.0
    %3216 = vmatpush.msra.mxu0 0.0
    %3217 = vmatpush.msra.mxu0 0.0
    %3218 = vmatpush.msra.mxu0 0.0
    %3219 = vmatpush.msra.mxu0 0.0
    %3220 = vmatpush.msra.mxu0 0.0
    %3221 = vmatpush.msra.mxu0 0.0
    %3222 = vmatpush.msra.mxu0 0.0
    %3223 = vmatpush.msra.mxu0 0.0
    %3224 = vmatpush.msra.mxu0 0.0
    %3225 = vmatpush.msra.mxu0 0.0
    %3226 = vmatpush.msra.mxu0 0.0
    %3227 = vmatpush.msra.mxu0 0.0
    %3228 = vmatpush.msra.mxu0 0.0
    %3229 = vmatpush.msra.mxu0 0.0
    %3230 = vmatpush.msra.mxu0 %v3149
    %3231 = vmatmul.f32.gmra.mxu0 %v3153
    %v3232 = vpop.f32.mrf.mxu0
    %v3233 = vadd.f32 0.0, %v3232
    %3234 = vdwg.mxu0
    %v3235 = vadd.f32 %v3130, %v3173
    %v3236 = vadd.f32 %v3131, %v3193
    %v3237 = vadd.f32 %v3132, %v3213
    %v3238 = vadd.f32 %v3133, %v3233
    %3239 = vrot.lane.b32.xlu0 %v2419, 111
    %v3240 = vpop.permute.xlu0 %3239
    %3241 = vrot.lane.b32.xlu0 %v2420, 111
    %v3242 = vpop.permute.xlu0 %3241
    %3243 = vrot.lane.b32.xlu0 %v2421, 111
    %v3244 = vpop.permute.xlu0 %3243
    %3245 = vrot.lane.b32.xlu0 %v2422, 111
    %v3246 = vpop.permute.xlu0 %3245
    %v3247 = vsel %vm1076, %v3244, %v3246
    %v3248 = vsel %vm1076, %v3242, %v3244
    %v3249 = vsel %vm1076, %v3240, %v3242
    %v3250 = vsel %vm1076, %v3246, %v3240
    %v3251 = vsel %vm69, %v3249, 0.0
    %v3252 = vsel %vm70, %v3248, 0.0
    %v3253 = vsel %vm71, %v3247, 0.0
    %v3254 = vsel %vm72, %v3250, 0.0
    %s3255 = scalar_lea.vmem %s1, 208
    %v3256 = vld [vmem:[%s3255] sm:$0xff]
    %v3258 = vsel %vm285, %v3256, 0
    %3260 = vmatpush.msra.mxu0 0.0
    %3261 = vmatpush.msra.mxu0 0.0
    %3262 = vmatpush.msra.mxu0 0.0
    %3263 = vmatpush.msra.mxu0 0.0
    %3264 = vmatpush.msra.mxu0 0.0
    %3265 = vmatpush.msra.mxu0 0.0
    %3266 = vmatpush.msra.mxu0 0.0
    %3267 = vmatpush.msra.mxu0 0.0
    %3268 = vmatpush.msra.mxu0 0.0
    %3269 = vmatpush.msra.mxu0 0.0
    %3270 = vmatpush.msra.mxu0 0.0
    %3271 = vmatpush.msra.mxu0 0.0
    %3272 = vmatpush.msra.mxu0 0.0
    %3273 = vmatpush.msra.mxu0 0.0
    %3274 = vmatpush.msra.mxu0 0.0
    %3275 = vmatpush.msra.mxu0 %v3251
    %3276 = vmatmul.f32.gmra.mxu0 %v3258
    %v3277 = vpop.f32.mrf.mxu0
    %v3278 = vadd.f32 0.0, %v3277
    %3279 = vdwg.mxu0
    %3280 = vmatpush.msra.mxu0 0.0
    %3281 = vmatpush.msra.mxu0 0.0
    %3282 = vmatpush.msra.mxu0 0.0
    %3283 = vmatpush.msra.mxu0 0.0
    %3284 = vmatpush.msra.mxu0 0.0
    %3285 = vmatpush.msra.mxu0 0.0
    %3286 = vmatpush.msra.mxu0 0.0
    %3287 = vmatpush.msra.mxu0 0.0
    %3288 = vmatpush.msra.mxu0 0.0
    %3289 = vmatpush.msra.mxu0 0.0
    %3290 = vmatpush.msra.mxu0 0.0
    %3291 = vmatpush.msra.mxu0 0.0
    %3292 = vmatpush.msra.mxu0 0.0
    %3293 = vmatpush.msra.mxu0 0.0
    %3294 = vmatpush.msra.mxu0 0.0
    %3295 = vmatpush.msra.mxu0 %v3252
    %3296 = vmatmul.f32.gmra.mxu0 %v3258
    %v3297 = vpop.f32.mrf.mxu0
    %v3298 = vadd.f32 0.0, %v3297
    %3299 = vdwg.mxu0
    %3300 = vmatpush.msra.mxu0 0.0
    %3301 = vmatpush.msra.mxu0 0.0
    %3302 = vmatpush.msra.mxu0 0.0
    %3303 = vmatpush.msra.mxu0 0.0
    %3304 = vmatpush.msra.mxu0 0.0
    %3305 = vmatpush.msra.mxu0 0.0
    %3306 = vmatpush.msra.mxu0 0.0
    %3307 = vmatpush.msra.mxu0 0.0
    %3308 = vmatpush.msra.mxu0 0.0
    %3309 = vmatpush.msra.mxu0 0.0
    %3310 = vmatpush.msra.mxu0 0.0
    %3311 = vmatpush.msra.mxu0 0.0
    %3312 = vmatpush.msra.mxu0 0.0
    %3313 = vmatpush.msra.mxu0 0.0
    %3314 = vmatpush.msra.mxu0 0.0
    %3315 = vmatpush.msra.mxu0 %v3253
    %3316 = vmatmul.f32.gmra.mxu0 %v3258
    %v3317 = vpop.f32.mrf.mxu0
    %v3318 = vadd.f32 0.0, %v3317
    %3319 = vdwg.mxu0
    %3320 = vmatpush.msra.mxu0 0.0
    %3321 = vmatpush.msra.mxu0 0.0
    %3322 = vmatpush.msra.mxu0 0.0
    %3323 = vmatpush.msra.mxu0 0.0
    %3324 = vmatpush.msra.mxu0 0.0
    %3325 = vmatpush.msra.mxu0 0.0
    %3326 = vmatpush.msra.mxu0 0.0
    %3327 = vmatpush.msra.mxu0 0.0
    %3328 = vmatpush.msra.mxu0 0.0
    %3329 = vmatpush.msra.mxu0 0.0
    %3330 = vmatpush.msra.mxu0 0.0
    %3331 = vmatpush.msra.mxu0 0.0
    %3332 = vmatpush.msra.mxu0 0.0
    %3333 = vmatpush.msra.mxu0 0.0
    %3334 = vmatpush.msra.mxu0 0.0
    %3335 = vmatpush.msra.mxu0 %v3254
    %3336 = vmatmul.f32.gmra.mxu0 %v3258
    %v3337 = vpop.f32.mrf.mxu0
    %v3338 = vadd.f32 0.0, %v3337
    %3339 = vdwg.mxu0
    %v3340 = vadd.f32 %v3235, %v3278
    %v3341 = vadd.f32 %v3236, %v3298
    %v3342 = vadd.f32 %v3237, %v3318
    %v3343 = vadd.f32 %v3238, %v3338
    %v3344 = vadd.f32 %v2259, %v3340
    %v3345 = vadd.f32 %v2260, %v3341
    %v3346 = vadd.f32 %v2261, %v3342
    %v3347 = vadd.f32 %v2262, %v3343
    %3348 = vst [vmem:[#allocation2] sm:$0xff] %v3344
    %3349 = vst [vmem:[#allocation2 + $0x8] sm:$0xff] %v3345
    %3350 = vst [vmem:[#allocation2 + $0x10] sm:$0xff] %v3346
    %3351 = vst [vmem:[#allocation2 + $0x18] sm:$0xff] %v3347
    // Predicated region
    $region10: #{tpu_custom_call.1} parent=1 // pred_check
      _
    $region11: #{tpu_custom_call.1} parent=1 // pred_check_branch
      %3353 = sbr.rel (0) target = $region13
    $region12: #{tpu_custom_call.1} parent=1 // pred_region
      %3355 = vsyncadd [#allocation3], 0
      %s3357 = sshll.u32 [#allocation2], 4
      %s3358 = int_to_ptr.vmem [resolvable:$true] %s3357
      %s3359 = sshll.u32 %s2, 4
      %s3360 = int_to_ptr.hbm [resolvable:$true] %s3359
      %3362 = dma.vmem_to_hbm [thread:$0]  %s3358, 512, %s3360, [#allocation3]
    $region13: #{tpu_custom_call.1} parent=1 // pred_fallthru
      _
    // Predicated region
    $region14: #{tpu_custom_call.1} parent=1 // pred_check
      _
    $region15: #{tpu_custom_call.1} parent=1 // pred_check_branch
      %3364 = sbr.rel (0) target = $region17
    $region16: #{tpu_custom_call.1} parent=1 // pred_region
      %3366 = dma.done [#allocation3], 512
    $region17: #{tpu_custom_call.1} parent=1 // pred_fallthru
      _
    %3367 = vsyncpa [#allocation3], 1

</llo_original>
